<compile_context>
chip_gen: v5e
topology: v5e:2x2
jax: 0.10.0
libtpu: 0.0.40
codegen_flags: <defaults>
</compile_context>

<pallas_src>
import functools

import jax
import jax.numpy as jnp
import numpy as np
from jax import lax
from jax.experimental import pallas as pl
from jax.experimental.pallas import tpu as pltpu

LANE = 128      # gate blocks / vocab padded to multiples of the 128-lane vreg
SUBLANE = 8     # batch rows padded to a multiple of the 8-sublane vreg


def _round_up(x, m):
    return (x + m - 1) // m * m


def _tensorcores_per_chip():
    """v7x packs 2 TensorCores per chip; v5e/v6e have 1. A Pallas grid axis is
    a serial loop on one TC, so batch-sharding the recurrence only pays off
    where a second TC can pick up the 'parallel' shard."""
    try:
        kind = jax.devices()[0].device_kind.lower()
    except Exception:
        return 1
    return 2 if "v7" in kind else 1


# ---------------------------------------------------------------------------
# Kernel 1: generic tiled matmul + bias.
# Used for the batched input projection (T*B rows) and the batched FC
# projection (B*T rows). K (= E or H_padded) is small for this model, so it is
# kept whole: no K-reduction grid axis / accumulator scratch needed.
# ---------------------------------------------------------------------------
def _mm_bias_kernel(a_ref, b_ref, bias_ref, o_ref):
    o_ref[...] = (jnp.dot(a_ref[...], b_ref[...],
                          preferred_element_type=jnp.float32)
                  + bias_ref[...]).astype(o_ref.dtype)


def _matmul_bias(a, b, bias, *, out_dtype=jnp.float32, tm=256, tn=512):
    """(M, K) @ (K, N) + bias(1, N) -> (M, N) in out_dtype, tiled over M and N.

    `b` / `bias` must be pre-padded so N is a multiple of 128 (done once in
    prepare_params). `a` is cast to b.dtype; the weights already live in the
    MXU dtype, so there is no recurring per-forward weight cast."""
    M, K = a.shape
    K2, N = b.shape
    assert K == K2 and N % LANE == 0 and bias.shape == (1, N)

    # Big lane-dense tiles for the 256-wide MXUs (v6e/v7x); clamp for small
    # problems so tiny matmuls are not padded up to the tile.
    tn = next(t for t in (tn, 256, LANE) if N % t == 0)
    tm = min(tm, _round_up(M, SUBLANE))
    Mp = _round_up(M, tm)

    a_p = a.astype(b.dtype)
    if Mp != M:
        a_p = jnp.pad(a_p, ((0, Mp - M), (0, 0)))

    out = pl.pallas_call(
        _mm_bias_kernel,
        out_shape=jax.ShapeDtypeStruct((Mp, N), out_dtype),
        grid_spec=pltpu.PrefetchScalarGridSpec(
            num_scalar_prefetch=0,
            grid=(Mp // tm, N // tn),
            in_specs=[
                pl.BlockSpec((tm, K), lambda i, j: (i, 0)),
                pl.BlockSpec((K, tn), lambda i, j: (0, j)),
                pl.BlockSpec((1, tn), lambda i, j: (0, j)),
            ],
            out_specs=pl.BlockSpec((tm, tn), lambda i, j: (i, j)),
        ),
        compiler_params=pltpu.CompilerParams(
            dimension_semantics=("parallel", "parallel")),
    )(a_p, b, bias)
    return out[:M]


# ---------------------------------------------------------------------------
# Kernel 2: serial LSTM recurrence (one batch shard x one time chunk).
# ---------------------------------------------------------------------------
def _lstm_recurrence_kernel(gx_ref, whh_ref, h_all_ref, h_sc, c_sc):
    """gx_ref   : (Tc, Bb, 4*Hp)  precomputed x_t @ W_ih^T + (b_ih + b_hh)
       whh_ref  : (Hp, 4*Hp)      hidden->gate weights (pre-transposed, padded)
       h_all_ref: (Tc, Bb, Hp)    output: hidden state h_t for every timestep
       h_sc,c_sc: (Bb, Hp) f32    carry; persists across time-chunk grid steps

    Gate blocks are zero-padded to Hp (128-lane multiples): padded columns of
    c and h stay exactly 0 (i=0.5, g=0 => i*g=0; f*0=0), so the lane-aligned
    slices below are straight VPU/EUP code."""
    t_chunk, _, hp = h_all_ref.shape

    @pl.when(pl.program_id(1) == 0)          # first time chunk: zero init state
    def _():
        h_sc[...] = jnp.zeros_like(h_sc)
        c_sc[...] = jnp.zeros_like(c_sc)

    w_dtype = whh_ref.dtype

    def step(t, carry):
        h_prev, c_prev = carry
        gx_t = gx_ref[t].astype(jnp.float32)          # (Bb, 4Hp)
        hh = h_prev.astype(w_dtype)

        # PyTorch gate order i, f, g, o — one lane-aligned 128-block each.
        # Per-gate (Hp, Hp) matmuls read the weight slice straight off the
        # VMEM ref (never hoisted into a 4Hp-wide loop-invariant value, which
        # would consume the whole vreg file and spill every step). The MXU
        # push of gate k+1 overlaps gate k's EUP sigmoid/tanh and the VPU tail.
        def gate(k):
            return gx_t[:, k * hp:(k + 1) * hp] + jnp.dot(
                hh, whh_ref[:, k * hp:(k + 1) * hp],
                preferred_element_type=jnp.float32)

        i = jax.nn.sigmoid(gate(0))
        f = jax.nn.sigmoid(gate(1))
        g = jnp.tanh(gate(2))
        o = jax.nn.sigmoid(gate(3))
        c_new = f * c_prev + i * g
        h_new = o * jnp.tanh(c_new)
        h_all_ref[t] = h_new.astype(h_all_ref.dtype)
        return (h_new, c_new)

    # Short fixed trip count: full unroll gives the LLO scheduler cross-step
    # visibility (overlap gx_ref[t+1] loads / next-step MXU push with the
    # current step's EUP/VPU tail).
    h_last, c_last = lax.fori_loop(0, t_chunk, step, (h_sc[...], c_sc[...]),
                                   unroll=True)
    h_sc[...] = h_last
    c_sc[...] = c_last


# ---------------------------------------------------------------------------
# One-time parameter layout prep (transpose, gate-block, zero-pad, MXU-dtype
# cast) so repeated forward calls do no HBM-level transposes or weight casts.
# ---------------------------------------------------------------------------
def prepare_params(params, *, mxu_dtype=jnp.bfloat16):
    w_ih = jnp.asarray(params["w_ih"], jnp.float32)    # (4H, E) PyTorch layout
    w_hh = jnp.asarray(params["w_hh"], jnp.float32)    # (4H, H)
    b = (jnp.asarray(params["b_ih"], jnp.float32)
         + jnp.asarray(params["b_hh"], jnp.float32))   # (4H,)  fused once
    w_fc = jnp.asarray(params["w_fc"], jnp.float32)    # (V, H)
    b_fc = jnp.asarray(params["b_fc"], jnp.float32)    # (V,)

    H = w_hh.shape[1]
    V = w_fc.shape[0]
    Hp = _round_up(H, LANE)
    Vp = _round_up(V, 4 * LANE)   # 512-multiple: Phase 3 uses 512-wide tiles

    def gate_block(mat_t):        # (in_dim, 4H) -> (in_dim, 4Hp), zero padded
        in_dim = mat_t.shape[0]
        out = jnp.zeros((in_dim, 4 * Hp), jnp.float32)
        for k in range(4):
            out = out.at[:, k * Hp:k * Hp + H].set(mat_t[:, k * H:(k + 1) * H])
        return out

    wih_p = gate_block(w_ih.T)                                           # (E, 4Hp)
    whh_p = jnp.zeros((Hp, 4 * Hp), jnp.float32).at[:H].set(gate_block(w_hh.T))
    b_p = jnp.zeros((4 * Hp,), jnp.float32)
    for k in range(4):
        b_p = b_p.at[k * Hp:k * Hp + H].set(b[k * H:(k + 1) * H])
    wfc_p = jnp.zeros((Hp, Vp), jnp.float32).at[:H, :V].set(w_fc.T)      # (Hp, Vp)
    bfc_p = jnp.zeros((Vp,), jnp.float32).at[:V].set(b_fc)

    return {
        "embedding": jnp.asarray(params["embedding"], jnp.float32),
        "wih_p": wih_p.astype(mxu_dtype),
        "whh_p": whh_p.astype(mxu_dtype),
        "wfc_p": wfc_p.astype(mxu_dtype),
        "b_p": b_p.reshape(1, -1),            # biases stay f32
        "bfc_p": bfc_p.reshape(1, -1),
    }


# ---------------------------------------------------------------------------
# Forward pass.
# ---------------------------------------------------------------------------
@functools.partial(jax.jit, static_argnames=("vocab_size",))
def decoder_forward_pallas(features, captions, prep, *, vocab_size):
    """features: (B, E) f32, captions: (B, T) int32 -> logits (B, T, vocab) f32."""
    emb_tbl = prep["embedding"]
    io_dtype = prep["wih_p"].dtype     # bf16 intermediates on the fast path
    B, E = features.shape
    T = captions.shape[1]
    Hp, G = prep["whh_p"].shape        # Hp, 4*Hp
    Vp = prep["wfc_p"].shape[1]
    Bp = _round_up(B, SUBLANE)

    # --- XLA glue: embedding gather + features-as-<start> concat -------------
    embeds = jnp.take(emb_tbl, captions[:, :-1], axis=0)                # (B,T-1,E)
    x = jnp.concatenate([features[:, None, :].astype(jnp.float32), embeds], 1)
    if Bp != B:
        x = jnp.pad(x, ((0, Bp - B), (0, 0), (0, 0)))
    x_tbe = jnp.transpose(x, (1, 0, 2))                                 # (T,Bp,E)

    # --- Phase 1: batched input projection (one big MXU matmul) --------------
    gx = _matmul_bias(x_tbe.reshape(T * Bp, E), prep["wih_p"], prep["b_p"],
                      out_dtype=io_dtype, tm=256, tn=512)               # (T*Bp,4Hp)
    gx = gx.reshape(T, Bp, G)

    # --- Phase 2: serial recurrence (only h @ W_hh per step) -----------------
    # Batch shards ONLY where a second TensorCore exists (v7x); on v5e/v6e a
    # second shard would just serialize and ~double the recurrence.
    n_tc = _tensorcores_per_chip()
    n_bt = n_tc if (n_tc > 1 and Bp % (n_tc * SUBLANE) == 0) else 1
    Bb = Bp // n_bt
    # Time-chunked "arbitrary" axis: only one gx chunk resident at a time
    # (bounded VMEM at production shapes) and its DMA pipelines under compute.
    t_chunk = T if T <= 16 else 8
    n_tch = -(-T // t_chunk)
    Tp = n_tch * t_chunk
    if Tp != T:
        gx = jnp.pad(gx, ((0, Tp - T), (0, 0), (0, 0)))

    h_all = pl.pallas_call(
        _lstm_recurrence_kernel,
        out_shape=jax.ShapeDtypeStruct((Tp, Bp, Hp), io_dtype),
        grid_spec=pltpu.PrefetchScalarGridSpec(
            num_scalar_prefetch=0,
            grid=(n_bt, n_tch),
            in_specs=[
                pl.BlockSpec((t_chunk, Bb, G), lambda b, t: (t, b, 0)),  # gx chunk
                pl.BlockSpec((Hp, G), lambda b, t: (0, 0)),              # W_hh^T
            ],
            out_specs=pl.BlockSpec((t_chunk, Bb, Hp), lambda b, t: (t, b, 0)),
            scratch_shapes=[pltpu.VMEM((Bb, Hp), jnp.float32),   # h carry
                            pltpu.VMEM((Bb, Hp), jnp.float32)],  # c carry
        ),
        compiler_params=pltpu.CompilerParams(
            dimension_semantics=("parallel", "arbitrary"),
            vmem_limit_bytes=48 * 1024 * 1024),
    )(gx, prep["whh_p"])

    # --- Phase 3: batched FC / vocab projection (one big MXU matmul) ---------
    # Transpose only the cheap H-wide hidden states (bf16 on the fast path) so
    # the big (B*T, V) logits come out batch-first already.
    h_bt = jnp.transpose(h_all[:T, :B, :], (1, 0, 2)).reshape(B * T, Hp)
    logits = _matmul_bias(h_bt, prep["wfc_p"], prep["bfc_p"],
                          out_dtype=jnp.float32, tm=256, tn=512)        # (B*T,Vp)
    return logits.reshape(B, T, Vp)[:, :, :vocab_size]


# ---------------------------------------------------------------------------
# Pure-JAX reference (mirrors PyTorch nn.LSTM + nn.Linear, all f32).
# ---------------------------------------------------------------------------
def decoder_forward_ref(features, captions, params):
    emb_tbl = params["embedding"]
    w_ih, w_hh = params["w_ih"], params["w_hh"]
    b = params["b_ih"] + params["b_hh"]
    w_fc, b_fc = params["w_fc"], params["b_fc"]
    H = w_hh.shape[1]
    B = features.shape[0]

    embeds = jnp.take(emb_tbl, captions[:, :-1], axis=0)
    embeds = jnp.concatenate([features[:, None, :], embeds], 1)        # (B, T, E)
    xs = jnp.transpose(embeds, (1, 0, 2))                              # (T, B, E)

    def step(carry, x):
        h, c = carry
        gates = x @ w_ih.T + h @ w_hh.T + b
        i = jax.nn.sigmoid(gates[:, 0 * H:1 * H])
        f = jax.nn.sigmoid(gates[:, 1 * H:2 * H])
        g = jnp.tanh(gates[:, 2 * H:3 * H])
        o = jax.nn.sigmoid(gates[:, 3 * H:4 * H])
        c = f * c + i * g
        h = o * jnp.tanh(c)
        return (h, c), h @ w_fc.T + b_fc

    init = (jnp.zeros((B, H), jnp.float32), jnp.zeros((B, H), jnp.float32))
    _, ys = lax.scan(step, init, xs)                                   # (T, B, V)
    return jnp.transpose(ys, (1, 0, 2))


def init_params(key, vocab_size, embed_size, hidden_size):
    ks = jax.random.split(key, 7)
    s = 0.1
    return {
        "embedding": s * jax.random.normal(ks[0], (vocab_size, embed_size), jnp.float32),
        "w_ih": s * jax.random.normal(ks[1], (4 * hidden_size, embed_size), jnp.float32),
        "w_hh": s * jax.random.normal(ks[2], (4 * hidden_size, hidden_size), jnp.float32),
        "b_ih": s * jax.random.normal(ks[3], (4 * hidden_size,), jnp.float32),
        "b_hh": s * jax.random.normal(ks[4], (4 * hidden_size,), jnp.float32),
        "w_fc": s * jax.random.normal(ks[5], (vocab_size, hidden_size), jnp.float32),
        "b_fc": s * jax.random.normal(ks[6], (vocab_size,), jnp.float32),
    }


if __name__ == "__main__":
    # Small, TPU-friendly shapes consistent with the module.
    B, T = 8, 8            # batch, caption length
    E, H, V = 32, 32, 128  # embed_size, hidden_size, vocab_size

    key = jax.random.PRNGKey(0)
    k_feat, k_cap, k_par = jax.random.split(key, 3)

    features = jax.random.normal(k_feat, (B, E), jnp.float32)       # CNN features
    captions = jax.random.randint(k_cap, (B, T), 0, V, jnp.int32)   # token ids
    params = init_params(k_par, V, E, H)

    ref = jax.block_until_ready(decoder_forward_ref(features, captions, params))

    # f32 path: faithful check against the PyTorch-style f32 reference.
    prep_f32 = prepare_params(params, mxu_dtype=jnp.float32)
    out_f32 = jax.block_until_ready(
        decoder_forward_pallas(features, captions, prep_f32, vocab_size=V))
    assert out_f32.shape == (B, T, V), out_f32.shape
    np.testing.assert_allclose(np.asarray(out_f32), np.asarray(ref),
                               rtol=2e-5, atol=2e-5)

    # Default fast path: bf16 weights + bf16 gx/h_all intermediates; tolerance
    # loosened accordingly (bf16 has an 8-bit mantissa).
    prep_bf16 = prepare_params(params, mxu_dtype=jnp.bfloat16)
    out_bf16 = jax.block_until_ready(
        decoder_forward_pallas(features, captions, prep_bf16, vocab_size=V))
    np.testing.assert_allclose(np.asarray(out_bf16), np.asarray(ref),
                               rtol=1e-1, atol=5e-2)

    # TODO(synk): `sample()` (greedy decoding loop with data-dependent argmax
    # feedback into the embedding) is not implemented; only forward().
    print("KERNEL_OK")
</pallas_src>

<mosaic_0001>
module attributes {stable_mosaic.version = 11 : i64} {
  func.func @_mm_bias_kernel(%arg0: i32, %arg1: i32, %arg2: memref<64x128xf32, #tpu.memory_space<vmem>>, %arg3: memref<128x512xf32, #tpu.memory_space<vmem>>, %arg4: memref<1x512xf32, #tpu.memory_space<vmem>>, %arg5: memref<64x512xf32, #tpu.memory_space<vmem>>) attributes {dimension_semantics = [#tpu.dimension_semantics<parallel>, #tpu.dimension_semantics<parallel>], iteration_bounds = array<i64: 1, 1>, scalar_prefetch = 0 : i64, scratch_operands = 0 : i64, tpu.core_type = #tpu.core_type<tc>, window_params = [{transform_indices = @transform_0, window_bounds = array<i64: 64, 128>}, {transform_indices = @transform_1, window_bounds = array<i64: 128, 512>}, {transform_indices = @transform_2, window_bounds = array<i64: 1, 512>}, {transform_indices = @transform_3, window_bounds = array<i64: 64, 512>}]} {
    %c0 = arith.constant 0 : index
    %c0_0 = arith.constant 0 : index
    %0 = vector.load %arg2[%c0, %c0_0] : memref<64x128xf32, #tpu.memory_space<vmem>>, vector<64x128xf32>
    %c0_1 = arith.constant 0 : index
    %c0_2 = arith.constant 0 : index
    %1 = vector.load %arg3[%c0_1, %c0_2] : memref<128x512xf32, #tpu.memory_space<vmem>>, vector<128x512xf32>
    %cst = arith.constant dense<0.000000e+00> : vector<64x512xf32>
    %2 = tpu.matmul %0, %1, %cst {dimension_numbers = #tpu.dot_dimension_numbers<[1], [0], [0], [1], [0, 0, 1, 1], [], []>} : vector<64x128xf32>, vector<128x512xf32>, vector<64x512xf32> -> vector<64x512xf32>
    %c0_3 = arith.constant 0 : index
    %c0_4 = arith.constant 0 : index
    %3 = vector.load %arg4[%c0_3, %c0_4] : memref<1x512xf32, #tpu.memory_space<vmem>>, vector<1x512xf32>
    %4 = vector.broadcast %3 : vector<1x512xf32> to vector<64x512xf32>
    %5 = arith.addf %2, %4 : vector<64x512xf32>
    %c0_5 = arith.constant 0 : index
    %c0_6 = arith.constant 0 : index
    %6 = vector.load %arg5[%c0_5, %c0_6] : memref<64x512xf32, #tpu.memory_space<vmem>>, vector<64x512xf32>
    tpu.vector_store %arg5[%c0_5, %c0_6], %5 {strides = array<i32>} : memref<64x512xf32, #tpu.memory_space<vmem>>, vector<64x512xf32>,
    return
  }
  func.func @transform_0(%arg0: i32, %arg1: i32) -> (i32, i32) {
    %c0_i32 = arith.constant 0 : i32
    %c0_i32_0 = arith.constant 0 : i32
    return %arg0, %c0_i32 : i32, i32
  }
  func.func @transform_1(%arg0: i32, %arg1: i32) -> (i32, i32) {
    %c0_i32 = arith.constant 0 : i32
    %c0_i32_0 = arith.constant 0 : i32
    return %c0_i32, %arg1 : i32, i32
  }
  func.func @transform_2(%arg0: i32, %arg1: i32) -> (i32, i32) {
    %c0_i32 = arith.constant 0 : i32
    %c0_i32_0 = arith.constant 0 : i32
    return %c0_i32, %arg1 : i32, i32
  }
  func.func @transform_3(%arg0: i32, %arg1: i32) -> (i32, i32) {
    %c0_i32 = arith.constant 0 : i32
    return %arg0, %arg1 : i32, i32
  }
}

module attributes {stable_mosaic.version = 11 : i64} {
  func.func @_mm_bias_kernel(%arg0: i32, %arg1: i32, %arg2: memref<64x32xf32, #tpu.memory_space<vmem>>, %arg3: memref<32x512xf32, #tpu.memory_space<vmem>>, %arg4: memref<1x512xf32, #tpu.memory_space<vmem>>, %arg5: memref<64x512xf32, #tpu.memory_space<vmem>>) attributes {dimension_semantics = [#tpu.dimension_semantics<parallel>, #tpu.dimension_semantics<parallel>], iteration_bounds = array<i64: 1, 1>, scalar_prefetch = 0 : i64, scratch_operands = 0 : i64, tpu.core_type = #tpu.core_type<tc>, window_params = [{transform_indices = @transform_0, window_bounds = array<i64: 64, 32>}, {transform_indices = @transform_1, window_bounds = array<i64: 32, 512>}, {transform_indices = @transform_2, window_bounds = array<i64: 1, 512>}, {transform_indices = @transform_3, window_bounds = array<i64: 64, 512>}]} {
    %c0 = arith.constant 0 : index
    %c0_0 = arith.constant 0 : index
    %0 = vector.load %arg2[%c0, %c0_0] : memref<64x32xf32, #tpu.memory_space<vmem>>, vector<64x32xf32>
    %c0_1 = arith.constant 0 : index
    %c0_2 = arith.constant 0 : index
    %1 = vector.load %arg3[%c0_1, %c0_2] : memref<32x512xf32, #tpu.memory_space<vmem>>, vector<32x512xf32>
    %cst = arith.constant dense<0.000000e+00> : vector<64x512xf32>
    %2 = tpu.matmul %0, %1, %cst {dimension_numbers = #tpu.dot_dimension_numbers<[1], [0], [0], [1], [0, 0, 1, 1], [], []>} : vector<64x32xf32>, vector<32x512xf32>, vector<64x512xf32> -> vector<64x512xf32>
    %c0_3 = arith.constant 0 : index
    %c0_4 = arith.constant 0 : index
    %3 = vector.load %arg4[%c0_3, %c0_4] : memref<1x512xf32, #tpu.memory_space<vmem>>, vector<1x512xf32>
    %4 = vector.broadcast %3 : vector<1x512xf32> to vector<64x512xf32>
    %5 = arith.addf %2, %4 : vector<64x512xf32>
    %c0_5 = arith.constant 0 : index
    %c0_6 = arith.constant 0 : index
    %6 = vector.load %arg5[%c0_5, %c0_6] : memref<64x512xf32, #tpu.memory_space<vmem>>, vector<64x512xf32>
    tpu.vector_store %arg5[%c0_5, %c0_6], %5 {strides = array<i32>} : memref<64x512xf32, #tpu.memory_space<vmem>>, vector<64x512xf32>,
    return
  }
  func.func @transform_0(%arg0: i32, %arg1: i32) -> (i32, i32) {
    %c0_i32 = arith.constant 0 : i32
    %c0_i32_0 = arith.constant 0 : i32
    return %arg0, %c0_i32 : i32, i32
  }
  func.func @transform_1(%arg0: i32, %arg1: i32) -> (i32, i32) {
    %c0_i32 = arith.constant 0 : i32
    %c0_i32_0 = arith.constant 0 : i32
    return %c0_i32, %arg1 : i32, i32
  }
  func.func @transform_2(%arg0: i32, %arg1: i32) -> (i32, i32) {
    %c0_i32 = arith.constant 0 : i32
    %c0_i32_0 = arith.constant 0 : i32
    return %c0_i32, %arg1 : i32, i32
  }
  func.func @transform_3(%arg0: i32, %arg1: i32) -> (i32, i32) {
    %c0_i32 = arith.constant 0 : i32
    return %arg0, %arg1 : i32, i32
  }
}

module attributes {stable_mosaic.version = 11 : i64} {
  func.func @_lstm_recurrence_kernel(%arg0: i32, %arg1: i32, %arg2: memref<8x8x512xf32, #tpu.memory_space<vmem>>, %arg3: memref<128x512xf32, #tpu.memory_space<vmem>>, %arg4: memref<8x8x128xf32, #tpu.memory_space<vmem>>, %arg5: memref<8x128xf32, #tpu.memory_space<vmem>>, %arg6: memref<8x128xf32, #tpu.memory_space<vmem>>) attributes {dimension_semantics = [#tpu.dimension_semantics<parallel>, #tpu.dimension_semantics<arbitrary>], iteration_bounds = array<i64: 1, 1>, scalar_prefetch = 0 : i64, scratch_operands = 2 : i64, tpu.core_type = #tpu.core_type<tc>, window_params = [{transform_indices = @transform_0, window_bounds = array<i64: 8, 8, 512>}, {pipeline_mode = #tpu.pipeline_mode<synchronous>, transform_indices = @transform_1, window_bounds = array<i64: 128, 512>}, {transform_indices = @transform_2, window_bounds = array<i64: 8, 8, 128>}]} {
    %c0_i32 = arith.constant 0 : i32
    %0 = arith.cmpi eq, %arg1, %c0_i32 : i32
    %1 = arith.extui %0 : i1 to i32
    %c0_i32_0 = arith.constant 0 : i32
    %2 = arith.cmpi ne, %1, %c0_i32_0 : i32
    scf.if %2 {
      %cst_157 = arith.constant 0.000000e+00 : f32
      %359 = vector.broadcast %cst_157 : f32 to vector<8x128xf32>
      %c0_158 = arith.constant 0 : index
      %c0_159 = arith.constant 0 : index
      %360 = vector.load %arg5[%c0_158, %c0_159] : memref<8x128xf32, #tpu.memory_space<vmem>>, vector<8x128xf32>
      tpu.vector_store %arg5[%c0_158, %c0_159], %359 {strides = array<i32>} : memref<8x128xf32, #tpu.memory_space<vmem>>, vector<8x128xf32>,
      %cst_160 = arith.constant 0.000000e+00 : f32
      %361 = vector.broadcast %cst_160 : f32 to vector<8x128xf32>
      %c0_161 = arith.constant 0 : index
      %c0_162 = arith.constant 0 : index
      %362 = vector.load %arg6[%c0_161, %c0_162] : memref<8x128xf32, #tpu.memory_space<vmem>>, vector<8x128xf32>
      tpu.vector_store %arg6[%c0_161, %c0_162], %361 {strides = array<i32>} : memref<8x128xf32, #tpu.memory_space<vmem>>, vector<8x128xf32>,
    } else {
    }
    %c0 = arith.constant 0 : index
    %c0_1 = arith.constant 0 : index
    %3 = vector.load %arg5[%c0, %c0_1] : memref<8x128xf32, #tpu.memory_space<vmem>>, vector<8x128xf32>
    %c0_2 = arith.constant 0 : index
    %c0_3 = arith.constant 0 : index
    %4 = vector.load %arg6[%c0_2, %c0_3] : memref<8x128xf32, #tpu.memory_space<vmem>>, vector<8x128xf32>
    %c0_i32_4 = arith.constant 0 : i32
    %5 = arith.index_cast %c0_i32_4 : i32 to index
    %c0_5 = arith.constant 0 : index
    %c0_6 = arith.constant 0 : index
    %6 = vector.load %arg2[%5, %c0_5, %c0_6] : memref<8x8x512xf32, #tpu.memory_space<vmem>>, vector<1x8x512xf32>
    %7 = vector.shape_cast %6 : vector<1x8x512xf32> to vector<8x512xf32>
    %8 = vector.extract_strided_slice %7 {offsets = [0, 0], sizes = [8, 128], strides = [1, 1]} : vector<8x512xf32> to vector<8x128xf32>
    %c0_7 = arith.constant 0 : index
    %c0_8 = arith.constant 0 : index
    %9 = vector.load %arg3[%c0_7, %c0_8] : memref<128x512xf32, #tpu.memory_space<vmem>>, vector<128x128xf32>
    %cst = arith.constant dense<0.000000e+00> : vector<8x128xf32>
    %10 = tpu.matmul %3, %9, %cst {dimension_numbers = #tpu.dot_dimension_numbers<[1], [0], [0], [1], [0, 0, 1, 1], [], []>} : vector<8x128xf32>, vector<128x128xf32>, vector<8x128xf32> -> vector<8x128xf32>
    %11 = arith.addf %8, %10 : vector<8x128xf32>
    %12 = arith.negf %11 : vector<8x128xf32>
    %13 = math.exp %12 : vector<8x128xf32>
    %cst_9 = arith.constant 1.000000e+00 : f32
    %14 = vector.broadcast %cst_9 : f32 to vector<8x128xf32>
    %15 = arith.addf %14, %13 : vector<8x128xf32>
    %16 = arith.divf %14, %15 : vector<8x128xf32>
    %17 = vector.extract_strided_slice %7 {offsets = [0, 128], sizes = [8, 128], strides = [1, 1]} : vector<8x512xf32> to vector<8x128xf32>
    %c0_10 = arith.constant 0 : index
    %c128 = arith.constant 128 : index
    %18 = vector.load %arg3[%c0_10, %c128] : memref<128x512xf32, #tpu.memory_space<vmem>>, vector<128x128xf32>
    %cst_11 = arith.constant dense<0.000000e+00> : vector<8x128xf32>
    %19 = tpu.matmul %3, %18, %cst_11 {dimension_numbers = #tpu.dot_dimension_numbers<[1], [0], [0], [1], [0, 0, 1, 1], [], []>} : vector<8x128xf32>, vector<128x128xf32>, vector<8x128xf32> -> vector<8x128xf32>
    %20 = arith.addf %17, %19 : vector<8x128xf32>
    %21 = arith.negf %20 : vector<8x128xf32>
    %22 = math.exp %21 : vector<8x128xf32>
    %cst_12 = arith.constant 1.000000e+00 : f32
    %23 = vector.broadcast %cst_12 : f32 to vector<8x128xf32>
    %24 = arith.addf %23, %22 : vector<8x128xf32>
    %25 = arith.divf %23, %24 : vector<8x128xf32>
    %26 = vector.extract_strided_slice %7 {offsets = [0, 256], sizes = [8, 128], strides = [1, 1]} : vector<8x512xf32> to vector<8x128xf32>
    %c0_13 = arith.constant 0 : index
    %c256 = arith.constant 256 : index
    %27 = vector.load %arg3[%c0_13, %c256] : memref<128x512xf32, #tpu.memory_space<vmem>>, vector<128x128xf32>
    %cst_14 = arith.constant dense<0.000000e+00> : vector<8x128xf32>
    %28 = tpu.matmul %3, %27, %cst_14 {dimension_numbers = #tpu.dot_dimension_numbers<[1], [0], [0], [1], [0, 0, 1, 1], [], []>} : vector<8x128xf32>, vector<128x128xf32>, vector<8x128xf32> -> vector<8x128xf32>
    %29 = arith.addf %26, %28 : vector<8x128xf32>
    %30 = math.tanh %29 : vector<8x128xf32>
    %31 = vector.extract_strided_slice %7 {offsets = [0, 384], sizes = [8, 128], strides = [1, 1]} : vector<8x512xf32> to vector<8x128xf32>
    %c0_15 = arith.constant 0 : index
    %c384 = arith.constant 384 : index
    %32 = vector.load %arg3[%c0_15, %c384] : memref<128x512xf32, #tpu.memory_space<vmem>>, vector<128x128xf32>
    %cst_16 = arith.constant dense<0.000000e+00> : vector<8x128xf32>
    %33 = tpu.matmul %3, %32, %cst_16 {dimension_numbers = #tpu.dot_dimension_numbers<[1], [0], [0], [1], [0, 0, 1, 1], [], []>} : vector<8x128xf32>, vector<128x128xf32>, vector<8x128xf32> -> vector<8x128xf32>
    %34 = arith.addf %31, %33 : vector<8x128xf32>
    %35 = arith.negf %34 : vector<8x128xf32>
    %36 = math.exp %35 : vector<8x128xf32>
    %cst_17 = arith.constant 1.000000e+00 : f32
    %37 = vector.broadcast %cst_17 : f32 to vector<8x128xf32>
    %38 = arith.addf %37, %36 : vector<8x128xf32>
    %39 = arith.divf %37, %38 : vector<8x128xf32>
    %40 = arith.mulf %25, %4 : vector<8x128xf32>
    %41 = arith.mulf %16, %30 : vector<8x128xf32>
    %42 = arith.addf %40, %41 : vector<8x128xf32>
    %43 = math.tanh %42 : vector<8x128xf32>
    %44 = arith.mulf %39, %43 : vector<8x128xf32>
    %45 = arith.index_cast %c0_i32_4 : i32 to index
    %c0_18 = arith.constant 0 : index
    %c0_19 = arith.constant 0 : index
    %46 = vector.load %arg4[%45, %c0_18, %c0_19] : memref<8x8x128xf32, #tpu.memory_space<vmem>>, vector<1x8x128xf32>
    %47 = vector.shape_cast %46 : vector<1x8x128xf32> to vector<8x128xf32>
    %48 = vector.shape_cast %44 : vector<8x128xf32> to vector<1x8x128xf32>
    tpu.vector_store %arg4[%45, %c0_18, %c0_19], %48 {strides = array<i32>} : memref<8x8x128xf32, #tpu.memory_space<vmem>>, vector<1x8x128xf32>,
    %c1_i32 = arith.constant 1 : i32
    %49 = arith.index_cast %c1_i32 : i32 to index
    %c0_20 = arith.constant 0 : index
    %c0_21 = arith.constant 0 : index
    %50 = vector.load %arg2[%49, %c0_20, %c0_21] : memref<8x8x512xf32, #tpu.memory_space<vmem>>, vector<1x8x512xf32>
    %51 = vector.shape_cast %50 : vector<1x8x512xf32> to vector<8x512xf32>
    %52 = vector.extract_strided_slice %51 {offsets = [0, 0], sizes = [8, 128], strides = [1, 1]} : vector<8x512xf32> to vector<8x128xf32>
    %c0_22 = arith.constant 0 : index
    %c0_23 = arith.constant 0 : index
    %53 = vector.load %arg3[%c0_22, %c0_23] : memref<128x512xf32, #tpu.memory_space<vmem>>, vector<128x128xf32>
    %cst_24 = arith.constant dense<0.000000e+00> : vector<8x128xf32>
    %54 = tpu.matmul %44, %53, %cst_24 {dimension_numbers = #tpu.dot_dimension_numbers<[1], [0], [0], [1], [0, 0, 1, 1], [], []>} : vector<8x128xf32>, vector<128x128xf32>, vector<8x128xf32> -> vector<8x128xf32>
    %55 = arith.addf %52, %54 : vector<8x128xf32>
    %56 = arith.negf %55 : vector<8x128xf32>
    %57 = math.exp %56 : vector<8x128xf32>
    %cst_25 = arith.constant 1.000000e+00 : f32
    %58 = vector.broadcast %cst_25 : f32 to vector<8x128xf32>
    %59 = arith.addf %58, %57 : vector<8x128xf32>
    %60 = arith.divf %58, %59 : vector<8x128xf32>
    %61 = vector.extract_strided_slice %51 {offsets = [0, 128], sizes = [8, 128], strides = [1, 1]} : vector<8x512xf32> to vector<8x128xf32>
    %c0_26 = arith.constant 0 : index
    %c128_27 = arith.constant 128 : index
    %62 = vector.load %arg3[%c0_26, %c128_27] : memref<128x512xf32, #tpu.memory_space<vmem>>, vector<128x128xf32>
    %cst_28 = arith.constant dense<0.000000e+00> : vector<8x128xf32>
    %63 = tpu.matmul %44, %62, %cst_28 {dimension_numbers = #tpu.dot_dimension_numbers<[1], [0], [0], [1], [0, 0, 1, 1], [], []>} : vector<8x128xf32>, vector<128x128xf32>, vector<8x128xf32> -> vector<8x128xf32>
    %64 = arith.addf %61, %63 : vector<8x128xf32>
    %65 = arith.negf %64 : vector<8x128xf32>
    %66 = math.exp %65 : vector<8x128xf32>
    %cst_29 = arith.constant 1.000000e+00 : f32
    %67 = vector.broadcast %cst_29 : f32 to vector<8x128xf32>
    %68 = arith.addf %67, %66 : vector<8x128xf32>
    %69 = arith.divf %67, %68 : vector<8x128xf32>
    %70 = vector.extract_strided_slice %51 {offsets = [0, 256], sizes = [8, 128], strides = [1, 1]} : vector<8x512xf32> to vector<8x128xf32>
    %c0_30 = arith.constant 0 : index
    %c256_31 = arith.constant 256 : index
    %71 = vector.load %arg3[%c0_30, %c256_31] : memref<128x512xf32, #tpu.memory_space<vmem>>, vector<128x128xf32>
    %cst_32 = arith.constant dense<0.000000e+00> : vector<8x128xf32>
    %72 = tpu.matmul %44, %71, %cst_32 {dimension_numbers = #tpu.dot_dimension_numbers<[1], [0], [0], [1], [0, 0, 1, 1], [], []>} : vector<8x128xf32>, vector<128x128xf32>, vector<8x128xf32> -> vector<8x128xf32>
    %73 = arith.addf %70, %72 : vector<8x128xf32>
    %74 = math.tanh %73 : vector<8x128xf32>
    %75 = vector.extract_strided_slice %51 {offsets = [0, 384], sizes = [8, 128], strides = [1, 1]} : vector<8x512xf32> to vector<8x128xf32>
    %c0_33 = arith.constant 0 : index
    %c384_34 = arith.constant 384 : index
    %76 = vector.load %arg3[%c0_33, %c384_34] : memref<128x512xf32, #tpu.memory_space<vmem>>, vector<128x128xf32>
    %cst_35 = arith.constant dense<0.000000e+00> : vector<8x128xf32>
    %77 = tpu.matmul %44, %76, %cst_35 {dimension_numbers = #tpu.dot_dimension_numbers<[1], [0], [0], [1], [0, 0, 1, 1], [], []>} : vector<8x128xf32>, vector<128x128xf32>, vector<8x128xf32> -> vector<8x128xf32>
    %78 = arith.addf %75, %77 : vector<8x128xf32>
    %79 = arith.negf %78 : vector<8x128xf32>
    %80 = math.exp %79 : vector<8x128xf32>
    %cst_36 = arith.constant 1.000000e+00 : f32
    %81 = vector.broadcast %cst_36 : f32 to vector<8x128xf32>
    %82 = arith.addf %81, %80 : vector<8x128xf32>
    %83 = arith.divf %81, %82 : vector<8x128xf32>
    %84 = arith.mulf %69, %42 : vector<8x128xf32>
    %85 = arith.mulf %60, %74 : vector<8x128xf32>
    %86 = arith.addf %84, %85 : vector<8x128xf32>
    %87 = math.tanh %86 : vector<8x128xf32>
    %88 = arith.mulf %83, %87 : vector<8x128xf32>
    %89 = arith.index_cast %c1_i32 : i32 to index
    %c0_37 = arith.constant 0 : index
    %c0_38 = arith.constant 0 : index
    %90 = vector.load %arg4[%89, %c0_37, %c0_38] : memref<8x8x128xf32, #tpu.memory_space<vmem>>, vector<1x8x128xf32>
    %91 = vector.shape_cast %90 : vector<1x8x128xf32> to vector<8x128xf32>
    %92 = vector.shape_cast %88 : vector<8x128xf32> to vector<1x8x128xf32>
    tpu.vector_store %arg4[%89, %c0_37, %c0_38], %92 {strides = array<i32>} : memref<8x8x128xf32, #tpu.memory_space<vmem>>, vector<1x8x128xf32>,
    %c2_i32 = arith.constant 2 : i32
    %93 = arith.index_cast %c2_i32 : i32 to index
    %c0_39 = arith.constant 0 : index
    %c0_40 = arith.constant 0 : index
    %94 = vector.load %arg2[%93, %c0_39, %c0_40] : memref<8x8x512xf32, #tpu.memory_space<vmem>>, vector<1x8x512xf32>
    %95 = vector.shape_cast %94 : vector<1x8x512xf32> to vector<8x512xf32>
    %96 = vector.extract_strided_slice %95 {offsets = [0, 0], sizes = [8, 128], strides = [1, 1]} : vector<8x512xf32> to vector<8x128xf32>
    %c0_41 = arith.constant 0 : index
    %c0_42 = arith.constant 0 : index
    %97 = vector.load %arg3[%c0_41, %c0_42] : memref<128x512xf32, #tpu.memory_space<vmem>>, vector<128x128xf32>
    %cst_43 = arith.constant dense<0.000000e+00> : vector<8x128xf32>
    %98 = tpu.matmul %88, %97, %cst_43 {dimension_numbers = #tpu.dot_dimension_numbers<[1], [0], [0], [1], [0, 0, 1, 1], [], []>} : vector<8x128xf32>, vector<128x128xf32>, vector<8x128xf32> -> vector<8x128xf32>
    %99 = arith.addf %96, %98 : vector<8x128xf32>
    %100 = arith.negf %99 : vector<8x128xf32>
    %101 = math.exp %100 : vector<8x128xf32>
    %cst_44 = arith.constant 1.000000e+00 : f32
    %102 = vector.broadcast %cst_44 : f32 to vector<8x128xf32>
    %103 = arith.addf %102, %101 : vector<8x128xf32>
    %104 = arith.divf %102, %103 : vector<8x128xf32>
    %105 = vector.extract_strided_slice %95 {offsets = [0, 128], sizes = [8, 128], strides = [1, 1]} : vector<8x512xf32> to vector<8x128xf32>
    %c0_45 = arith.constant 0 : index
    %c128_46 = arith.constant 128 : index
    %106 = vector.load %arg3[%c0_45, %c128_46] : memref<128x512xf32, #tpu.memory_space<vmem>>, vector<128x128xf32>
    %cst_47 = arith.constant dense<0.000000e+00> : vector<8x128xf32>
    %107 = tpu.matmul %88, %106, %cst_47 {dimension_numbers = #tpu.dot_dimension_numbers<[1], [0], [0], [1], [0, 0, 1, 1], [], []>} : vector<8x128xf32>, vector<128x128xf32>, vector<8x128xf32> -> vector<8x128xf32>
    %108 = arith.addf %105, %107 : vector<8x128xf32>
    %109 = arith.negf %108 : vector<8x128xf32>
    %110 = math.exp %109 : vector<8x128xf32>
    %cst_48 = arith.constant 1.000000e+00 : f32
    %111 = vector.broadcast %cst_48 : f32 to vector<8x128xf32>
    %112 = arith.addf %111, %110 : vector<8x128xf32>
    %113 = arith.divf %111, %112 : vector<8x128xf32>
    %114 = vector.extract_strided_slice %95 {offsets = [0, 256], sizes = [8, 128], strides = [1, 1]} : vector<8x512xf32> to vector<8x128xf32>
    %c0_49 = arith.constant 0 : index
    %c256_50 = arith.constant 256 : index
    %115 = vector.load %arg3[%c0_49, %c256_50] : memref<128x512xf32, #tpu.memory_space<vmem>>, vector<128x128xf32>
    %cst_51 = arith.constant dense<0.000000e+00> : vector<8x128xf32>
    %116 = tpu.matmul %88, %115, %cst_51 {dimension_numbers = #tpu.dot_dimension_numbers<[1], [0], [0], [1], [0, 0, 1, 1], [], []>} : vector<8x128xf32>, vector<128x128xf32>, vector<8x128xf32> -> vector<8x128xf32>
    %117 = arith.addf %114, %116 : vector<8x128xf32>
    %118 = math.tanh %117 : vector<8x128xf32>
    %119 = vector.extract_strided_slice %95 {offsets = [0, 384], sizes = [8, 128], strides = [1, 1]} : vector<8x512xf32> to vector<8x128xf32>
    %c0_52 = arith.constant 0 : index
    %c384_53 = arith.constant 384 : index
    %120 = vector.load %arg3[%c0_52, %c384_53] : memref<128x512xf32, #tpu.memory_space<vmem>>, vector<128x128xf32>
    %cst_54 = arith.constant dense<0.000000e+00> : vector<8x128xf32>
    %121 = tpu.matmul %88, %120, %cst_54 {dimension_numbers = #tpu.dot_dimension_numbers<[1], [0], [0], [1], [0, 0, 1, 1], [], []>} : vector<8x128xf32>, vector<128x128xf32>, vector<8x128xf32> -> vector<8x128xf32>
    %122 = arith.addf %119, %121 : vector<8x128xf32>
    %123 = arith.negf %122 : vector<8x128xf32>
    %124 = math.exp %123 : vector<8x128xf32>
    %cst_55 = arith.constant 1.000000e+00 : f32
    %125 = vector.broadcast %cst_55 : f32 to vector<8x128xf32>
    %126 = arith.addf %125, %124 : vector<8x128xf32>
    %127 = arith.divf %125, %126 : vector<8x128xf32>
    %128 = arith.mulf %113, %86 : vector<8x128xf32>
    %129 = arith.mulf %104, %118 : vector<8x128xf32>
    %130 = arith.addf %128, %129 : vector<8x128xf32>
    %131 = math.tanh %130 : vector<8x128xf32>
    %132 = arith.mulf %127, %131 : vector<8x128xf32>
    %133 = arith.index_cast %c2_i32 : i32 to index
    %c0_56 = arith.constant 0 : index
    %c0_57 = arith.constant 0 : index
    %134 = vector.load %arg4[%133, %c0_56, %c0_57] : memref<8x8x128xf32, #tpu.memory_space<vmem>>, vector<1x8x128xf32>
    %135 = vector.shape_cast %134 : vector<1x8x128xf32> to vector<8x128xf32>
    %136 = vector.shape_cast %132 : vector<8x128xf32> to vector<1x8x128xf32>
    tpu.vector_store %arg4[%133, %c0_56, %c0_57], %136 {strides = array<i32>} : memref<8x8x128xf32, #tpu.memory_space<vmem>>, vector<1x8x128xf32>,
    %c3_i32 = arith.constant 3 : i32
    %137 = arith.index_cast %c3_i32 : i32 to index
    %c0_58 = arith.constant 0 : index
    %c0_59 = arith.constant 0 : index
    %138 = vector.load %arg2[%137, %c0_58, %c0_59] : memref<8x8x512xf32, #tpu.memory_space<vmem>>, vector<1x8x512xf32>
    %139 = vector.shape_cast %138 : vector<1x8x512xf32> to vector<8x512xf32>
    %140 = vector.extract_strided_slice %139 {offsets = [0, 0], sizes = [8, 128], strides = [1, 1]} : vector<8x512xf32> to vector<8x128xf32>
    %c0_60 = arith.constant 0 : index
    %c0_61 = arith.constant 0 : index
    %141 = vector.load %arg3[%c0_60, %c0_61] : memref<128x512xf32, #tpu.memory_space<vmem>>, vector<128x128xf32>
    %cst_62 = arith.constant dense<0.000000e+00> : vector<8x128xf32>
    %142 = tpu.matmul %132, %141, %cst_62 {dimension_numbers = #tpu.dot_dimension_numbers<[1], [0], [0], [1], [0, 0, 1, 1], [], []>} : vector<8x128xf32>, vector<128x128xf32>, vector<8x128xf32> -> vector<8x128xf32>
    %143 = arith.addf %140, %142 : vector<8x128xf32>
    %144 = arith.negf %143 : vector<8x128xf32>
    %145 = math.exp %144 : vector<8x128xf32>
    %cst_63 = arith.constant 1.000000e+00 : f32
    %146 = vector.broadcast %cst_63 : f32 to vector<8x128xf32>
    %147 = arith.addf %146, %145 : vector<8x128xf32>
    %148 = arith.divf %146, %147 : vector<8x128xf32>
    %149 = vector.extract_strided_slice %139 {offsets = [0, 128], sizes = [8, 128], strides = [1, 1]} : vector<8x512xf32> to vector<8x128xf32>
    %c0_64 = arith.constant 0 : index
    %c128_65 = arith.constant 128 : index
    %150 = vector.load %arg3[%c0_64, %c128_65] : memref<128x512xf32, #tpu.memory_space<vmem>>, vector<128x128xf32>
    %cst_66 = arith.constant dense<0.000000e+00> : vector<8x128xf32>
    %151 = tpu.matmul %132, %150, %cst_66 {dimension_numbers = #tpu.dot_dimension_numbers<[1], [0], [0], [1], [0, 0, 1, 1], [], []>} : vector<8x128xf32>, vector<128x128xf32>, vector<8x128xf32> -> vector<8x128xf32>
    %152 = arith.addf %149, %151 : vector<8x128xf32>
    %153 = arith.negf %152 : vector<8x128xf32>
    %154 = math.exp %153 : vector<8x128xf32>
    %cst_67 = arith.constant 1.000000e+00 : f32
    %155 = vector.broadcast %cst_67 : f32 to vector<8x128xf32>
    %156 = arith.addf %155, %154 : vector<8x128xf32>
    %157 = arith.divf %155, %156 : vector<8x128xf32>
    %158 = vector.extract_strided_slice %139 {offsets = [0, 256], sizes = [8, 128], strides = [1, 1]} : vector<8x512xf32> to vector<8x128xf32>
    %c0_68 = arith.constant 0 : index
    %c256_69 = arith.constant 256 : index
    %159 = vector.load %arg3[%c0_68, %c256_69] : memref<128x512xf32, #tpu.memory_space<vmem>>, vector<128x128xf32>
    %cst_70 = arith.constant dense<0.000000e+00> : vector<8x128xf32>
    %160 = tpu.matmul %132, %159, %cst_70 {dimension_numbers = #tpu.dot_dimension_numbers<[1], [0], [0], [1], [0, 0, 1, 1], [], []>} : vector<8x128xf32>, vector<128x128xf32>, vector<8x128xf32> -> vector<8x128xf32>
    %161 = arith.addf %158, %160 : vector<8x128xf32>
    %162 = math.tanh %161 : vector<8x128xf32>
    %163 = vector.extract_strided_slice %139 {offsets = [0, 384], sizes = [8, 128], strides = [1, 1]} : vector<8x512xf32> to vector<8x128xf32>
    %c0_71 = arith.constant 0 : index
    %c384_72 = arith.constant 384 : index
    %164 = vector.load %arg3[%c0_71, %c384_72] : memref<128x512xf32, #tpu.memory_space<vmem>>, vector<128x128xf32>
    %cst_73 = arith.constant dense<0.000000e+00> : vector<8x128xf32>
    %165 = tpu.matmul %132, %164, %cst_73 {dimension_numbers = #tpu.dot_dimension_numbers<[1], [0], [0], [1], [0, 0, 1, 1], [], []>} : vector<8x128xf32>, vector<128x128xf32>, vector<8x128xf32> -> vector<8x128xf32>
    %166 = arith.addf %163, %165 : vector<8x128xf32>
    %167 = arith.negf %166 : vector<8x128xf32>
    %168 = math.exp %167 : vector<8x128xf32>
    %cst_74 = arith.constant 1.000000e+00 : f32
    %169 = vector.broadcast %cst_74 : f32 to vector<8x128xf32>
    %170 = arith.addf %169, %168 : vector<8x128xf32>
    %171 = arith.divf %169, %170 : vector<8x128xf32>
    %172 = arith.mulf %157, %130 : vector<8x128xf32>
    %173 = arith.mulf %148, %162 : vector<8x128xf32>
    %174 = arith.addf %172, %173 : vector<8x128xf32>
    %175 = math.tanh %174 : vector<8x128xf32>
    %176 = arith.mulf %171, %175 : vector<8x128xf32>
    %177 = arith.index_cast %c3_i32 : i32 to index
    %c0_75 = arith.constant 0 : index
    %c0_76 = arith.constant 0 : index
    %178 = vector.load %arg4[%177, %c0_75, %c0_76] : memref<8x8x128xf32, #tpu.memory_space<vmem>>, vector<1x8x128xf32>
    %179 = vector.shape_cast %178 : vector<1x8x128xf32> to vector<8x128xf32>
    %180 = vector.shape_cast %176 : vector<8x128xf32> to vector<1x8x128xf32>
    tpu.vector_store %arg4[%177, %c0_75, %c0_76], %180 {strides = array<i32>} : memref<8x8x128xf32, #tpu.memory_space<vmem>>, vector<1x8x128xf32>,
    %c4_i32 = arith.constant 4 : i32
    %181 = arith.index_cast %c4_i32 : i32 to index
    %c0_77 = arith.constant 0 : index
    %c0_78 = arith.constant 0 : index
    %182 = vector.load %arg2[%181, %c0_77, %c0_78] : memref<8x8x512xf32, #tpu.memory_space<vmem>>, vector<1x8x512xf32>
    %183 = vector.shape_cast %182 : vector<1x8x512xf32> to vector<8x512xf32>
    %184 = vector.extract_strided_slice %183 {offsets = [0, 0], sizes = [8, 128], strides = [1, 1]} : vector<8x512xf32> to vector<8x128xf32>
    %c0_79 = arith.constant 0 : index
    %c0_80 = arith.constant 0 : index
    %185 = vector.load %arg3[%c0_79, %c0_80] : memref<128x512xf32, #tpu.memory_space<vmem>>, vector<128x128xf32>
    %cst_81 = arith.constant dense<0.000000e+00> : vector<8x128xf32>
    %186 = tpu.matmul %176, %185, %cst_81 {dimension_numbers = #tpu.dot_dimension_numbers<[1], [0], [0], [1], [0, 0, 1, 1], [], []>} : vector<8x128xf32>, vector<128x128xf32>, vector<8x128xf32> -> vector<8x128xf32>
    %187 = arith.addf %184, %186 : vector<8x128xf32>
    %188 = arith.negf %187 : vector<8x128xf32>
    %189 = math.exp %188 : vector<8x128xf32>
    %cst_82 = arith.constant 1.000000e+00 : f32
    %190 = vector.broadcast %cst_82 : f32 to vector<8x128xf32>
    %191 = arith.addf %190, %189 : vector<8x128xf32>
    %192 = arith.divf %190, %191 : vector<8x128xf32>
    %193 = vector.extract_strided_slice %183 {offsets = [0, 128], sizes = [8, 128], strides = [1, 1]} : vector<8x512xf32> to vector<8x128xf32>
    %c0_83 = arith.constant 0 : index
    %c128_84 = arith.constant 128 : index
    %194 = vector.load %arg3[%c0_83, %c128_84] : memref<128x512xf32, #tpu.memory_space<vmem>>, vector<128x128xf32>
    %cst_85 = arith.constant dense<0.000000e+00> : vector<8x128xf32>
    %195 = tpu.matmul %176, %194, %cst_85 {dimension_numbers = #tpu.dot_dimension_numbers<[1], [0], [0], [1], [0, 0, 1, 1], [], []>} : vector<8x128xf32>, vector<128x128xf32>, vector<8x128xf32> -> vector<8x128xf32>
    %196 = arith.addf %193, %195 : vector<8x128xf32>
    %197 = arith.negf %196 : vector<8x128xf32>
    %198 = math.exp %197 : vector<8x128xf32>
    %cst_86 = arith.constant 1.000000e+00 : f32
    %199 = vector.broadcast %cst_86 : f32 to vector<8x128xf32>
    %200 = arith.addf %199, %198 : vector<8x128xf32>
    %201 = arith.divf %199, %200 : vector<8x128xf32>
    %202 = vector.extract_strided_slice %183 {offsets = [0, 256], sizes = [8, 128], strides = [1, 1]} : vector<8x512xf32> to vector<8x128xf32>
    %c0_87 = arith.constant 0 : index
    %c256_88 = arith.constant 256 : index
    %203 = vector.load %arg3[%c0_87, %c256_88] : memref<128x512xf32, #tpu.memory_space<vmem>>, vector<128x128xf32>
    %cst_89 = arith.constant dense<0.000000e+00> : vector<8x128xf32>
    %204 = tpu.matmul %176, %203, %cst_89 {dimension_numbers = #tpu.dot_dimension_numbers<[1], [0], [0], [1], [0, 0, 1, 1], [], []>} : vector<8x128xf32>, vector<128x128xf32>, vector<8x128xf32> -> vector<8x128xf32>
    %205 = arith.addf %202, %204 : vector<8x128xf32>
    %206 = math.tanh %205 : vector<8x128xf32>
    %207 = vector.extract_strided_slice %183 {offsets = [0, 384], sizes = [8, 128], strides = [1, 1]} : vector<8x512xf32> to vector<8x128xf32>
    %c0_90 = arith.constant 0 : index
    %c384_91 = arith.constant 384 : index
    %208 = vector.load %arg3[%c0_90, %c384_91] : memref<128x512xf32, #tpu.memory_space<vmem>>, vector<128x128xf32>
    %cst_92 = arith.constant dense<0.000000e+00> : vector<8x128xf32>
    %209 = tpu.matmul %176, %208, %cst_92 {dimension_numbers = #tpu.dot_dimension_numbers<[1], [0], [0], [1], [0, 0, 1, 1], [], []>} : vector<8x128xf32>, vector<128x128xf32>, vector<8x128xf32> -> vector<8x128xf32>
    %210 = arith.addf %207, %209 : vector<8x128xf32>
    %211 = arith.negf %210 : vector<8x128xf32>
    %212 = math.exp %211 : vector<8x128xf32>
    %cst_93 = arith.constant 1.000000e+00 : f32
    %213 = vector.broadcast %cst_93 : f32 to vector<8x128xf32>
    %214 = arith.addf %213, %212 : vector<8x128xf32>
    %215 = arith.divf %213, %214 : vector<8x128xf32>
    %216 = arith.mulf %201, %174 : vector<8x128xf32>
    %217 = arith.mulf %192, %206 : vector<8x128xf32>
    %218 = arith.addf %216, %217 : vector<8x128xf32>
    %219 = math.tanh %218 : vector<8x128xf32>
    %220 = arith.mulf %215, %219 : vector<8x128xf32>
    %221 = arith.index_cast %c4_i32 : i32 to index
    %c0_94 = arith.constant 0 : index
    %c0_95 = arith.constant 0 : index
    %222 = vector.load %arg4[%221, %c0_94, %c0_95] : memref<8x8x128xf32, #tpu.memory_space<vmem>>, vector<1x8x128xf32>
    %223 = vector.shape_cast %222 : vector<1x8x128xf32> to vector<8x128xf32>
    %224 = vector.shape_cast %220 : vector<8x128xf32> to vector<1x8x128xf32>
    tpu.vector_store %arg4[%221, %c0_94, %c0_95], %224 {strides = array<i32>} : memref<8x8x128xf32, #tpu.memory_space<vmem>>, vector<1x8x128xf32>,
    %c5_i32 = arith.constant 5 : i32
    %225 = arith.index_cast %c5_i32 : i32 to index
    %c0_96 = arith.constant 0 : index
    %c0_97 = arith.constant 0 : index
    %226 = vector.load %arg2[%225, %c0_96, %c0_97] : memref<8x8x512xf32, #tpu.memory_space<vmem>>, vector<1x8x512xf32>
    %227 = vector.shape_cast %226 : vector<1x8x512xf32> to vector<8x512xf32>
    %228 = vector.extract_strided_slice %227 {offsets = [0, 0], sizes = [8, 128], strides = [1, 1]} : vector<8x512xf32> to vector<8x128xf32>
    %c0_98 = arith.constant 0 : index
    %c0_99 = arith.constant 0 : index
    %229 = vector.load %arg3[%c0_98, %c0_99] : memref<128x512xf32, #tpu.memory_space<vmem>>, vector<128x128xf32>
    %cst_100 = arith.constant dense<0.000000e+00> : vector<8x128xf32>
    %230 = tpu.matmul %220, %229, %cst_100 {dimension_numbers = #tpu.dot_dimension_numbers<[1], [0], [0], [1], [0, 0, 1, 1], [], []>} : vector<8x128xf32>, vector<128x128xf32>, vector<8x128xf32> -> vector<8x128xf32>
    %231 = arith.addf %228, %230 : vector<8x128xf32>
    %232 = arith.negf %231 : vector<8x128xf32>
    %233 = math.exp %232 : vector<8x128xf32>
    %cst_101 = arith.constant 1.000000e+00 : f32
    %234 = vector.broadcast %cst_101 : f32 to vector<8x128xf32>
    %235 = arith.addf %234, %233 : vector<8x128xf32>
    %236 = arith.divf %234, %235 : vector<8x128xf32>
    %237 = vector.extract_strided_slice %227 {offsets = [0, 128], sizes = [8, 128], strides = [1, 1]} : vector<8x512xf32> to vector<8x128xf32>
    %c0_102 = arith.constant 0 : index
    %c128_103 = arith.constant 128 : index
    %238 = vector.load %arg3[%c0_102, %c128_103] : memref<128x512xf32, #tpu.memory_space<vmem>>, vector<128x128xf32>
    %cst_104 = arith.constant dense<0.000000e+00> : vector<8x128xf32>
    %239 = tpu.matmul %220, %238, %cst_104 {dimension_numbers = #tpu.dot_dimension_numbers<[1], [0], [0], [1], [0, 0, 1, 1], [], []>} : vector<8x128xf32>, vector<128x128xf32>, vector<8x128xf32> -> vector<8x128xf32>
    %240 = arith.addf %237, %239 : vector<8x128xf32>
    %241 = arith.negf %240 : vector<8x128xf32>
    %242 = math.exp %241 : vector<8x128xf32>
    %cst_105 = arith.constant 1.000000e+00 : f32
    %243 = vector.broadcast %cst_105 : f32 to vector<8x128xf32>
    %244 = arith.addf %243, %242 : vector<8x128xf32>
    %245 = arith.divf %243, %244 : vector<8x128xf32>
    %246 = vector.extract_strided_slice %227 {offsets = [0, 256], sizes = [8, 128], strides = [1, 1]} : vector<8x512xf32> to vector<8x128xf32>
    %c0_106 = arith.constant 0 : index
    %c256_107 = arith.constant 256 : index
    %247 = vector.load %arg3[%c0_106, %c256_107] : memref<128x512xf32, #tpu.memory_space<vmem>>, vector<128x128xf32>
    %cst_108 = arith.constant dense<0.000000e+00> : vector<8x128xf32>
    %248 = tpu.matmul %220, %247, %cst_108 {dimension_numbers = #tpu.dot_dimension_numbers<[1], [0], [0], [1], [0, 0, 1, 1], [], []>} : vector<8x128xf32>, vector<128x128xf32>, vector<8x128xf32> -> vector<8x128xf32>
    %249 = arith.addf %246, %248 : vector<8x128xf32>
    %250 = math.tanh %249 : vector<8x128xf32>
    %251 = vector.extract_strided_slice %227 {offsets = [0, 384], sizes = [8, 128], strides = [1, 1]} : vector<8x512xf32> to vector<8x128xf32>
    %c0_109 = arith.constant 0 : index
    %c384_110 = arith.constant 384 : index
    %252 = vector.load %arg3[%c0_109, %c384_110] : memref<128x512xf32, #tpu.memory_space<vmem>>, vector<128x128xf32>
    %cst_111 = arith.constant dense<0.000000e+00> : vector<8x128xf32>
    %253 = tpu.matmul %220, %252, %cst_111 {dimension_numbers = #tpu.dot_dimension_numbers<[1], [0], [0], [1], [0, 0, 1, 1], [], []>} : vector<8x128xf32>, vector<128x128xf32>, vector<8x128xf32> -> vector<8x128xf32>
    %254 = arith.addf %251, %253 : vector<8x128xf32>
    %255 = arith.negf %254 : vector<8x128xf32>
    %256 = math.exp %255 : vector<8x128xf32>
    %cst_112 = arith.constant 1.000000e+00 : f32
    %257 = vector.broadcast %cst_112 : f32 to vector<8x128xf32>
    %258 = arith.addf %257, %256 : vector<8x128xf32>
    %259 = arith.divf %257, %258 : vector<8x128xf32>
    %260 = arith.mulf %245, %218 : vector<8x128xf32>
    %261 = arith.mulf %236, %250 : vector<8x128xf32>
    %262 = arith.addf %260, %261 : vector<8x128xf32>
    %263 = math.tanh %262 : vector<8x128xf32>
    %264 = arith.mulf %259, %263 : vector<8x128xf32>
    %265 = arith.index_cast %c5_i32 : i32 to index
    %c0_113 = arith.constant 0 : index
    %c0_114 = arith.constant 0 : index
    %266 = vector.load %arg4[%265, %c0_113, %c0_114] : memref<8x8x128xf32, #tpu.memory_space<vmem>>, vector<1x8x128xf32>
    %267 = vector.shape_cast %266 : vector<1x8x128xf32> to vector<8x128xf32>
    %268 = vector.shape_cast %264 : vector<8x128xf32> to vector<1x8x128xf32>
    tpu.vector_store %arg4[%265, %c0_113, %c0_114], %268 {strides = array<i32>} : memref<8x8x128xf32, #tpu.memory_space<vmem>>, vector<1x8x128xf32>,
    %c6_i32 = arith.constant 6 : i32
    %269 = arith.index_cast %c6_i32 : i32 to index
    %c0_115 = arith.constant 0 : index
    %c0_116 = arith.constant 0 : index
    %270 = vector.load %arg2[%269, %c0_115, %c0_116] : memref<8x8x512xf32, #tpu.memory_space<vmem>>, vector<1x8x512xf32>
    %271 = vector.shape_cast %270 : vector<1x8x512xf32> to vector<8x512xf32>
    %272 = vector.extract_strided_slice %271 {offsets = [0, 0], sizes = [8, 128], strides = [1, 1]} : vector<8x512xf32> to vector<8x128xf32>
    %c0_117 = arith.constant 0 : index
    %c0_118 = arith.constant 0 : index
    %273 = vector.load %arg3[%c0_117, %c0_118] : memref<128x512xf32, #tpu.memory_space<vmem>>, vector<128x128xf32>
    %cst_119 = arith.constant dense<0.000000e+00> : vector<8x128xf32>
    %274 = tpu.matmul %264, %273, %cst_119 {dimension_numbers = #tpu.dot_dimension_numbers<[1], [0], [0], [1], [0, 0, 1, 1], [], []>} : vector<8x128xf32>, vector<128x128xf32>, vector<8x128xf32> -> vector<8x128xf32>
    %275 = arith.addf %272, %274 : vector<8x128xf32>
    %276 = arith.negf %275 : vector<8x128xf32>
    %277 = math.exp %276 : vector<8x128xf32>
    %cst_120 = arith.constant 1.000000e+00 : f32
    %278 = vector.broadcast %cst_120 : f32 to vector<8x128xf32>
    %279 = arith.addf %278, %277 : vector<8x128xf32>
    %280 = arith.divf %278, %279 : vector<8x128xf32>
    %281 = vector.extract_strided_slice %271 {offsets = [0, 128], sizes = [8, 128], strides = [1, 1]} : vector<8x512xf32> to vector<8x128xf32>
    %c0_121 = arith.constant 0 : index
    %c128_122 = arith.constant 128 : index
    %282 = vector.load %arg3[%c0_121, %c128_122] : memref<128x512xf32, #tpu.memory_space<vmem>>, vector<128x128xf32>
    %cst_123 = arith.constant dense<0.000000e+00> : vector<8x128xf32>
    %283 = tpu.matmul %264, %282, %cst_123 {dimension_numbers = #tpu.dot_dimension_numbers<[1], [0], [0], [1], [0, 0, 1, 1], [], []>} : vector<8x128xf32>, vector<128x128xf32>, vector<8x128xf32> -> vector<8x128xf32>
    %284 = arith.addf %281, %283 : vector<8x128xf32>
    %285 = arith.negf %284 : vector<8x128xf32>
    %286 = math.exp %285 : vector<8x128xf32>
    %cst_124 = arith.constant 1.000000e+00 : f32
    %287 = vector.broadcast %cst_124 : f32 to vector<8x128xf32>
    %288 = arith.addf %287, %286 : vector<8x128xf32>
    %289 = arith.divf %287, %288 : vector<8x128xf32>
    %290 = vector.extract_strided_slice %271 {offsets = [0, 256], sizes = [8, 128], strides = [1, 1]} : vector<8x512xf32> to vector<8x128xf32>
    %c0_125 = arith.constant 0 : index
    %c256_126 = arith.constant 256 : index
    %291 = vector.load %arg3[%c0_125, %c256_126] : memref<128x512xf32, #tpu.memory_space<vmem>>, vector<128x128xf32>
    %cst_127 = arith.constant dense<0.000000e+00> : vector<8x128xf32>
    %292 = tpu.matmul %264, %291, %cst_127 {dimension_numbers = #tpu.dot_dimension_numbers<[1], [0], [0], [1], [0, 0, 1, 1], [], []>} : vector<8x128xf32>, vector<128x128xf32>, vector<8x128xf32> -> vector<8x128xf32>
    %293 = arith.addf %290, %292 : vector<8x128xf32>
    %294 = math.tanh %293 : vector<8x128xf32>
    %295 = vector.extract_strided_slice %271 {offsets = [0, 384], sizes = [8, 128], strides = [1, 1]} : vector<8x512xf32> to vector<8x128xf32>
    %c0_128 = arith.constant 0 : index
    %c384_129 = arith.constant 384 : index
    %296 = vector.load %arg3[%c0_128, %c384_129] : memref<128x512xf32, #tpu.memory_space<vmem>>, vector<128x128xf32>
    %cst_130 = arith.constant dense<0.000000e+00> : vector<8x128xf32>
    %297 = tpu.matmul %264, %296, %cst_130 {dimension_numbers = #tpu.dot_dimension_numbers<[1], [0], [0], [1], [0, 0, 1, 1], [], []>} : vector<8x128xf32>, vector<128x128xf32>, vector<8x128xf32> -> vector<8x128xf32>
    %298 = arith.addf %295, %297 : vector<8x128xf32>
    %299 = arith.negf %298 : vector<8x128xf32>
    %300 = math.exp %299 : vector<8x128xf32>
    %cst_131 = arith.constant 1.000000e+00 : f32
    %301 = vector.broadcast %cst_131 : f32 to vector<8x128xf32>
    %302 = arith.addf %301, %300 : vector<8x128xf32>
    %303 = arith.divf %301, %302 : vector<8x128xf32>
    %304 = arith.mulf %289, %262 : vector<8x128xf32>
    %305 = arith.mulf %280, %294 : vector<8x128xf32>
    %306 = arith.addf %304, %305 : vector<8x128xf32>
    %307 = math.tanh %306 : vector<8x128xf32>
    %308 = arith.mulf %303, %307 : vector<8x128xf32>
    %309 = arith.index_cast %c6_i32 : i32 to index
    %c0_132 = arith.constant 0 : index
    %c0_133 = arith.constant 0 : index
    %310 = vector.load %arg4[%309, %c0_132, %c0_133] : memref<8x8x128xf32, #tpu.memory_space<vmem>>, vector<1x8x128xf32>
    %311 = vector.shape_cast %310 : vector<1x8x128xf32> to vector<8x128xf32>
    %312 = vector.shape_cast %308 : vector<8x128xf32> to vector<1x8x128xf32>
    tpu.vector_store %arg4[%309, %c0_132, %c0_133], %312 {strides = array<i32>} : memref<8x8x128xf32, #tpu.memory_space<vmem>>, vector<1x8x128xf32>,
    %c7_i32 = arith.constant 7 : i32
    %313 = arith.index_cast %c7_i32 : i32 to index
    %c0_134 = arith.constant 0 : index
    %c0_135 = arith.constant 0 : index
    %314 = vector.load %arg2[%313, %c0_134, %c0_135] : memref<8x8x512xf32, #tpu.memory_space<vmem>>, vector<1x8x512xf32>
    %315 = vector.shape_cast %314 : vector<1x8x512xf32> to vector<8x512xf32>
    %316 = vector.extract_strided_slice %315 {offsets = [0, 0], sizes = [8, 128], strides = [1, 1]} : vector<8x512xf32> to vector<8x128xf32>
    %c0_136 = arith.constant 0 : index
    %c0_137 = arith.constant 0 : index
    %317 = vector.load %arg3[%c0_136, %c0_137] : memref<128x512xf32, #tpu.memory_space<vmem>>, vector<128x128xf32>
    %cst_138 = arith.constant dense<0.000000e+00> : vector<8x128xf32>
    %318 = tpu.matmul %308, %317, %cst_138 {dimension_numbers = #tpu.dot_dimension_numbers<[1], [0], [0], [1], [0, 0, 1, 1], [], []>} : vector<8x128xf32>, vector<128x128xf32>, vector<8x128xf32> -> vector<8x128xf32>
    %319 = arith.addf %316, %318 : vector<8x128xf32>
    %320 = arith.negf %319 : vector<8x128xf32>
    %321 = math.exp %320 : vector<8x128xf32>
    %cst_139 = arith.constant 1.000000e+00 : f32
    %322 = vector.broadcast %cst_139 : f32 to vector<8x128xf32>
    %323 = arith.addf %322, %321 : vector<8x128xf32>
    %324 = arith.divf %322, %323 : vector<8x128xf32>
    %325 = vector.extract_strided_slice %315 {offsets = [0, 128], sizes = [8, 128], strides = [1, 1]} : vector<8x512xf32> to vector<8x128xf32>
    %c0_140 = arith.constant 0 : index
    %c128_141 = arith.constant 128 : index
    %326 = vector.load %arg3[%c0_140, %c128_141] : memref<128x512xf32, #tpu.memory_space<vmem>>, vector<128x128xf32>
    %cst_142 = arith.constant dense<0.000000e+00> : vector<8x128xf32>
    %327 = tpu.matmul %308, %326, %cst_142 {dimension_numbers = #tpu.dot_dimension_numbers<[1], [0], [0], [1], [0, 0, 1, 1], [], []>} : vector<8x128xf32>, vector<128x128xf32>, vector<8x128xf32> -> vector<8x128xf32>
    %328 = arith.addf %325, %327 : vector<8x128xf32>
    %329 = arith.negf %328 : vector<8x128xf32>
    %330 = math.exp %329 : vector<8x128xf32>
    %cst_143 = arith.constant 1.000000e+00 : f32
    %331 = vector.broadcast %cst_143 : f32 to vector<8x128xf32>
    %332 = arith.addf %331, %330 : vector<8x128xf32>
    %333 = arith.divf %331, %332 : vector<8x128xf32>
    %334 = vector.extract_strided_slice %315 {offsets = [0, 256], sizes = [8, 128], strides = [1, 1]} : vector<8x512xf32> to vector<8x128xf32>
    %c0_144 = arith.constant 0 : index
    %c256_145 = arith.constant 256 : index
    %335 = vector.load %arg3[%c0_144, %c256_145] : memref<128x512xf32, #tpu.memory_space<vmem>>, vector<128x128xf32>
    %cst_146 = arith.constant dense<0.000000e+00> : vector<8x128xf32>
    %336 = tpu.matmul %308, %335, %cst_146 {dimension_numbers = #tpu.dot_dimension_numbers<[1], [0], [0], [1], [0, 0, 1, 1], [], []>} : vector<8x128xf32>, vector<128x128xf32>, vector<8x128xf32> -> vector<8x128xf32>
    %337 = arith.addf %334, %336 : vector<8x128xf32>
    %338 = math.tanh %337 : vector<8x128xf32>
    %339 = vector.extract_strided_slice %315 {offsets = [0, 384], sizes = [8, 128], strides = [1, 1]} : vector<8x512xf32> to vector<8x128xf32>
    %c0_147 = arith.constant 0 : index
    %c384_148 = arith.constant 384 : index
    %340 = vector.load %arg3[%c0_147, %c384_148] : memref<128x512xf32, #tpu.memory_space<vmem>>, vector<128x128xf32>
    %cst_149 = arith.constant dense<0.000000e+00> : vector<8x128xf32>
    %341 = tpu.matmul %308, %340, %cst_149 {dimension_numbers = #tpu.dot_dimension_numbers<[1], [0], [0], [1], [0, 0, 1, 1], [], []>} : vector<8x128xf32>, vector<128x128xf32>, vector<8x128xf32> -> vector<8x128xf32>
    %342 = arith.addf %339, %341 : vector<8x128xf32>
    %343 = arith.negf %342 : vector<8x128xf32>
    %344 = math.exp %343 : vector<8x128xf32>
    %cst_150 = arith.constant 1.000000e+00 : f32
    %345 = vector.broadcast %cst_150 : f32 to vector<8x128xf32>
    %346 = arith.addf %345, %344 : vector<8x128xf32>
    %347 = arith.divf %345, %346 : vector<8x128xf32>
    %348 = arith.mulf %333, %306 : vector<8x128xf32>
    %349 = arith.mulf %324, %338 : vector<8x128xf32>
    %350 = arith.addf %348, %349 : vector<8x128xf32>
    %351 = math.tanh %350 : vector<8x128xf32>
    %352 = arith.mulf %347, %351 : vector<8x128xf32>
    %353 = arith.index_cast %c7_i32 : i32 to index
    %c0_151 = arith.constant 0 : index
    %c0_152 = arith.constant 0 : index
    %354 = vector.load %arg4[%353, %c0_151, %c0_152] : memref<8x8x128xf32, #tpu.memory_space<vmem>>, vector<1x8x128xf32>
    %355 = vector.shape_cast %354 : vector<1x8x128xf32> to vector<8x128xf32>
    %356 = vector.shape_cast %352 : vector<8x128xf32> to vector<1x8x128xf32>
    tpu.vector_store %arg4[%353, %c0_151, %c0_152], %356 {strides = array<i32>} : memref<8x8x128xf32, #tpu.memory_space<vmem>>, vector<1x8x128xf32>,
    %c8_i32 = arith.constant 8 : i32
    %c0_153 = arith.constant 0 : index
    %c0_154 = arith.constant 0 : index
    %357 = vector.load %arg5[%c0_153, %c0_154] : memref<8x128xf32, #tpu.memory_space<vmem>>, vector<8x128xf32>
    tpu.vector_store %arg5[%c0_153, %c0_154], %352 {strides = array<i32>} : memref<8x128xf32, #tpu.memory_space<vmem>>, vector<8x128xf32>,
    %c0_155 = arith.constant 0 : index
    %c0_156 = arith.constant 0 : index
    %358 = vector.load %arg6[%c0_155, %c0_156] : memref<8x128xf32, #tpu.memory_space<vmem>>, vector<8x128xf32>
    tpu.vector_store %arg6[%c0_155, %c0_156], %350 {strides = array<i32>} : memref<8x128xf32, #tpu.memory_space<vmem>>, vector<8x128xf32>,
    return
  }
  func.func @transform_0(%arg0: i32, %arg1: i32) -> (i32, i32, i32) {
    %c0_i32 = arith.constant 0 : i32
    %c0_i32_0 = arith.constant 0 : i32
    return %arg1, %arg0, %c0_i32 : i32, i32, i32
  }
  func.func @transform_1(%arg0: i32, %arg1: i32) -> (i32, i32) {
    %c0_i32 = arith.constant 0 : i32
    %c0_i32_0 = arith.constant 0 : i32
    %c0_i32_1 = arith.constant 0 : i32
    return %c0_i32, %c0_i32_0 : i32, i32
  }
  func.func @transform_2(%arg0: i32, %arg1: i32) -> (i32, i32, i32) {
    %c0_i32 = arith.constant 0 : i32
    %c0_i32_0 = arith.constant 0 : i32
    return %arg1, %arg0, %c0_i32 : i32, i32, i32
  }
}

</mosaic_0001>

<llo_original>
// kernel: decoder_forward_pallas.3
$region0: #{decoder_forward_pallas.3}
  #allocation0 [shape = 'u32[]', space=smem, size = 0x4, offset = 0x4, fixed_abs, tag = 'smem constant byte address 0x4 - core index']
  #allocation1 [shape = 'u32[72,128]{1,0:T(1,128)}', space=vmem, size = 0x9000, scoped, tag = 'internal scratch']
  %s0 = inlined_call_operand.vmem [shape: f32[64,32], index: 0, kind: input, shape index: {}]
  %s1 = inlined_call_operand.vmem [shape: f32[32,512], index: 1, kind: input, shape index: {}]
  %s2 = inlined_call_operand.vmem [shape: f32[1,512], index: 2, kind: input, shape index: {}]
  %s3 = inlined_call_operand.vmem [shape: f32[64,512], index: 3, kind: output, shape index: {}]
  %s4 = sld [smem:[#allocation0]]
  $region22: #{decoder_forward_pallas.3} parent=0
    _
  %s6 = ssub.s32 1, %s4
  %s7 = scalar_select 0, %s6, %s4
  // Predicated region
  $region2: #{decoder_forward_pallas.3} parent=0 // pred_check
    _
  $region3: #{decoder_forward_pallas.3} parent=0 // pred_check_branch
    %9 = sbr.rel (0) target = $region5
  $region4: #{decoder_forward_pallas.3} parent=0 // pred_region
    _
  $region5: #{decoder_forward_pallas.3} parent=0 // pred_fallthru
    _
  // Predicated region
  $region6: #{decoder_forward_pallas.3} parent=0 // pred_check
    _
  $region7: #{decoder_forward_pallas.3} parent=0 // pred_check_branch
    %11 = sbr.rel (0) target = $region9
  $region8: #{decoder_forward_pallas.3} parent=0 // pred_region
    _
  $region9: #{decoder_forward_pallas.3} parent=0 // pred_fallthru
    _
  // Predicated region
  $region10: #{decoder_forward_pallas.3} parent=0 // pred_check
    _
  $region11: #{decoder_forward_pallas.3} parent=0 // pred_check_branch
    %13 = sbr.rel (0) target = $region13
  $region12: #{decoder_forward_pallas.3} parent=0 // pred_region
    _
  $region13: #{decoder_forward_pallas.3} parent=0 // pred_fallthru
    _
  %v14 = vld [vmem:[%s0] sm:$0xff]
  %v15 = vld [vmem:[%s0 + $0x8] sm:$0xff]
  %v16 = vld [vmem:[%s0 + $0x10] sm:$0xff]
  %v17 = vld [vmem:[%s0 + $0x18] sm:$0xff]
  %v18 = vld [vmem:[%s0 + $0x20] sm:$0xff]
  %v19 = vld [vmem:[%s0 + $0x28] sm:$0xff]
  %v20 = vld [vmem:[%s0 + $0x30] sm:$0xff]
  %v21 = vld [vmem:[%s0 + $0x38] sm:$0xff]
  %v22 = vld [vmem:[%s1] sm:$0xff]
  %v23 = vld [vmem:[%s1 + $0x8] sm:$0xff]
  %v24 = vld [vmem:[%s1 + $0x10] sm:$0xff]
  %v25 = vld [vmem:[%s1 + $0x18] sm:$0xff]
  %v26 = vld [vmem:[%s1 + $0x20] sm:$0xff]
  %v27 = vld [vmem:[%s1 + $0x28] sm:$0xff]
  %v28 = vld [vmem:[%s1 + $0x30] sm:$0xff]
  %v29 = vld [vmem:[%s1 + $0x38] sm:$0xff]
  %v30 = vld [vmem:[%s1 + $0x40] sm:$0xff]
  %v31 = vld [vmem:[%s1 + $0x48] sm:$0xff]
  %v32 = vld [vmem:[%s1 + $0x50] sm:$0xff]
  %v33 = vld [vmem:[%s1 + $0x58] sm:$0xff]
  %v34 = vld [vmem:[%s1 + $0x60] sm:$0xff]
  %v35 = vld [vmem:[%s1 + $0x68] sm:$0xff]
  %v36 = vld [vmem:[%s1 + $0x70] sm:$0xff]
  %v37 = vld [vmem:[%s1 + $0x78] sm:$0xff]
  %v38 = vld [vmem:[%s2] sm:$0xf]
  %v40 = vperm.slane %v38, 0
  %v41 = vperm.slane %v38, 1
  %v42 = vperm.slane %v38, 2
  %v43 = vperm.slane %v38, 3
  %vm48 = vcmask 261120
  %v50 = vsel %vm48, %v14, 0
  %v53 = vsel %vm48, %v15, 0
  %v56 = vsel %vm48, %v16, 0
  %v59 = vsel %vm48, %v17, 0
  %v62 = vsel %vm48, %v18, 0
  %v65 = vsel %vm48, %v19, 0
  %v68 = vsel %vm48, %v20, 0
  %v71 = vsel %vm48, %v21, 0
  %73 = vmatpush.msra.mxu0 0.0
  %74 = vmatpush.msra.mxu0 0.0
  %75 = vmatpush.msra.mxu0 0.0
  %76 = vmatpush.msra.mxu0 0.0
  %77 = vmatpush.msra.mxu0 0.0
  %78 = vmatpush.msra.mxu0 0.0
  %79 = vmatpush.msra.mxu0 0.0
  %80 = vmatpush.msra.mxu0 0.0
  %81 = vmatpush.msra.mxu0 0.0
  %82 = vmatpush.msra.mxu0 0.0
  %83 = vmatpush.msra.mxu0 0.0
  %84 = vmatpush.msra.mxu0 0.0
  %85 = vmatpush.msra.mxu0 %v34
  %86 = vmatpush.msra.mxu0 %v30
  %87 = vmatpush.msra.mxu0 %v26
  %88 = vmatpush.msra.mxu0 %v22
  %89 = vmatmul.f32.gmra.mxu0 %v50
  %v90 = vpop.f32.mrf.mxu0
  %v91 = vadd.f32 %v40, %v90
  %92 = vmatmul.f32.gmra.mxu0 %v53
  %v93 = vpop.f32.mrf.mxu0
  %v94 = vadd.f32 %v40, %v93
  %95 = vmatmul.f32.gmra.mxu0 %v56
  %v96 = vpop.f32.mrf.mxu0
  %v97 = vadd.f32 %v40, %v96
  %98 = vmatmul.f32.gmra.mxu0 %v59
  %v99 = vpop.f32.mrf.mxu0
  %v100 = vadd.f32 %v40, %v99
  %101 = vmatmul.f32.gmra.mxu0 %v62
  %v102 = vpop.f32.mrf.mxu0
  %v103 = vadd.f32 %v40, %v102
  %104 = vmatmul.f32.gmra.mxu0 %v65
  %v105 = vpop.f32.mrf.mxu0
  %v106 = vadd.f32 %v40, %v105
  %107 = vmatmul.f32.gmra.mxu0 %v68
  %v108 = vpop.f32.mrf.mxu0
  %v109 = vadd.f32 %v40, %v108
  %110 = vmatmul.f32.gmra.mxu0 %v71
  %v111 = vpop.f32.mrf.mxu0
  %v112 = vadd.f32 %v40, %v111
  %113 = vdwg.mxu0
  %114 = vmatpush.msra.mxu0 0.0
  %115 = vmatpush.msra.mxu0 0.0
  %116 = vmatpush.msra.mxu0 0.0
  %117 = vmatpush.msra.mxu0 0.0
  %118 = vmatpush.msra.mxu0 0.0
  %119 = vmatpush.msra.mxu0 0.0
  %120 = vmatpush.msra.mxu0 0.0
  %121 = vmatpush.msra.mxu0 0.0
  %122 = vmatpush.msra.mxu0 0.0
  %123 = vmatpush.msra.mxu0 0.0
  %124 = vmatpush.msra.mxu0 0.0
  %125 = vmatpush.msra.mxu0 0.0
  %126 = vmatpush.msra.mxu0 %v35
  %127 = vmatpush.msra.mxu0 %v31
  %128 = vmatpush.msra.mxu0 %v27
  %129 = vmatpush.msra.mxu0 %v23
  %130 = vmatmul.f32.gmra.mxu0 %v50
  %v131 = vpop.f32.mrf.mxu0
  %v132 = vadd.f32 %v41, %v131
  %133 = vmatmul.f32.gmra.mxu0 %v53
  %v134 = vpop.f32.mrf.mxu0
  %v135 = vadd.f32 %v41, %v134
  %136 = vmatmul.f32.gmra.mxu0 %v56
  %v137 = vpop.f32.mrf.mxu0
  %v138 = vadd.f32 %v41, %v137
  %139 = vmatmul.f32.gmra.mxu0 %v59
  %v140 = vpop.f32.mrf.mxu0
  %v141 = vadd.f32 %v41, %v140
  %142 = vmatmul.f32.gmra.mxu0 %v62
  %v143 = vpop.f32.mrf.mxu0
  %v144 = vadd.f32 %v41, %v143
  %145 = vmatmul.f32.gmra.mxu0 %v65
  %v146 = vpop.f32.mrf.mxu0
  %v147 = vadd.f32 %v41, %v146
  %148 = vmatmul.f32.gmra.mxu0 %v68
  %v149 = vpop.f32.mrf.mxu0
  %v150 = vadd.f32 %v41, %v149
  %151 = vmatmul.f32.gmra.mxu0 %v71
  %v152 = vpop.f32.mrf.mxu0
  %v153 = vadd.f32 %v41, %v152
  %154 = vdwg.mxu0
  %155 = vmatpush.msra.mxu0 0.0
  %156 = vmatpush.msra.mxu0 0.0
  %157 = vmatpush.msra.mxu0 0.0
  %158 = vmatpush.msra.mxu0 0.0
  %159 = vmatpush.msra.mxu0 0.0
  %160 = vmatpush.msra.mxu0 0.0
  %161 = vmatpush.msra.mxu0 0.0
  %162 = vmatpush.msra.mxu0 0.0
  %163 = vmatpush.msra.mxu0 0.0
  %164 = vmatpush.msra.mxu0 0.0
  %165 = vmatpush.msra.mxu0 0.0
  %166 = vmatpush.msra.mxu0 0.0
  %167 = vmatpush.msra.mxu0 %v36
  %168 = vmatpush.msra.mxu0 %v32
  %169 = vmatpush.msra.mxu0 %v28
  %170 = vmatpush.msra.mxu0 %v24
  %171 = vmatmul.f32.gmra.mxu0 %v50
  %v172 = vpop.f32.mrf.mxu0
  %v173 = vadd.f32 %v42, %v172
  %174 = vmatmul.f32.gmra.mxu0 %v53
  %v175 = vpop.f32.mrf.mxu0
  %v176 = vadd.f32 %v42, %v175
  %177 = vmatmul.f32.gmra.mxu0 %v56
  %v178 = vpop.f32.mrf.mxu0
  %v179 = vadd.f32 %v42, %v178
  %180 = vmatmul.f32.gmra.mxu0 %v59
  %v181 = vpop.f32.mrf.mxu0
  %v182 = vadd.f32 %v42, %v181
  %183 = vmatmul.f32.gmra.mxu0 %v62
  %v184 = vpop.f32.mrf.mxu0
  %v185 = vadd.f32 %v42, %v184
  %186 = vmatmul.f32.gmra.mxu0 %v65
  %v187 = vpop.f32.mrf.mxu0
  %v188 = vadd.f32 %v42, %v187
  %189 = vmatmul.f32.gmra.mxu0 %v68
  %v190 = vpop.f32.mrf.mxu0
  %v191 = vadd.f32 %v42, %v190
  %192 = vmatmul.f32.gmra.mxu0 %v71
  %v193 = vpop.f32.mrf.mxu0
  %v194 = vadd.f32 %v42, %v193
  %195 = vdwg.mxu0
  %196 = vmatpush.msra.mxu0 0.0
  %197 = vmatpush.msra.mxu0 0.0
  %198 = vmatpush.msra.mxu0 0.0
  %199 = vmatpush.msra.mxu0 0.0
  %200 = vmatpush.msra.mxu0 0.0
  %201 = vmatpush.msra.mxu0 0.0
  %202 = vmatpush.msra.mxu0 0.0
  %203 = vmatpush.msra.mxu0 0.0
  %204 = vmatpush.msra.mxu0 0.0
  %205 = vmatpush.msra.mxu0 0.0
  %206 = vmatpush.msra.mxu0 0.0
  %207 = vmatpush.msra.mxu0 0.0
  %208 = vmatpush.msra.mxu0 %v37
  %209 = vmatpush.msra.mxu0 %v33
  %210 = vmatpush.msra.mxu0 %v29
  %211 = vmatpush.msra.mxu0 %v25
  %212 = vmatmul.f32.gmra.mxu0 %v50
  %v213 = vpop.f32.mrf.mxu0
  %v214 = vadd.f32 %v43, %v213
  %215 = vmatmul.f32.gmra.mxu0 %v53
  %v216 = vpop.f32.mrf.mxu0
  %v217 = vadd.f32 %v43, %v216
  %218 = vmatmul.f32.gmra.mxu0 %v56
  %v219 = vpop.f32.mrf.mxu0
  %v220 = vadd.f32 %v43, %v219
  %221 = vmatmul.f32.gmra.mxu0 %v59
  %v222 = vpop.f32.mrf.mxu0
  %v223 = vadd.f32 %v43, %v222
  %224 = vmatmul.f32.gmra.mxu0 %v62
  %v225 = vpop.f32.mrf.mxu0
  %v226 = vadd.f32 %v43, %v225
  %227 = vmatmul.f32.gmra.mxu0 %v65
  %v228 = vpop.f32.mrf.mxu0
  %v229 = vadd.f32 %v43, %v228
  %230 = vmatmul.f32.gmra.mxu0 %v68
  %v231 = vpop.f32.mrf.mxu0
  %v232 = vadd.f32 %v43, %v231
  %233 = vmatmul.f32.gmra.mxu0 %v71
  %v234 = vpop.f32.mrf.mxu0
  %v235 = vadd.f32 %v43, %v234
  %236 = vdwg.mxu0
  %237 = vst [vmem:[%s3] sm:$0xff] %v91
  %238 = vst [vmem:[%s3 + $0x8] sm:$0xff] %v132
  %239 = vst [vmem:[%s3 + $0x10] sm:$0xff] %v173
  %240 = vst [vmem:[%s3 + $0x18] sm:$0xff] %v214
  %241 = vst [vmem:[%s3 + $0x20] sm:$0xff] %v94
  %242 = vst [vmem:[%s3 + $0x28] sm:$0xff] %v135
  %243 = vst [vmem:[%s3 + $0x30] sm:$0xff] %v176
  %244 = vst [vmem:[%s3 + $0x38] sm:$0xff] %v217
  %245 = vst [vmem:[%s3 + $0x40] sm:$0xff] %v97
  %246 = vst [vmem:[%s3 + $0x48] sm:$0xff] %v138
  %247 = vst [vmem:[%s3 + $0x50] sm:$0xff] %v179
  %248 = vst [vmem:[%s3 + $0x58] sm:$0xff] %v220
  %249 = vst [vmem:[%s3 + $0x60] sm:$0xff] %v100
  %250 = vst [vmem:[%s3 + $0x68] sm:$0xff] %v141
  %251 = vst [vmem:[%s3 + $0x70] sm:$0xff] %v182
  %252 = vst [vmem:[%s3 + $0x78] sm:$0xff] %v223
  %253 = vst [vmem:[%s3 + $0x80] sm:$0xff] %v103
  %254 = vst [vmem:[%s3 + $0x88] sm:$0xff] %v144
  %255 = vst [vmem:[%s3 + $0x90] sm:$0xff] %v185
  %256 = vst [vmem:[%s3 + $0x98] sm:$0xff] %v226
  %257 = vst [vmem:[%s3 + $0xa0] sm:$0xff] %v106
  %258 = vst [vmem:[%s3 + $0xa8] sm:$0xff] %v147
  %259 = vst [vmem:[%s3 + $0xb0] sm:$0xff] %v188
  %260 = vst [vmem:[%s3 + $0xb8] sm:$0xff] %v229
  %261 = vst [vmem:[%s3 + $0xc0] sm:$0xff] %v109
  %262 = vst [vmem:[%s3 + $0xc8] sm:$0xff] %v150
  %263 = vst [vmem:[%s3 + $0xd0] sm:$0xff] %v191
  %264 = vst [vmem:[%s3 + $0xd8] sm:$0xff] %v232
  %265 = vst [vmem:[%s3 + $0xe0] sm:$0xff] %v112
  %266 = vst [vmem:[%s3 + $0xe8] sm:$0xff] %v153
  %267 = vst [vmem:[%s3 + $0xf0] sm:$0xff] %v194
  %268 = vst [vmem:[%s3 + $0xf8] sm:$0xff] %v235
  // Predicated region
  $region14: #{decoder_forward_pallas.3} parent=0 // pred_check
    _
  $region15: #{decoder_forward_pallas.3} parent=0 // pred_check_branch
    %270 = sbr.rel (0) target = $region17
  $region16: #{decoder_forward_pallas.3} parent=0 // pred_region
    _
  $region17: #{decoder_forward_pallas.3} parent=0 // pred_fallthru
    _
  // Predicated region
  $region18: #{decoder_forward_pallas.3} parent=0 // pred_check
    _
  $region19: #{decoder_forward_pallas.3} parent=0 // pred_check_branch
    %272 = sbr.rel (0) target = $region21
  $region20: #{decoder_forward_pallas.3} parent=0 // pred_region
    _
  $region21: #{decoder_forward_pallas.3} parent=0 // pred_fallthru
    _

// kernel: decoder_forward_pallas.5
$region0: #{decoder_forward_pallas.5}
  #allocation0 [shape = 'u32[]', space=smem, size = 0x4, offset = 0x4, fixed_abs, tag = 'smem constant byte address 0x4 - core index']
  #allocation1 [shape = 'u32[72,128]{1,0:T(1,128)}', space=vmem, size = 0x9000, scoped, tag = 'internal scratch']
  %s0 = inlined_call_operand.vmem [shape: f32[64,128], index: 0, kind: input, shape index: {}]
  %s1 = inlined_call_operand.vmem [shape: f32[128,512], index: 1, kind: input, shape index: {}]
  %s2 = inlined_call_operand.vmem [shape: f32[1,512], index: 2, kind: input, shape index: {}]
  %s3 = inlined_call_operand.vmem [shape: f32[64,512], index: 3, kind: output, shape index: {}]
  %s4 = sld [smem:[#allocation0]]
  $region22: #{decoder_forward_pallas.5} parent=0
    _
  %s6 = ssub.s32 1, %s4
  %s7 = scalar_select 0, %s6, %s4
  // Predicated region
  $region2: #{decoder_forward_pallas.5} parent=0 // pred_check
    _
  $region3: #{decoder_forward_pallas.5} parent=0 // pred_check_branch
    %9 = sbr.rel (0) target = $region5
  $region4: #{decoder_forward_pallas.5} parent=0 // pred_region
    _
  $region5: #{decoder_forward_pallas.5} parent=0 // pred_fallthru
    _
  // Predicated region
  $region6: #{decoder_forward_pallas.5} parent=0 // pred_check
    _
  $region7: #{decoder_forward_pallas.5} parent=0 // pred_check_branch
    %11 = sbr.rel (0) target = $region9
  $region8: #{decoder_forward_pallas.5} parent=0 // pred_region
    _
  $region9: #{decoder_forward_pallas.5} parent=0 // pred_fallthru
    _
  // Predicated region
  $region10: #{decoder_forward_pallas.5} parent=0 // pred_check
    _
  $region11: #{decoder_forward_pallas.5} parent=0 // pred_check_branch
    %13 = sbr.rel (0) target = $region13
  $region12: #{decoder_forward_pallas.5} parent=0 // pred_region
    _
  $region13: #{decoder_forward_pallas.5} parent=0 // pred_fallthru
    _
  %v14 = vld [vmem:[%s0] sm:$0xff]
  %v15 = vld [vmem:[%s0 + $0x8] sm:$0xff]
  %v16 = vld [vmem:[%s0 + $0x10] sm:$0xff]
  %v17 = vld [vmem:[%s0 + $0x18] sm:$0xff]
  %v18 = vld [vmem:[%s0 + $0x20] sm:$0xff]
  %v19 = vld [vmem:[%s0 + $0x28] sm:$0xff]
  %v20 = vld [vmem:[%s0 + $0x30] sm:$0xff]
  %v21 = vld [vmem:[%s0 + $0x38] sm:$0xff]
  %v22 = vld [vmem:[%s1] sm:$0xff]
  %v23 = vld [vmem:[%s1 + $0x8] sm:$0xff]
  %v24 = vld [vmem:[%s1 + $0x10] sm:$0xff]
  %v25 = vld [vmem:[%s1 + $0x18] sm:$0xff]
  %v26 = vld [vmem:[%s1 + $0x20] sm:$0xff]
  %v27 = vld [vmem:[%s1 + $0x28] sm:$0xff]
  %v28 = vld [vmem:[%s1 + $0x30] sm:$0xff]
  %v29 = vld [vmem:[%s1 + $0x38] sm:$0xff]
  %v30 = vld [vmem:[%s1 + $0x40] sm:$0xff]
  %v31 = vld [vmem:[%s1 + $0x48] sm:$0xff]
  %v32 = vld [vmem:[%s1 + $0x50] sm:$0xff]
  %v33 = vld [vmem:[%s1 + $0x58] sm:$0xff]
  %v34 = vld [vmem:[%s1 + $0x60] sm:$0xff]
  %v35 = vld [vmem:[%s1 + $0x68] sm:$0xff]
  %v36 = vld [vmem:[%s1 + $0x70] sm:$0xff]
  %v37 = vld [vmem:[%s1 + $0x78] sm:$0xff]
  %v38 = vld [vmem:[%s1 + $0x80] sm:$0xff]
  %v39 = vld [vmem:[%s1 + $0x88] sm:$0xff]
  %v40 = vld [vmem:[%s1 + $0x90] sm:$0xff]
  %v41 = vld [vmem:[%s1 + $0x98] sm:$0xff]
  %v42 = vld [vmem:[%s1 + $0xa0] sm:$0xff]
  %v43 = vld [vmem:[%s1 + $0xa8] sm:$0xff]
  %v44 = vld [vmem:[%s1 + $0xb0] sm:$0xff]
  %v45 = vld [vmem:[%s1 + $0xb8] sm:$0xff]
  %v46 = vld [vmem:[%s1 + $0xc0] sm:$0xff]
  %v47 = vld [vmem:[%s1 + $0xc8] sm:$0xff]
  %v48 = vld [vmem:[%s1 + $0xd0] sm:$0xff]
  %v49 = vld [vmem:[%s1 + $0xd8] sm:$0xff]
  %v50 = vld [vmem:[%s1 + $0xe0] sm:$0xff]
  %v51 = vld [vmem:[%s1 + $0xe8] sm:$0xff]
  %v52 = vld [vmem:[%s1 + $0xf0] sm:$0xff]
  %v53 = vld [vmem:[%s1 + $0xf8] sm:$0xff]
  %v54 = vld [vmem:[%s1 + $0x100] sm:$0xff]
  %v55 = vld [vmem:[%s1 + $0x108] sm:$0xff]
  %v56 = vld [vmem:[%s1 + $0x110] sm:$0xff]
  %v57 = vld [vmem:[%s1 + $0x118] sm:$0xff]
  %v58 = vld [vmem:[%s1 + $0x120] sm:$0xff]
  %v59 = vld [vmem:[%s1 + $0x128] sm:$0xff]
  %v60 = vld [vmem:[%s1 + $0x130] sm:$0xff]
  %v61 = vld [vmem:[%s1 + $0x138] sm:$0xff]
  %v62 = vld [vmem:[%s1 + $0x140] sm:$0xff]
  %v63 = vld [vmem:[%s1 + $0x148] sm:$0xff]
  %v64 = vld [vmem:[%s1 + $0x150] sm:$0xff]
  %v65 = vld [vmem:[%s1 + $0x158] sm:$0xff]
  %v66 = vld [vmem:[%s1 + $0x160] sm:$0xff]
  %v67 = vld [vmem:[%s1 + $0x168] sm:$0xff]
  %v68 = vld [vmem:[%s1 + $0x170] sm:$0xff]
  %v69 = vld [vmem:[%s1 + $0x178] sm:$0xff]
  %v70 = vld [vmem:[%s1 + $0x180] sm:$0xff]
  %v71 = vld [vmem:[%s1 + $0x188] sm:$0xff]
  %v72 = vld [vmem:[%s1 + $0x190] sm:$0xff]
  %v73 = vld [vmem:[%s1 + $0x198] sm:$0xff]
  %v74 = vld [vmem:[%s1 + $0x1a0] sm:$0xff]
  %v75 = vld [vmem:[%s1 + $0x1a8] sm:$0xff]
  %v76 = vld [vmem:[%s1 + $0x1b0] sm:$0xff]
  %v77 = vld [vmem:[%s1 + $0x1b8] sm:$0xff]
  %v78 = vld [vmem:[%s1 + $0x1c0] sm:$0xff]
  %v79 = vld [vmem:[%s1 + $0x1c8] sm:$0xff]
  %v80 = vld [vmem:[%s1 + $0x1d0] sm:$0xff]
  %v81 = vld [vmem:[%s1 + $0x1d8] sm:$0xff]
  %v82 = vld [vmem:[%s1 + $0x1e0] sm:$0xff]
  %v83 = vld [vmem:[%s1 + $0x1e8] sm:$0xff]
  %v84 = vld [vmem:[%s1 + $0x1f0] sm:$0xff]
  %v85 = vld [vmem:[%s1 + $0x1f8] sm:$0xff]
  %v86 = vld [vmem:[%s2] sm:$0xf]
  %v88 = vperm.slane %v86, 0
  %v89 = vperm.slane %v86, 1
  %v90 = vperm.slane %v86, 2
  %v91 = vperm.slane %v86, 3
  %96 = vmatpush.msra.mxu0 %v82
  %97 = vmatpush.msra.mxu0 %v78
  %98 = vmatpush.msra.mxu0 %v74
  %99 = vmatpush.msra.mxu0 %v70
  %100 = vmatpush.msra.mxu0 %v66
  %101 = vmatpush.msra.mxu0 %v62
  %102 = vmatpush.msra.mxu0 %v58
  %103 = vmatpush.msra.mxu0 %v54
  %104 = vmatpush.msra.mxu0 %v50
  %105 = vmatpush.msra.mxu0 %v46
  %106 = vmatpush.msra.mxu0 %v42
  %107 = vmatpush.msra.mxu0 %v38
  %108 = vmatpush.msra.mxu0 %v34
  %109 = vmatpush.msra.mxu0 %v30
  %110 = vmatpush.msra.mxu0 %v26
  %111 = vmatpush.msra.mxu0 %v22
  %112 = vmatmul.f32.gmra.mxu0 %v14
  %v113 = vpop.f32.mrf.mxu0
  %v114 = vadd.f32 %v88, %v113
  %115 = vmatmul.f32.gmra.mxu0 %v15
  %v116 = vpop.f32.mrf.mxu0
  %v117 = vadd.f32 %v88, %v116
  %118 = vmatmul.f32.gmra.mxu0 %v16
  %v119 = vpop.f32.mrf.mxu0
  %v120 = vadd.f32 %v88, %v119
  %121 = vmatmul.f32.gmra.mxu0 %v17
  %v122 = vpop.f32.mrf.mxu0
  %v123 = vadd.f32 %v88, %v122
  %124 = vmatmul.f32.gmra.mxu0 %v18
  %v125 = vpop.f32.mrf.mxu0
  %v126 = vadd.f32 %v88, %v125
  %127 = vmatmul.f32.gmra.mxu0 %v19
  %v128 = vpop.f32.mrf.mxu0
  %v129 = vadd.f32 %v88, %v128
  %130 = vmatmul.f32.gmra.mxu0 %v20
  %v131 = vpop.f32.mrf.mxu0
  %v132 = vadd.f32 %v88, %v131
  %133 = vmatmul.f32.gmra.mxu0 %v21
  %v134 = vpop.f32.mrf.mxu0
  %v135 = vadd.f32 %v88, %v134
  %136 = vdwg.mxu0
  %137 = vmatpush.msra.mxu0 %v83
  %138 = vmatpush.msra.mxu0 %v79
  %139 = vmatpush.msra.mxu0 %v75
  %140 = vmatpush.msra.mxu0 %v71
  %141 = vmatpush.msra.mxu0 %v67
  %142 = vmatpush.msra.mxu0 %v63
  %143 = vmatpush.msra.mxu0 %v59
  %144 = vmatpush.msra.mxu0 %v55
  %145 = vmatpush.msra.mxu0 %v51
  %146 = vmatpush.msra.mxu0 %v47
  %147 = vmatpush.msra.mxu0 %v43
  %148 = vmatpush.msra.mxu0 %v39
  %149 = vmatpush.msra.mxu0 %v35
  %150 = vmatpush.msra.mxu0 %v31
  %151 = vmatpush.msra.mxu0 %v27
  %152 = vmatpush.msra.mxu0 %v23
  %153 = vmatmul.f32.gmra.mxu0 %v14
  %v154 = vpop.f32.mrf.mxu0
  %v155 = vadd.f32 %v89, %v154
  %156 = vmatmul.f32.gmra.mxu0 %v15
  %v157 = vpop.f32.mrf.mxu0
  %v158 = vadd.f32 %v89, %v157
  %159 = vmatmul.f32.gmra.mxu0 %v16
  %v160 = vpop.f32.mrf.mxu0
  %v161 = vadd.f32 %v89, %v160
  %162 = vmatmul.f32.gmra.mxu0 %v17
  %v163 = vpop.f32.mrf.mxu0
  %v164 = vadd.f32 %v89, %v163
  %165 = vmatmul.f32.gmra.mxu0 %v18
  %v166 = vpop.f32.mrf.mxu0
  %v167 = vadd.f32 %v89, %v166
  %168 = vmatmul.f32.gmra.mxu0 %v19
  %v169 = vpop.f32.mrf.mxu0
  %v170 = vadd.f32 %v89, %v169
  %171 = vmatmul.f32.gmra.mxu0 %v20
  %v172 = vpop.f32.mrf.mxu0
  %v173 = vadd.f32 %v89, %v172
  %174 = vmatmul.f32.gmra.mxu0 %v21
  %v175 = vpop.f32.mrf.mxu0
  %v176 = vadd.f32 %v89, %v175
  %177 = vdwg.mxu0
  %178 = vmatpush.msra.mxu0 %v84
  %179 = vmatpush.msra.mxu0 %v80
  %180 = vmatpush.msra.mxu0 %v76
  %181 = vmatpush.msra.mxu0 %v72
  %182 = vmatpush.msra.mxu0 %v68
  %183 = vmatpush.msra.mxu0 %v64
  %184 = vmatpush.msra.mxu0 %v60
  %185 = vmatpush.msra.mxu0 %v56
  %186 = vmatpush.msra.mxu0 %v52
  %187 = vmatpush.msra.mxu0 %v48
  %188 = vmatpush.msra.mxu0 %v44
  %189 = vmatpush.msra.mxu0 %v40
  %190 = vmatpush.msra.mxu0 %v36
  %191 = vmatpush.msra.mxu0 %v32
  %192 = vmatpush.msra.mxu0 %v28
  %193 = vmatpush.msra.mxu0 %v24
  %194 = vmatmul.f32.gmra.mxu0 %v14
  %v195 = vpop.f32.mrf.mxu0
  %v196 = vadd.f32 %v90, %v195
  %197 = vmatmul.f32.gmra.mxu0 %v15
  %v198 = vpop.f32.mrf.mxu0
  %v199 = vadd.f32 %v90, %v198
  %200 = vmatmul.f32.gmra.mxu0 %v16
  %v201 = vpop.f32.mrf.mxu0
  %v202 = vadd.f32 %v90, %v201
  %203 = vmatmul.f32.gmra.mxu0 %v17
  %v204 = vpop.f32.mrf.mxu0
  %v205 = vadd.f32 %v90, %v204
  %206 = vmatmul.f32.gmra.mxu0 %v18
  %v207 = vpop.f32.mrf.mxu0
  %v208 = vadd.f32 %v90, %v207
  %209 = vmatmul.f32.gmra.mxu0 %v19
  %v210 = vpop.f32.mrf.mxu0
  %v211 = vadd.f32 %v90, %v210
  %212 = vmatmul.f32.gmra.mxu0 %v20
  %v213 = vpop.f32.mrf.mxu0
  %v214 = vadd.f32 %v90, %v213
  %215 = vmatmul.f32.gmra.mxu0 %v21
  %v216 = vpop.f32.mrf.mxu0
  %v217 = vadd.f32 %v90, %v216
  %218 = vdwg.mxu0
  %219 = vmatpush.msra.mxu0 %v85
  %220 = vmatpush.msra.mxu0 %v81
  %221 = vmatpush.msra.mxu0 %v77
  %222 = vmatpush.msra.mxu0 %v73
  %223 = vmatpush.msra.mxu0 %v69
  %224 = vmatpush.msra.mxu0 %v65
  %225 = vmatpush.msra.mxu0 %v61
  %226 = vmatpush.msra.mxu0 %v57
  %227 = vmatpush.msra.mxu0 %v53
  %228 = vmatpush.msra.mxu0 %v49
  %229 = vmatpush.msra.mxu0 %v45
  %230 = vmatpush.msra.mxu0 %v41
  %231 = vmatpush.msra.mxu0 %v37
  %232 = vmatpush.msra.mxu0 %v33
  %233 = vmatpush.msra.mxu0 %v29
  %234 = vmatpush.msra.mxu0 %v25
  %235 = vmatmul.f32.gmra.mxu0 %v14
  %v236 = vpop.f32.mrf.mxu0
  %v237 = vadd.f32 %v91, %v236
  %238 = vmatmul.f32.gmra.mxu0 %v15
  %v239 = vpop.f32.mrf.mxu0
  %v240 = vadd.f32 %v91, %v239
  %241 = vmatmul.f32.gmra.mxu0 %v16
  %v242 = vpop.f32.mrf.mxu0
  %v243 = vadd.f32 %v91, %v242
  %244 = vmatmul.f32.gmra.mxu0 %v17
  %v245 = vpop.f32.mrf.mxu0
  %v246 = vadd.f32 %v91, %v245
  %247 = vmatmul.f32.gmra.mxu0 %v18
  %v248 = vpop.f32.mrf.mxu0
  %v249 = vadd.f32 %v91, %v248
  %250 = vmatmul.f32.gmra.mxu0 %v19
  %v251 = vpop.f32.mrf.mxu0
  %v252 = vadd.f32 %v91, %v251
  %253 = vmatmul.f32.gmra.mxu0 %v20
  %v254 = vpop.f32.mrf.mxu0
  %v255 = vadd.f32 %v91, %v254
  %256 = vmatmul.f32.gmra.mxu0 %v21
  %v257 = vpop.f32.mrf.mxu0
  %v258 = vadd.f32 %v91, %v257
  %259 = vdwg.mxu0
  %260 = vst [vmem:[%s3] sm:$0xff] %v114
  %261 = vst [vmem:[%s3 + $0x8] sm:$0xff] %v155
  %262 = vst [vmem:[%s3 + $0x10] sm:$0xff] %v196
  %263 = vst [vmem:[%s3 + $0x18] sm:$0xff] %v237
  %264 = vst [vmem:[%s3 + $0x20] sm:$0xff] %v117
  %265 = vst [vmem:[%s3 + $0x28] sm:$0xff] %v158
  %266 = vst [vmem:[%s3 + $0x30] sm:$0xff] %v199
  %267 = vst [vmem:[%s3 + $0x38] sm:$0xff] %v240
  %268 = vst [vmem:[%s3 + $0x40] sm:$0xff] %v120
  %269 = vst [vmem:[%s3 + $0x48] sm:$0xff] %v161
  %270 = vst [vmem:[%s3 + $0x50] sm:$0xff] %v202
  %271 = vst [vmem:[%s3 + $0x58] sm:$0xff] %v243
  %272 = vst [vmem:[%s3 + $0x60] sm:$0xff] %v123
  %273 = vst [vmem:[%s3 + $0x68] sm:$0xff] %v164
  %274 = vst [vmem:[%s3 + $0x70] sm:$0xff] %v205
  %275 = vst [vmem:[%s3 + $0x78] sm:$0xff] %v246
  %276 = vst [vmem:[%s3 + $0x80] sm:$0xff] %v126
  %277 = vst [vmem:[%s3 + $0x88] sm:$0xff] %v167
  %278 = vst [vmem:[%s3 + $0x90] sm:$0xff] %v208
  %279 = vst [vmem:[%s3 + $0x98] sm:$0xff] %v249
  %280 = vst [vmem:[%s3 + $0xa0] sm:$0xff] %v129
  %281 = vst [vmem:[%s3 + $0xa8] sm:$0xff] %v170
  %282 = vst [vmem:[%s3 + $0xb0] sm:$0xff] %v211
  %283 = vst [vmem:[%s3 + $0xb8] sm:$0xff] %v252
  %284 = vst [vmem:[%s3 + $0xc0] sm:$0xff] %v132
  %285 = vst [vmem:[%s3 + $0xc8] sm:$0xff] %v173
  %286 = vst [vmem:[%s3 + $0xd0] sm:$0xff] %v214
  %287 = vst [vmem:[%s3 + $0xd8] sm:$0xff] %v255
  %288 = vst [vmem:[%s3 + $0xe0] sm:$0xff] %v135
  %289 = vst [vmem:[%s3 + $0xe8] sm:$0xff] %v176
  %290 = vst [vmem:[%s3 + $0xf0] sm:$0xff] %v217
  %291 = vst [vmem:[%s3 + $0xf8] sm:$0xff] %v258
  // Predicated region
  $region14: #{decoder_forward_pallas.5} parent=0 // pred_check
    _
  $region15: #{decoder_forward_pallas.5} parent=0 // pred_check_branch
    %293 = sbr.rel (0) target = $region17
  $region16: #{decoder_forward_pallas.5} parent=0 // pred_region
    _
  $region17: #{decoder_forward_pallas.5} parent=0 // pred_fallthru
    _
  // Predicated region
  $region18: #{decoder_forward_pallas.5} parent=0 // pred_check
    _
  $region19: #{decoder_forward_pallas.5} parent=0 // pred_check_branch
    %295 = sbr.rel (0) target = $region21
  $region20: #{decoder_forward_pallas.5} parent=0 // pred_region
    _
  $region21: #{decoder_forward_pallas.5} parent=0 // pred_fallthru
    _

// kernel: decoder_forward_pallas.4
$region0: #{decoder_forward_pallas.4}
  #allocation0 [shape = 'u32[]', space=smem, size = 0x4, offset = 0x4, fixed_abs, tag = 'smem constant byte address 0x4 - core index']
  #allocation1 [shape = 'u32[72,128]{1,0:T(1,128)}', space=vmem, size = 0x9000, scoped, tag = 'internal scratch']
  #allocation2 [shape = 'f32[8,128]{1,0:T(8,128)}', space=vmem, size = 0x1000, scoped, tag = 'scratch operand']
  #allocation3 [shape = 'f32[8,128]{1,0:T(8,128)}', space=vmem, size = 0x1000, scoped, tag = 'scratch operand']
  %s0 = inlined_call_operand.vmem [shape: f32[8,8,512], index: 0, kind: input, shape index: {}]
  %s1 = inlined_call_operand.vmem [shape: f32[128,512], index: 1, kind: input, shape index: {}]
  %s2 = inlined_call_operand.vmem [shape: f32[8,8,128], index: 2, kind: output, shape index: {}]
  %s3 = sld [smem:[#allocation0]]
  $region22: #{decoder_forward_pallas.4} parent=0
    _
  %s5 = ssub.s32 1, %s3
  %s6 = scalar_select 0, %s5, %s3
  // Predicated region
  $region2: #{decoder_forward_pallas.4} parent=0 // pred_check
    _
  $region3: #{decoder_forward_pallas.4} parent=0 // pred_check_branch
    %8 = sbr.rel (0) target = $region5
  $region4: #{decoder_forward_pallas.4} parent=0 // pred_region
    _
  $region5: #{decoder_forward_pallas.4} parent=0 // pred_fallthru
    _
  // Predicated region
  $region6: #{decoder_forward_pallas.4} parent=0 // pred_check
    _
  $region7: #{decoder_forward_pallas.4} parent=0 // pred_check_branch
    %10 = sbr.rel (0) target = $region9
  $region8: #{decoder_forward_pallas.4} parent=0 // pred_region
    _
  $region9: #{decoder_forward_pallas.4} parent=0 // pred_fallthru
    _
  %p11 = scmp.eq.s32.totalorder 0, 0
  // Predicated region
  $region10: #{decoder_forward_pallas.4} parent=0 // pred_check
    %p12 = pneg %p11
  $region11: #{decoder_forward_pallas.4} parent=0 // pred_check_branch
    %14 = sbr.rel (%p12) target = $region13
  $region12: #{decoder_forward_pallas.4} parent=0 // pred_region
    %15 = vst [vmem:[#allocation2] sm:$0xff] 0.0
    %16 = vst [vmem:[#allocation3] sm:$0xff] 0.0
  $region13: #{decoder_forward_pallas.4} parent=0 // pred_fallthru
    _
  %v17 = vld [vmem:[#allocation2] sm:$0xff]
  %v18 = vld [vmem:[#allocation3] sm:$0xff]
  %v19 = vld [vmem:[%s0] sm:$0xff]
  %v20 = vld [vmem:[%s0 + $0x8] sm:$0xff]
  %v21 = vld [vmem:[%s0 + $0x10] sm:$0xff]
  %v22 = vld [vmem:[%s0 + $0x18] sm:$0xff]
  %v23 = vld [vmem:[%s1] sm:$0xff]
  %v24 = vld [vmem:[%s1 + $0x20] sm:$0xff]
  %v25 = vld [vmem:[%s1 + $0x40] sm:$0xff]
  %v26 = vld [vmem:[%s1 + $0x60] sm:$0xff]
  %v27 = vld [vmem:[%s1 + $0x80] sm:$0xff]
  %v28 = vld [vmem:[%s1 + $0xa0] sm:$0xff]
  %v29 = vld [vmem:[%s1 + $0xc0] sm:$0xff]
  %v30 = vld [vmem:[%s1 + $0xe0] sm:$0xff]
  %v31 = vld [vmem:[%s1 + $0x100] sm:$0xff]
  %v32 = vld [vmem:[%s1 + $0x120] sm:$0xff]
  %v33 = vld [vmem:[%s1 + $0x140] sm:$0xff]
  %v34 = vld [vmem:[%s1 + $0x160] sm:$0xff]
  %v35 = vld [vmem:[%s1 + $0x180] sm:$0xff]
  %v36 = vld [vmem:[%s1 + $0x1a0] sm:$0xff]
  %v37 = vld [vmem:[%s1 + $0x1c0] sm:$0xff]
  %v38 = vld [vmem:[%s1 + $0x1e0] sm:$0xff]
  %39 = vmatpush.msra.mxu0 %v38
  %40 = vmatpush.msra.mxu0 %v37
  %41 = vmatpush.msra.mxu0 %v36
  %42 = vmatpush.msra.mxu0 %v35
  %43 = vmatpush.msra.mxu0 %v34
  %44 = vmatpush.msra.mxu0 %v33
  %45 = vmatpush.msra.mxu0 %v32
  %46 = vmatpush.msra.mxu0 %v31
  %47 = vmatpush.msra.mxu0 %v30
  %48 = vmatpush.msra.mxu0 %v29
  %49 = vmatpush.msra.mxu0 %v28
  %50 = vmatpush.msra.mxu0 %v27
  %51 = vmatpush.msra.mxu0 %v26
  %52 = vmatpush.msra.mxu0 %v25
  %53 = vmatpush.msra.mxu0 %v24
  %54 = vmatpush.msra.mxu0 %v23
  %55 = vmatmul.f32.gmra.mxu0 %v17
  %v56 = vpop.f32.mrf.mxu0
  %v57 = vadd.f32 0.0, %v56
  %58 = vdwg.mxu0
  %v59 = vadd.f32 %v19, %v57
  %v60 = vxor.u32 %v59, 2147483648
  %v61 = vmul.f32 %v60, 1.442695
  %v62 = vpow.pop %v61
  %v63 = vadd.f32 %v62, 1.0
  %v64 = vrcp.pop %v63
  %v65 = vmul.f32 %v63, %v64
  %v66 = vsub.f32 1.0, %v65
  %v67 = vmul.f32 %v64, %v66
  %v68 = vadd.f32 %v64, %v67
  %vm69 = vweird.f32 %v63
  %vm70 = vweird.f32 %v64
  %vm71 = vmor %vm69, %vm70
  %v72 = vsel %vm71, %v64, %v68
  %v73 = vand.u32 2147483647, %v63
  %vm74 = vcmp.eq.f32.partialorder %v73, 8.507059e+37
  %v75 = vand.u32 %v63, 2147483648
  %v76 = vor.u32 1.1754944e-38, %v75
  %v77 = vsel %vm74, %v76, %v72
  %v78 = vmul.f32 1.0, %v77
  %v79 = vld [vmem:[%s1 + $0x8] sm:$0xff]
  %v80 = vld [vmem:[%s1 + $0x28] sm:$0xff]
  %v81 = vld [vmem:[%s1 + $0x48] sm:$0xff]
  %v82 = vld [vmem:[%s1 + $0x68] sm:$0xff]
  %v83 = vld [vmem:[%s1 + $0x88] sm:$0xff]
  %v84 = vld [vmem:[%s1 + $0xa8] sm:$0xff]
  %v85 = vld [vmem:[%s1 + $0xc8] sm:$0xff]
  %v86 = vld [vmem:[%s1 + $0xe8] sm:$0xff]
  %v87 = vld [vmem:[%s1 + $0x108] sm:$0xff]
  %v88 = vld [vmem:[%s1 + $0x128] sm:$0xff]
  %v89 = vld [vmem:[%s1 + $0x148] sm:$0xff]
  %v90 = vld [vmem:[%s1 + $0x168] sm:$0xff]
  %v91 = vld [vmem:[%s1 + $0x188] sm:$0xff]
  %v92 = vld [vmem:[%s1 + $0x1a8] sm:$0xff]
  %v93 = vld [vmem:[%s1 + $0x1c8] sm:$0xff]
  %v94 = vld [vmem:[%s1 + $0x1e8] sm:$0xff]
  %95 = vmatpush.msra.mxu0 %v94
  %96 = vmatpush.msra.mxu0 %v93
  %97 = vmatpush.msra.mxu0 %v92
  %98 = vmatpush.msra.mxu0 %v91
  %99 = vmatpush.msra.mxu0 %v90
  %100 = vmatpush.msra.mxu0 %v89
  %101 = vmatpush.msra.mxu0 %v88
  %102 = vmatpush.msra.mxu0 %v87
  %103 = vmatpush.msra.mxu0 %v86
  %104 = vmatpush.msra.mxu0 %v85
  %105 = vmatpush.msra.mxu0 %v84
  %106 = vmatpush.msra.mxu0 %v83
  %107 = vmatpush.msra.mxu0 %v82
  %108 = vmatpush.msra.mxu0 %v81
  %109 = vmatpush.msra.mxu0 %v80
  %110 = vmatpush.msra.mxu0 %v79
  %111 = vmatmul.f32.gmra.mxu0 %v17
  %v112 = vpop.f32.mrf.mxu0
  %v113 = vadd.f32 0.0, %v112
  %114 = vdwg.mxu0
  %v115 = vadd.f32 %v20, %v113
  %v116 = vxor.u32 %v115, 2147483648
  %v117 = vmul.f32 %v116, 1.442695
  %v118 = vpow.pop %v117
  %v119 = vadd.f32 %v118, 1.0
  %v120 = vrcp.pop %v119
  %v121 = vmul.f32 %v119, %v120
  %v122 = vsub.f32 1.0, %v121
  %v123 = vmul.f32 %v120, %v122
  %v124 = vadd.f32 %v120, %v123
  %vm125 = vweird.f32 %v119
  %vm126 = vweird.f32 %v120
  %vm127 = vmor %vm125, %vm126
  %v128 = vsel %vm127, %v120, %v124
  %v129 = vand.u32 2147483647, %v119
  %vm130 = vcmp.eq.f32.partialorder %v129, 8.507059e+37
  %v131 = vand.u32 %v119, 2147483648
  %v132 = vor.u32 1.1754944e-38, %v131
  %v133 = vsel %vm130, %v132, %v128
  %v134 = vmul.f32 1.0, %v133
  %v135 = vld [vmem:[%s1 + $0x10] sm:$0xff]
  %v136 = vld [vmem:[%s1 + $0x30] sm:$0xff]
  %v137 = vld [vmem:[%s1 + $0x50] sm:$0xff]
  %v138 = vld [vmem:[%s1 + $0x70] sm:$0xff]
  %v139 = vld [vmem:[%s1 + $0x90] sm:$0xff]
  %v140 = vld [vmem:[%s1 + $0xb0] sm:$0xff]
  %v141 = vld [vmem:[%s1 + $0xd0] sm:$0xff]
  %v142 = vld [vmem:[%s1 + $0xf0] sm:$0xff]
  %v143 = vld [vmem:[%s1 + $0x110] sm:$0xff]
  %v144 = vld [vmem:[%s1 + $0x130] sm:$0xff]
  %v145 = vld [vmem:[%s1 + $0x150] sm:$0xff]
  %v146 = vld [vmem:[%s1 + $0x170] sm:$0xff]
  %v147 = vld [vmem:[%s1 + $0x190] sm:$0xff]
  %v148 = vld [vmem:[%s1 + $0x1b0] sm:$0xff]
  %v149 = vld [vmem:[%s1 + $0x1d0] sm:$0xff]
  %v150 = vld [vmem:[%s1 + $0x1f0] sm:$0xff]
  %151 = vmatpush.msra.mxu0 %v150
  %152 = vmatpush.msra.mxu0 %v149
  %153 = vmatpush.msra.mxu0 %v148
  %154 = vmatpush.msra.mxu0 %v147
  %155 = vmatpush.msra.mxu0 %v146
  %156 = vmatpush.msra.mxu0 %v145
  %157 = vmatpush.msra.mxu0 %v144
  %158 = vmatpush.msra.mxu0 %v143
  %159 = vmatpush.msra.mxu0 %v142
  %160 = vmatpush.msra.mxu0 %v141
  %161 = vmatpush.msra.mxu0 %v140
  %162 = vmatpush.msra.mxu0 %v139
  %163 = vmatpush.msra.mxu0 %v138
  %164 = vmatpush.msra.mxu0 %v137
  %165 = vmatpush.msra.mxu0 %v136
  %166 = vmatpush.msra.mxu0 %v135
  %167 = vmatmul.f32.gmra.mxu0 %v17
  %v168 = vpop.f32.mrf.mxu0
  %v169 = vadd.f32 0.0, %v168
  %170 = vdwg.mxu0
  %v171 = vadd.f32 %v21, %v169
  %v172 = vtanh.pop %v171
  %v173 = vld [vmem:[%s1 + $0x18] sm:$0xff]
  %v174 = vld [vmem:[%s1 + $0x38] sm:$0xff]
  %v175 = vld [vmem:[%s1 + $0x58] sm:$0xff]
  %v176 = vld [vmem:[%s1 + $0x78] sm:$0xff]
  %v177 = vld [vmem:[%s1 + $0x98] sm:$0xff]
  %v178 = vld [vmem:[%s1 + $0xb8] sm:$0xff]
  %v179 = vld [vmem:[%s1 + $0xd8] sm:$0xff]
  %v180 = vld [vmem:[%s1 + $0xf8] sm:$0xff]
  %v181 = vld [vmem:[%s1 + $0x118] sm:$0xff]
  %v182 = vld [vmem:[%s1 + $0x138] sm:$0xff]
  %v183 = vld [vmem:[%s1 + $0x158] sm:$0xff]
  %v184 = vld [vmem:[%s1 + $0x178] sm:$0xff]
  %v185 = vld [vmem:[%s1 + $0x198] sm:$0xff]
  %v186 = vld [vmem:[%s1 + $0x1b8] sm:$0xff]
  %v187 = vld [vmem:[%s1 + $0x1d8] sm:$0xff]
  %v188 = vld [vmem:[%s1 + $0x1f8] sm:$0xff]
  %189 = vmatpush.msra.mxu0 %v188
  %190 = vmatpush.msra.mxu0 %v187
  %191 = vmatpush.msra.mxu0 %v186
  %192 = vmatpush.msra.mxu0 %v185
  %193 = vmatpush.msra.mxu0 %v184
  %194 = vmatpush.msra.mxu0 %v183
  %195 = vmatpush.msra.mxu0 %v182
  %196 = vmatpush.msra.mxu0 %v181
  %197 = vmatpush.msra.mxu0 %v180
  %198 = vmatpush.msra.mxu0 %v179
  %199 = vmatpush.msra.mxu0 %v178
  %200 = vmatpush.msra.mxu0 %v177
  %201 = vmatpush.msra.mxu0 %v176
  %202 = vmatpush.msra.mxu0 %v175
  %203 = vmatpush.msra.mxu0 %v174
  %204 = vmatpush.msra.mxu0 %v173
  %205 = vmatmul.f32.gmra.mxu0 %v17
  %v206 = vpop.f32.mrf.mxu0
  %v207 = vadd.f32 0.0, %v206
  %208 = vdwg.mxu0
  %v209 = vadd.f32 %v22, %v207
  %v210 = vxor.u32 %v209, 2147483648
  %v211 = vmul.f32 %v210, 1.442695
  %v212 = vpow.pop %v211
  %v213 = vadd.f32 %v212, 1.0
  %v214 = vrcp.pop %v213
  %v215 = vmul.f32 %v213, %v214
  %v216 = vsub.f32 1.0, %v215
  %v217 = vmul.f32 %v214, %v216
  %v218 = vadd.f32 %v214, %v217
  %vm219 = vweird.f32 %v213
  %vm220 = vweird.f32 %v214
  %vm221 = vmor %vm219, %vm220
  %v222 = vsel %vm221, %v214, %v218
  %v223 = vand.u32 2147483647, %v213
  %vm224 = vcmp.eq.f32.partialorder %v223, 8.507059e+37
  %v225 = vand.u32 %v213, 2147483648
  %v226 = vor.u32 1.1754944e-38, %v225
  %v227 = vsel %vm224, %v226, %v222
  %v228 = vmul.f32 1.0, %v227
  %v229 = vmul.f32 %v134, %v18
  %v230 = vmul.f32 %v78, %v172
  %v231 = vadd.f32 %v229, %v230
  %v232 = vtanh.pop %v231
  %v233 = vmul.f32 %v228, %v232
  %234 = vst [vmem:[%s2] sm:$0xff] %v233
  %s235 = scalar_lea.vmem %s0, 32
  %v236 = vld [vmem:[%s235] sm:$0xff]
  %v237 = vld [vmem:[%s235 + $0x8] sm:$0xff]
  %v238 = vld [vmem:[%s235 + $0x10] sm:$0xff]
  %v239 = vld [vmem:[%s235 + $0x18] sm:$0xff]
  %v240 = vld [vmem:[%s1] sm:$0xff]
  %v241 = vld [vmem:[%s1 + $0x20] sm:$0xff]
  %v242 = vld [vmem:[%s1 + $0x40] sm:$0xff]
  %v243 = vld [vmem:[%s1 + $0x60] sm:$0xff]
  %v244 = vld [vmem:[%s1 + $0x80] sm:$0xff]
  %v245 = vld [vmem:[%s1 + $0xa0] sm:$0xff]
  %v246 = vld [vmem:[%s1 + $0xc0] sm:$0xff]
  %v247 = vld [vmem:[%s1 + $0xe0] sm:$0xff]
  %v248 = vld [vmem:[%s1 + $0x100] sm:$0xff]
  %v249 = vld [vmem:[%s1 + $0x120] sm:$0xff]
  %v250 = vld [vmem:[%s1 + $0x140] sm:$0xff]
  %v251 = vld [vmem:[%s1 + $0x160] sm:$0xff]
  %v252 = vld [vmem:[%s1 + $0x180] sm:$0xff]
  %v253 = vld [vmem:[%s1 + $0x1a0] sm:$0xff]
  %v254 = vld [vmem:[%s1 + $0x1c0] sm:$0xff]
  %v255 = vld [vmem:[%s1 + $0x1e0] sm:$0xff]
  %256 = vmatpush.msra.mxu0 %v255
  %257 = vmatpush.msra.mxu0 %v254
  %258 = vmatpush.msra.mxu0 %v253
  %259 = vmatpush.msra.mxu0 %v252
  %260 = vmatpush.msra.mxu0 %v251
  %261 = vmatpush.msra.mxu0 %v250
  %262 = vmatpush.msra.mxu0 %v249
  %263 = vmatpush.msra.mxu0 %v248
  %264 = vmatpush.msra.mxu0 %v247
  %265 = vmatpush.msra.mxu0 %v246
  %266 = vmatpush.msra.mxu0 %v245
  %267 = vmatpush.msra.mxu0 %v244
  %268 = vmatpush.msra.mxu0 %v243
  %269 = vmatpush.msra.mxu0 %v242
  %270 = vmatpush.msra.mxu0 %v241
  %271 = vmatpush.msra.mxu0 %v240
  %272 = vmatmul.f32.gmra.mxu0 %v233
  %v273 = vpop.f32.mrf.mxu0
  %v274 = vadd.f32 0.0, %v273
  %275 = vdwg.mxu0
  %v276 = vadd.f32 %v236, %v274
  %v277 = vxor.u32 %v276, 2147483648
  %v278 = vmul.f32 %v277, 1.442695
  %v279 = vpow.pop %v278
  %v280 = vadd.f32 %v279, 1.0
  %v281 = vrcp.pop %v280
  %v282 = vmul.f32 %v280, %v281
  %v283 = vsub.f32 1.0, %v282
  %v284 = vmul.f32 %v281, %v283
  %v285 = vadd.f32 %v281, %v284
  %vm286 = vweird.f32 %v280
  %vm287 = vweird.f32 %v281
  %vm288 = vmor %vm286, %vm287
  %v289 = vsel %vm288, %v281, %v285
  %v290 = vand.u32 2147483647, %v280
  %vm291 = vcmp.eq.f32.partialorder %v290, 8.507059e+37
  %v292 = vand.u32 %v280, 2147483648
  %v293 = vor.u32 1.1754944e-38, %v292
  %v294 = vsel %vm291, %v293, %v289
  %v295 = vmul.f32 1.0, %v294
  %v296 = vld [vmem:[%s1 + $0x8] sm:$0xff]
  %v297 = vld [vmem:[%s1 + $0x28] sm:$0xff]
  %v298 = vld [vmem:[%s1 + $0x48] sm:$0xff]
  %v299 = vld [vmem:[%s1 + $0x68] sm:$0xff]
  %v300 = vld [vmem:[%s1 + $0x88] sm:$0xff]
  %v301 = vld [vmem:[%s1 + $0xa8] sm:$0xff]
  %v302 = vld [vmem:[%s1 + $0xc8] sm:$0xff]
  %v303 = vld [vmem:[%s1 + $0xe8] sm:$0xff]
  %v304 = vld [vmem:[%s1 + $0x108] sm:$0xff]
  %v305 = vld [vmem:[%s1 + $0x128] sm:$0xff]
  %v306 = vld [vmem:[%s1 + $0x148] sm:$0xff]
  %v307 = vld [vmem:[%s1 + $0x168] sm:$0xff]
  %v308 = vld [vmem:[%s1 + $0x188] sm:$0xff]
  %v309 = vld [vmem:[%s1 + $0x1a8] sm:$0xff]
  %v310 = vld [vmem:[%s1 + $0x1c8] sm:$0xff]
  %v311 = vld [vmem:[%s1 + $0x1e8] sm:$0xff]
  %312 = vmatpush.msra.mxu0 %v311
  %313 = vmatpush.msra.mxu0 %v310
  %314 = vmatpush.msra.mxu0 %v309
  %315 = vmatpush.msra.mxu0 %v308
  %316 = vmatpush.msra.mxu0 %v307
  %317 = vmatpush.msra.mxu0 %v306
  %318 = vmatpush.msra.mxu0 %v305
  %319 = vmatpush.msra.mxu0 %v304
  %320 = vmatpush.msra.mxu0 %v303
  %321 = vmatpush.msra.mxu0 %v302
  %322 = vmatpush.msra.mxu0 %v301
  %323 = vmatpush.msra.mxu0 %v300
  %324 = vmatpush.msra.mxu0 %v299
  %325 = vmatpush.msra.mxu0 %v298
  %326 = vmatpush.msra.mxu0 %v297
  %327 = vmatpush.msra.mxu0 %v296
  %328 = vmatmul.f32.gmra.mxu0 %v233
  %v329 = vpop.f32.mrf.mxu0
  %v330 = vadd.f32 0.0, %v329
  %331 = vdwg.mxu0
  %v332 = vadd.f32 %v237, %v330
  %v333 = vxor.u32 %v332, 2147483648
  %v334 = vmul.f32 %v333, 1.442695
  %v335 = vpow.pop %v334
  %v336 = vadd.f32 %v335, 1.0
  %v337 = vrcp.pop %v336
  %v338 = vmul.f32 %v336, %v337
  %v339 = vsub.f32 1.0, %v338
  %v340 = vmul.f32 %v337, %v339
  %v341 = vadd.f32 %v337, %v340
  %vm342 = vweird.f32 %v336
  %vm343 = vweird.f32 %v337
  %vm344 = vmor %vm342, %vm343
  %v345 = vsel %vm344, %v337, %v341
  %v346 = vand.u32 2147483647, %v336
  %vm347 = vcmp.eq.f32.partialorder %v346, 8.507059e+37
  %v348 = vand.u32 %v336, 2147483648
  %v349 = vor.u32 1.1754944e-38, %v348
  %v350 = vsel %vm347, %v349, %v345
  %v351 = vmul.f32 1.0, %v350
  %v352 = vld [vmem:[%s1 + $0x10] sm:$0xff]
  %v353 = vld [vmem:[%s1 + $0x30] sm:$0xff]
  %v354 = vld [vmem:[%s1 + $0x50] sm:$0xff]
  %v355 = vld [vmem:[%s1 + $0x70] sm:$0xff]
  %v356 = vld [vmem:[%s1 + $0x90] sm:$0xff]
  %v357 = vld [vmem:[%s1 + $0xb0] sm:$0xff]
  %v358 = vld [vmem:[%s1 + $0xd0] sm:$0xff]
  %v359 = vld [vmem:[%s1 + $0xf0] sm:$0xff]
  %v360 = vld [vmem:[%s1 + $0x110] sm:$0xff]
  %v361 = vld [vmem:[%s1 + $0x130] sm:$0xff]
  %v362 = vld [vmem:[%s1 + $0x150] sm:$0xff]
  %v363 = vld [vmem:[%s1 + $0x170] sm:$0xff]
  %v364 = vld [vmem:[%s1 + $0x190] sm:$0xff]
  %v365 = vld [vmem:[%s1 + $0x1b0] sm:$0xff]
  %v366 = vld [vmem:[%s1 + $0x1d0] sm:$0xff]
  %v367 = vld [vmem:[%s1 + $0x1f0] sm:$0xff]
  %368 = vmatpush.msra.mxu0 %v367
  %369 = vmatpush.msra.mxu0 %v366
  %370 = vmatpush.msra.mxu0 %v365
  %371 = vmatpush.msra.mxu0 %v364
  %372 = vmatpush.msra.mxu0 %v363
  %373 = vmatpush.msra.mxu0 %v362
  %374 = vmatpush.msra.mxu0 %v361
  %375 = vmatpush.msra.mxu0 %v360
  %376 = vmatpush.msra.mxu0 %v359
  %377 = vmatpush.msra.mxu0 %v358
  %378 = vmatpush.msra.mxu0 %v357
  %379 = vmatpush.msra.mxu0 %v356
  %380 = vmatpush.msra.mxu0 %v355
  %381 = vmatpush.msra.mxu0 %v354
  %382 = vmatpush.msra.mxu0 %v353
  %383 = vmatpush.msra.mxu0 %v352
  %384 = vmatmul.f32.gmra.mxu0 %v233
  %v385 = vpop.f32.mrf.mxu0
  %v386 = vadd.f32 0.0, %v385
  %387 = vdwg.mxu0
  %v388 = vadd.f32 %v238, %v386
  %v389 = vtanh.pop %v388
  %v390 = vld [vmem:[%s1 + $0x18] sm:$0xff]
  %v391 = vld [vmem:[%s1 + $0x38] sm:$0xff]
  %v392 = vld [vmem:[%s1 + $0x58] sm:$0xff]
  %v393 = vld [vmem:[%s1 + $0x78] sm:$0xff]
  %v394 = vld [vmem:[%s1 + $0x98] sm:$0xff]
  %v395 = vld [vmem:[%s1 + $0xb8] sm:$0xff]
  %v396 = vld [vmem:[%s1 + $0xd8] sm:$0xff]
  %v397 = vld [vmem:[%s1 + $0xf8] sm:$0xff]
  %v398 = vld [vmem:[%s1 + $0x118] sm:$0xff]
  %v399 = vld [vmem:[%s1 + $0x138] sm:$0xff]
  %v400 = vld [vmem:[%s1 + $0x158] sm:$0xff]
  %v401 = vld [vmem:[%s1 + $0x178] sm:$0xff]
  %v402 = vld [vmem:[%s1 + $0x198] sm:$0xff]
  %v403 = vld [vmem:[%s1 + $0x1b8] sm:$0xff]
  %v404 = vld [vmem:[%s1 + $0x1d8] sm:$0xff]
  %v405 = vld [vmem:[%s1 + $0x1f8] sm:$0xff]
  %406 = vmatpush.msra.mxu0 %v405
  %407 = vmatpush.msra.mxu0 %v404
  %408 = vmatpush.msra.mxu0 %v403
  %409 = vmatpush.msra.mxu0 %v402
  %410 = vmatpush.msra.mxu0 %v401
  %411 = vmatpush.msra.mxu0 %v400
  %412 = vmatpush.msra.mxu0 %v399
  %413 = vmatpush.msra.mxu0 %v398
  %414 = vmatpush.msra.mxu0 %v397
  %415 = vmatpush.msra.mxu0 %v396
  %416 = vmatpush.msra.mxu0 %v395
  %417 = vmatpush.msra.mxu0 %v394
  %418 = vmatpush.msra.mxu0 %v393
  %419 = vmatpush.msra.mxu0 %v392
  %420 = vmatpush.msra.mxu0 %v391
  %421 = vmatpush.msra.mxu0 %v390
  %422 = vmatmul.f32.gmra.mxu0 %v233
  %v423 = vpop.f32.mrf.mxu0
  %v424 = vadd.f32 0.0, %v423
  %425 = vdwg.mxu0
  %v426 = vadd.f32 %v239, %v424
  %v427 = vxor.u32 %v426, 2147483648
  %v428 = vmul.f32 %v427, 1.442695
  %v429 = vpow.pop %v428
  %v430 = vadd.f32 %v429, 1.0
  %v431 = vrcp.pop %v430
  %v432 = vmul.f32 %v430, %v431
  %v433 = vsub.f32 1.0, %v432
  %v434 = vmul.f32 %v431, %v433
  %v435 = vadd.f32 %v431, %v434
  %vm436 = vweird.f32 %v430
  %vm437 = vweird.f32 %v431
  %vm438 = vmor %vm436, %vm437
  %v439 = vsel %vm438, %v431, %v435
  %v440 = vand.u32 2147483647, %v430
  %vm441 = vcmp.eq.f32.partialorder %v440, 8.507059e+37
  %v442 = vand.u32 %v430, 2147483648
  %v443 = vor.u32 1.1754944e-38, %v442
  %v444 = vsel %vm441, %v443, %v439
  %v445 = vmul.f32 1.0, %v444
  %v446 = vmul.f32 %v351, %v231
  %v447 = vmul.f32 %v295, %v389
  %v448 = vadd.f32 %v446, %v447
  %v449 = vtanh.pop %v448
  %v450 = vmul.f32 %v445, %v449
  %s451 = scalar_lea.vmem %s2, 8
  %452 = vst [vmem:[%s451] sm:$0xff] %v450
  %s453 = scalar_lea.vmem %s0, 64
  %v454 = vld [vmem:[%s453] sm:$0xff]
  %v455 = vld [vmem:[%s453 + $0x8] sm:$0xff]
  %v456 = vld [vmem:[%s453 + $0x10] sm:$0xff]
  %v457 = vld [vmem:[%s453 + $0x18] sm:$0xff]
  %v458 = vld [vmem:[%s1] sm:$0xff]
  %v459 = vld [vmem:[%s1 + $0x20] sm:$0xff]
  %v460 = vld [vmem:[%s1 + $0x40] sm:$0xff]
  %v461 = vld [vmem:[%s1 + $0x60] sm:$0xff]
  %v462 = vld [vmem:[%s1 + $0x80] sm:$0xff]
  %v463 = vld [vmem:[%s1 + $0xa0] sm:$0xff]
  %v464 = vld [vmem:[%s1 + $0xc0] sm:$0xff]
  %v465 = vld [vmem:[%s1 + $0xe0] sm:$0xff]
  %v466 = vld [vmem:[%s1 + $0x100] sm:$0xff]
  %v467 = vld [vmem:[%s1 + $0x120] sm:$0xff]
  %v468 = vld [vmem:[%s1 + $0x140] sm:$0xff]
  %v469 = vld [vmem:[%s1 + $0x160] sm:$0xff]
  %v470 = vld [vmem:[%s1 + $0x180] sm:$0xff]
  %v471 = vld [vmem:[%s1 + $0x1a0] sm:$0xff]
  %v472 = vld [vmem:[%s1 + $0x1c0] sm:$0xff]
  %v473 = vld [vmem:[%s1 + $0x1e0] sm:$0xff]
  %474 = vmatpush.msra.mxu0 %v473
  %475 = vmatpush.msra.mxu0 %v472
  %476 = vmatpush.msra.mxu0 %v471
  %477 = vmatpush.msra.mxu0 %v470
  %478 = vmatpush.msra.mxu0 %v469
  %479 = vmatpush.msra.mxu0 %v468
  %480 = vmatpush.msra.mxu0 %v467
  %481 = vmatpush.msra.mxu0 %v466
  %482 = vmatpush.msra.mxu0 %v465
  %483 = vmatpush.msra.mxu0 %v464
  %484 = vmatpush.msra.mxu0 %v463
  %485 = vmatpush.msra.mxu0 %v462
  %486 = vmatpush.msra.mxu0 %v461
  %487 = vmatpush.msra.mxu0 %v460
  %488 = vmatpush.msra.mxu0 %v459
  %489 = vmatpush.msra.mxu0 %v458
  %490 = vmatmul.f32.gmra.mxu0 %v450
  %v491 = vpop.f32.mrf.mxu0
  %v492 = vadd.f32 0.0, %v491
  %493 = vdwg.mxu0
  %v494 = vadd.f32 %v454, %v492
  %v495 = vxor.u32 %v494, 2147483648
  %v496 = vmul.f32 %v495, 1.442695
  %v497 = vpow.pop %v496
  %v498 = vadd.f32 %v497, 1.0
  %v499 = vrcp.pop %v498
  %v500 = vmul.f32 %v498, %v499
  %v501 = vsub.f32 1.0, %v500
  %v502 = vmul.f32 %v499, %v501
  %v503 = vadd.f32 %v499, %v502
  %vm504 = vweird.f32 %v498
  %vm505 = vweird.f32 %v499
  %vm506 = vmor %vm504, %vm505
  %v507 = vsel %vm506, %v499, %v503
  %v508 = vand.u32 2147483647, %v498
  %vm509 = vcmp.eq.f32.partialorder %v508, 8.507059e+37
  %v510 = vand.u32 %v498, 2147483648
  %v511 = vor.u32 1.1754944e-38, %v510
  %v512 = vsel %vm509, %v511, %v507
  %v513 = vmul.f32 1.0, %v512
  %v514 = vld [vmem:[%s1 + $0x8] sm:$0xff]
  %v515 = vld [vmem:[%s1 + $0x28] sm:$0xff]
  %v516 = vld [vmem:[%s1 + $0x48] sm:$0xff]
  %v517 = vld [vmem:[%s1 + $0x68] sm:$0xff]
  %v518 = vld [vmem:[%s1 + $0x88] sm:$0xff]
  %v519 = vld [vmem:[%s1 + $0xa8] sm:$0xff]
  %v520 = vld [vmem:[%s1 + $0xc8] sm:$0xff]
  %v521 = vld [vmem:[%s1 + $0xe8] sm:$0xff]
  %v522 = vld [vmem:[%s1 + $0x108] sm:$0xff]
  %v523 = vld [vmem:[%s1 + $0x128] sm:$0xff]
  %v524 = vld [vmem:[%s1 + $0x148] sm:$0xff]
  %v525 = vld [vmem:[%s1 + $0x168] sm:$0xff]
  %v526 = vld [vmem:[%s1 + $0x188] sm:$0xff]
  %v527 = vld [vmem:[%s1 + $0x1a8] sm:$0xff]
  %v528 = vld [vmem:[%s1 + $0x1c8] sm:$0xff]
  %v529 = vld [vmem:[%s1 + $0x1e8] sm:$0xff]
  %530 = vmatpush.msra.mxu0 %v529
  %531 = vmatpush.msra.mxu0 %v528
  %532 = vmatpush.msra.mxu0 %v527
  %533 = vmatpush.msra.mxu0 %v526
  %534 = vmatpush.msra.mxu0 %v525
  %535 = vmatpush.msra.mxu0 %v524
  %536 = vmatpush.msra.mxu0 %v523
  %537 = vmatpush.msra.mxu0 %v522
  %538 = vmatpush.msra.mxu0 %v521
  %539 = vmatpush.msra.mxu0 %v520
  %540 = vmatpush.msra.mxu0 %v519
  %541 = vmatpush.msra.mxu0 %v518
  %542 = vmatpush.msra.mxu0 %v517
  %543 = vmatpush.msra.mxu0 %v516
  %544 = vmatpush.msra.mxu0 %v515
  %545 = vmatpush.msra.mxu0 %v514
  %546 = vmatmul.f32.gmra.mxu0 %v450
  %v547 = vpop.f32.mrf.mxu0
  %v548 = vadd.f32 0.0, %v547
  %549 = vdwg.mxu0
  %v550 = vadd.f32 %v455, %v548
  %v551 = vxor.u32 %v550, 2147483648
  %v552 = vmul.f32 %v551, 1.442695
  %v553 = vpow.pop %v552
  %v554 = vadd.f32 %v553, 1.0
  %v555 = vrcp.pop %v554
  %v556 = vmul.f32 %v554, %v555
  %v557 = vsub.f32 1.0, %v556
  %v558 = vmul.f32 %v555, %v557
  %v559 = vadd.f32 %v555, %v558
  %vm560 = vweird.f32 %v554
  %vm561 = vweird.f32 %v555
  %vm562 = vmor %vm560, %vm561
  %v563 = vsel %vm562, %v555, %v559
  %v564 = vand.u32 2147483647, %v554
  %vm565 = vcmp.eq.f32.partialorder %v564, 8.507059e+37
  %v566 = vand.u32 %v554, 2147483648
  %v567 = vor.u32 1.1754944e-38, %v566
  %v568 = vsel %vm565, %v567, %v563
  %v569 = vmul.f32 1.0, %v568
  %v570 = vld [vmem:[%s1 + $0x10] sm:$0xff]
  %v571 = vld [vmem:[%s1 + $0x30] sm:$0xff]
  %v572 = vld [vmem:[%s1 + $0x50] sm:$0xff]
  %v573 = vld [vmem:[%s1 + $0x70] sm:$0xff]
  %v574 = vld [vmem:[%s1 + $0x90] sm:$0xff]
  %v575 = vld [vmem:[%s1 + $0xb0] sm:$0xff]
  %v576 = vld [vmem:[%s1 + $0xd0] sm:$0xff]
  %v577 = vld [vmem:[%s1 + $0xf0] sm:$0xff]
  %v578 = vld [vmem:[%s1 + $0x110] sm:$0xff]
  %v579 = vld [vmem:[%s1 + $0x130] sm:$0xff]
  %v580 = vld [vmem:[%s1 + $0x150] sm:$0xff]
  %v581 = vld [vmem:[%s1 + $0x170] sm:$0xff]
  %v582 = vld [vmem:[%s1 + $0x190] sm:$0xff]
  %v583 = vld [vmem:[%s1 + $0x1b0] sm:$0xff]
  %v584 = vld [vmem:[%s1 + $0x1d0] sm:$0xff]
  %v585 = vld [vmem:[%s1 + $0x1f0] sm:$0xff]
  %586 = vmatpush.msra.mxu0 %v585
  %587 = vmatpush.msra.mxu0 %v584
  %588 = vmatpush.msra.mxu0 %v583
  %589 = vmatpush.msra.mxu0 %v582
  %590 = vmatpush.msra.mxu0 %v581
  %591 = vmatpush.msra.mxu0 %v580
  %592 = vmatpush.msra.mxu0 %v579
  %593 = vmatpush.msra.mxu0 %v578
  %594 = vmatpush.msra.mxu0 %v577
  %595 = vmatpush.msra.mxu0 %v576
  %596 = vmatpush.msra.mxu0 %v575
  %597 = vmatpush.msra.mxu0 %v574
  %598 = vmatpush.msra.mxu0 %v573
  %599 = vmatpush.msra.mxu0 %v572
  %600 = vmatpush.msra.mxu0 %v571
  %601 = vmatpush.msra.mxu0 %v570
  %602 = vmatmul.f32.gmra.mxu0 %v450
  %v603 = vpop.f32.mrf.mxu0
  %v604 = vadd.f32 0.0, %v603
  %605 = vdwg.mxu0
  %v606 = vadd.f32 %v456, %v604
  %v607 = vtanh.pop %v606
  %v608 = vld [vmem:[%s1 + $0x18] sm:$0xff]
  %v609 = vld [vmem:[%s1 + $0x38] sm:$0xff]
  %v610 = vld [vmem:[%s1 + $0x58] sm:$0xff]
  %v611 = vld [vmem:[%s1 + $0x78] sm:$0xff]
  %v612 = vld [vmem:[%s1 + $0x98] sm:$0xff]
  %v613 = vld [vmem:[%s1 + $0xb8] sm:$0xff]
  %v614 = vld [vmem:[%s1 + $0xd8] sm:$0xff]
  %v615 = vld [vmem:[%s1 + $0xf8] sm:$0xff]
  %v616 = vld [vmem:[%s1 + $0x118] sm:$0xff]
  %v617 = vld [vmem:[%s1 + $0x138] sm:$0xff]
  %v618 = vld [vmem:[%s1 + $0x158] sm:$0xff]
  %v619 = vld [vmem:[%s1 + $0x178] sm:$0xff]
  %v620 = vld [vmem:[%s1 + $0x198] sm:$0xff]
  %v621 = vld [vmem:[%s1 + $0x1b8] sm:$0xff]
  %v622 = vld [vmem:[%s1 + $0x1d8] sm:$0xff]
  %v623 = vld [vmem:[%s1 + $0x1f8] sm:$0xff]
  %624 = vmatpush.msra.mxu0 %v623
  %625 = vmatpush.msra.mxu0 %v622
  %626 = vmatpush.msra.mxu0 %v621
  %627 = vmatpush.msra.mxu0 %v620
  %628 = vmatpush.msra.mxu0 %v619
  %629 = vmatpush.msra.mxu0 %v618
  %630 = vmatpush.msra.mxu0 %v617
  %631 = vmatpush.msra.mxu0 %v616
  %632 = vmatpush.msra.mxu0 %v615
  %633 = vmatpush.msra.mxu0 %v614
  %634 = vmatpush.msra.mxu0 %v613
  %635 = vmatpush.msra.mxu0 %v612
  %636 = vmatpush.msra.mxu0 %v611
  %637 = vmatpush.msra.mxu0 %v610
  %638 = vmatpush.msra.mxu0 %v609
  %639 = vmatpush.msra.mxu0 %v608
  %640 = vmatmul.f32.gmra.mxu0 %v450
  %v641 = vpop.f32.mrf.mxu0
  %v642 = vadd.f32 0.0, %v641
  %643 = vdwg.mxu0
  %v644 = vadd.f32 %v457, %v642
  %v645 = vxor.u32 %v644, 2147483648
  %v646 = vmul.f32 %v645, 1.442695
  %v647 = vpow.pop %v646
  %v648 = vadd.f32 %v647, 1.0
  %v649 = vrcp.pop %v648
  %v650 = vmul.f32 %v648, %v649
  %v651 = vsub.f32 1.0, %v650
  %v652 = vmul.f32 %v649, %v651
  %v653 = vadd.f32 %v649, %v652
  %vm654 = vweird.f32 %v648
  %vm655 = vweird.f32 %v649
  %vm656 = vmor %vm654, %vm655
  %v657 = vsel %vm656, %v649, %v653
  %v658 = vand.u32 2147483647, %v648
  %vm659 = vcmp.eq.f32.partialorder %v658, 8.507059e+37
  %v660 = vand.u32 %v648, 2147483648
  %v661 = vor.u32 1.1754944e-38, %v660
  %v662 = vsel %vm659, %v661, %v657
  %v663 = vmul.f32 1.0, %v662
  %v664 = vmul.f32 %v569, %v448
  %v665 = vmul.f32 %v513, %v607
  %v666 = vadd.f32 %v664, %v665
  %v667 = vtanh.pop %v666
  %v668 = vmul.f32 %v663, %v667
  %s669 = scalar_lea.vmem %s2, 16
  %670 = vst [vmem:[%s669] sm:$0xff] %v668
  %s671 = scalar_lea.vmem %s0, 96
  %v672 = vld [vmem:[%s671] sm:$0xff]
  %v673 = vld [vmem:[%s671 + $0x8] sm:$0xff]
  %v674 = vld [vmem:[%s671 + $0x10] sm:$0xff]
  %v675 = vld [vmem:[%s671 + $0x18] sm:$0xff]
  %v676 = vld [vmem:[%s1] sm:$0xff]
  %v677 = vld [vmem:[%s1 + $0x20] sm:$0xff]
  %v678 = vld [vmem:[%s1 + $0x40] sm:$0xff]
  %v679 = vld [vmem:[%s1 + $0x60] sm:$0xff]
  %v680 = vld [vmem:[%s1 + $0x80] sm:$0xff]
  %v681 = vld [vmem:[%s1 + $0xa0] sm:$0xff]
  %v682 = vld [vmem:[%s1 + $0xc0] sm:$0xff]
  %v683 = vld [vmem:[%s1 + $0xe0] sm:$0xff]
  %v684 = vld [vmem:[%s1 + $0x100] sm:$0xff]
  %v685 = vld [vmem:[%s1 + $0x120] sm:$0xff]
  %v686 = vld [vmem:[%s1 + $0x140] sm:$0xff]
  %v687 = vld [vmem:[%s1 + $0x160] sm:$0xff]
  %v688 = vld [vmem:[%s1 + $0x180] sm:$0xff]
  %v689 = vld [vmem:[%s1 + $0x1a0] sm:$0xff]
  %v690 = vld [vmem:[%s1 + $0x1c0] sm:$0xff]
  %v691 = vld [vmem:[%s1 + $0x1e0] sm:$0xff]
  %692 = vmatpush.msra.mxu0 %v691
  %693 = vmatpush.msra.mxu0 %v690
  %694 = vmatpush.msra.mxu0 %v689
  %695 = vmatpush.msra.mxu0 %v688
  %696 = vmatpush.msra.mxu0 %v687
  %697 = vmatpush.msra.mxu0 %v686
  %698 = vmatpush.msra.mxu0 %v685
  %699 = vmatpush.msra.mxu0 %v684
  %700 = vmatpush.msra.mxu0 %v683
  %701 = vmatpush.msra.mxu0 %v682
  %702 = vmatpush.msra.mxu0 %v681
  %703 = vmatpush.msra.mxu0 %v680
  %704 = vmatpush.msra.mxu0 %v679
  %705 = vmatpush.msra.mxu0 %v678
  %706 = vmatpush.msra.mxu0 %v677
  %707 = vmatpush.msra.mxu0 %v676
  %708 = vmatmul.f32.gmra.mxu0 %v668
  %v709 = vpop.f32.mrf.mxu0
  %v710 = vadd.f32 0.0, %v709
  %711 = vdwg.mxu0
  %v712 = vadd.f32 %v672, %v710
  %v713 = vxor.u32 %v712, 2147483648
  %v714 = vmul.f32 %v713, 1.442695
  %v715 = vpow.pop %v714
  %v716 = vadd.f32 %v715, 1.0
  %v717 = vrcp.pop %v716
  %v718 = vmul.f32 %v716, %v717
  %v719 = vsub.f32 1.0, %v718
  %v720 = vmul.f32 %v717, %v719
  %v721 = vadd.f32 %v717, %v720
  %vm722 = vweird.f32 %v716
  %vm723 = vweird.f32 %v717
  %vm724 = vmor %vm722, %vm723
  %v725 = vsel %vm724, %v717, %v721
  %v726 = vand.u32 2147483647, %v716
  %vm727 = vcmp.eq.f32.partialorder %v726, 8.507059e+37
  %v728 = vand.u32 %v716, 2147483648
  %v729 = vor.u32 1.1754944e-38, %v728
  %v730 = vsel %vm727, %v729, %v725
  %v731 = vmul.f32 1.0, %v730
  %v732 = vld [vmem:[%s1 + $0x8] sm:$0xff]
  %v733 = vld [vmem:[%s1 + $0x28] sm:$0xff]
  %v734 = vld [vmem:[%s1 + $0x48] sm:$0xff]
  %v735 = vld [vmem:[%s1 + $0x68] sm:$0xff]
  %v736 = vld [vmem:[%s1 + $0x88] sm:$0xff]
  %v737 = vld [vmem:[%s1 + $0xa8] sm:$0xff]
  %v738 = vld [vmem:[%s1 + $0xc8] sm:$0xff]
  %v739 = vld [vmem:[%s1 + $0xe8] sm:$0xff]
  %v740 = vld [vmem:[%s1 + $0x108] sm:$0xff]
  %v741 = vld [vmem:[%s1 + $0x128] sm:$0xff]
  %v742 = vld [vmem:[%s1 + $0x148] sm:$0xff]
  %v743 = vld [vmem:[%s1 + $0x168] sm:$0xff]
  %v744 = vld [vmem:[%s1 + $0x188] sm:$0xff]
  %v745 = vld [vmem:[%s1 + $0x1a8] sm:$0xff]
  %v746 = vld [vmem:[%s1 + $0x1c8] sm:$0xff]
  %v747 = vld [vmem:[%s1 + $0x1e8] sm:$0xff]
  %748 = vmatpush.msra.mxu0 %v747
  %749 = vmatpush.msra.mxu0 %v746
  %750 = vmatpush.msra.mxu0 %v745
  %751 = vmatpush.msra.mxu0 %v744
  %752 = vmatpush.msra.mxu0 %v743
  %753 = vmatpush.msra.mxu0 %v742
  %754 = vmatpush.msra.mxu0 %v741
  %755 = vmatpush.msra.mxu0 %v740
  %756 = vmatpush.msra.mxu0 %v739
  %757 = vmatpush.msra.mxu0 %v738
  %758 = vmatpush.msra.mxu0 %v737
  %759 = vmatpush.msra.mxu0 %v736
  %760 = vmatpush.msra.mxu0 %v735
  %761 = vmatpush.msra.mxu0 %v734
  %762 = vmatpush.msra.mxu0 %v733
  %763 = vmatpush.msra.mxu0 %v732
  %764 = vmatmul.f32.gmra.mxu0 %v668
  %v765 = vpop.f32.mrf.mxu0
  %v766 = vadd.f32 0.0, %v765
  %767 = vdwg.mxu0
  %v768 = vadd.f32 %v673, %v766
  %v769 = vxor.u32 %v768, 2147483648
  %v770 = vmul.f32 %v769, 1.442695
  %v771 = vpow.pop %v770
  %v772 = vadd.f32 %v771, 1.0
  %v773 = vrcp.pop %v772
  %v774 = vmul.f32 %v772, %v773
  %v775 = vsub.f32 1.0, %v774
  %v776 = vmul.f32 %v773, %v775
  %v777 = vadd.f32 %v773, %v776
  %vm778 = vweird.f32 %v772
  %vm779 = vweird.f32 %v773
  %vm780 = vmor %vm778, %vm779
  %v781 = vsel %vm780, %v773, %v777
  %v782 = vand.u32 2147483647, %v772
  %vm783 = vcmp.eq.f32.partialorder %v782, 8.507059e+37
  %v784 = vand.u32 %v772, 2147483648
  %v785 = vor.u32 1.1754944e-38, %v784
  %v786 = vsel %vm783, %v785, %v781
  %v787 = vmul.f32 1.0, %v786
  %v788 = vld [vmem:[%s1 + $0x10] sm:$0xff]
  %v789 = vld [vmem:[%s1 + $0x30] sm:$0xff]
  %v790 = vld [vmem:[%s1 + $0x50] sm:$0xff]
  %v791 = vld [vmem:[%s1 + $0x70] sm:$0xff]
  %v792 = vld [vmem:[%s1 + $0x90] sm:$0xff]
  %v793 = vld [vmem:[%s1 + $0xb0] sm:$0xff]
  %v794 = vld [vmem:[%s1 + $0xd0] sm:$0xff]
  %v795 = vld [vmem:[%s1 + $0xf0] sm:$0xff]
  %v796 = vld [vmem:[%s1 + $0x110] sm:$0xff]
  %v797 = vld [vmem:[%s1 + $0x130] sm:$0xff]
  %v798 = vld [vmem:[%s1 + $0x150] sm:$0xff]
  %v799 = vld [vmem:[%s1 + $0x170] sm:$0xff]
  %v800 = vld [vmem:[%s1 + $0x190] sm:$0xff]
  %v801 = vld [vmem:[%s1 + $0x1b0] sm:$0xff]
  %v802 = vld [vmem:[%s1 + $0x1d0] sm:$0xff]
  %v803 = vld [vmem:[%s1 + $0x1f0] sm:$0xff]
  %804 = vmatpush.msra.mxu0 %v803
  %805 = vmatpush.msra.mxu0 %v802
  %806 = vmatpush.msra.mxu0 %v801
  %807 = vmatpush.msra.mxu0 %v800
  %808 = vmatpush.msra.mxu0 %v799
  %809 = vmatpush.msra.mxu0 %v798
  %810 = vmatpush.msra.mxu0 %v797
  %811 = vmatpush.msra.mxu0 %v796
  %812 = vmatpush.msra.mxu0 %v795
  %813 = vmatpush.msra.mxu0 %v794
  %814 = vmatpush.msra.mxu0 %v793
  %815 = vmatpush.msra.mxu0 %v792
  %816 = vmatpush.msra.mxu0 %v791
  %817 = vmatpush.msra.mxu0 %v790
  %818 = vmatpush.msra.mxu0 %v789
  %819 = vmatpush.msra.mxu0 %v788
  %820 = vmatmul.f32.gmra.mxu0 %v668
  %v821 = vpop.f32.mrf.mxu0
  %v822 = vadd.f32 0.0, %v821
  %823 = vdwg.mxu0
  %v824 = vadd.f32 %v674, %v822
  %v825 = vtanh.pop %v824
  %v826 = vld [vmem:[%s1 + $0x18] sm:$0xff]
  %v827 = vld [vmem:[%s1 + $0x38] sm:$0xff]
  %v828 = vld [vmem:[%s1 + $0x58] sm:$0xff]
  %v829 = vld [vmem:[%s1 + $0x78] sm:$0xff]
  %v830 = vld [vmem:[%s1 + $0x98] sm:$0xff]
  %v831 = vld [vmem:[%s1 + $0xb8] sm:$0xff]
  %v832 = vld [vmem:[%s1 + $0xd8] sm:$0xff]
  %v833 = vld [vmem:[%s1 + $0xf8] sm:$0xff]
  %v834 = vld [vmem:[%s1 + $0x118] sm:$0xff]
  %v835 = vld [vmem:[%s1 + $0x138] sm:$0xff]
  %v836 = vld [vmem:[%s1 + $0x158] sm:$0xff]
  %v837 = vld [vmem:[%s1 + $0x178] sm:$0xff]
  %v838 = vld [vmem:[%s1 + $0x198] sm:$0xff]
  %v839 = vld [vmem:[%s1 + $0x1b8] sm:$0xff]
  %v840 = vld [vmem:[%s1 + $0x1d8] sm:$0xff]
  %v841 = vld [vmem:[%s1 + $0x1f8] sm:$0xff]
  %842 = vmatpush.msra.mxu0 %v841
  %843 = vmatpush.msra.mxu0 %v840
  %844 = vmatpush.msra.mxu0 %v839
  %845 = vmatpush.msra.mxu0 %v838
  %846 = vmatpush.msra.mxu0 %v837
  %847 = vmatpush.msra.mxu0 %v836
  %848 = vmatpush.msra.mxu0 %v835
  %849 = vmatpush.msra.mxu0 %v834
  %850 = vmatpush.msra.mxu0 %v833
  %851 = vmatpush.msra.mxu0 %v832
  %852 = vmatpush.msra.mxu0 %v831
  %853 = vmatpush.msra.mxu0 %v830
  %854 = vmatpush.msra.mxu0 %v829
  %855 = vmatpush.msra.mxu0 %v828
  %856 = vmatpush.msra.mxu0 %v827
  %857 = vmatpush.msra.mxu0 %v826
  %858 = vmatmul.f32.gmra.mxu0 %v668
  %v859 = vpop.f32.mrf.mxu0
  %v860 = vadd.f32 0.0, %v859
  %861 = vdwg.mxu0
  %v862 = vadd.f32 %v675, %v860
  %v863 = vxor.u32 %v862, 2147483648
  %v864 = vmul.f32 %v863, 1.442695
  %v865 = vpow.pop %v864
  %v866 = vadd.f32 %v865, 1.0
  %v867 = vrcp.pop %v866
  %v868 = vmul.f32 %v866, %v867
  %v869 = vsub.f32 1.0, %v868
  %v870 = vmul.f32 %v867, %v869
  %v871 = vadd.f32 %v867, %v870
  %vm872 = vweird.f32 %v866
  %vm873 = vweird.f32 %v867
  %vm874 = vmor %vm872, %vm873
  %v875 = vsel %vm874, %v867, %v871
  %v876 = vand.u32 2147483647, %v866
  %vm877 = vcmp.eq.f32.partialorder %v876, 8.507059e+37
  %v878 = vand.u32 %v866, 2147483648
  %v879 = vor.u32 1.1754944e-38, %v878
  %v880 = vsel %vm877, %v879, %v875
  %v881 = vmul.f32 1.0, %v880
  %v882 = vmul.f32 %v787, %v666
  %v883 = vmul.f32 %v731, %v825
  %v884 = vadd.f32 %v882, %v883
  %v885 = vtanh.pop %v884
  %v886 = vmul.f32 %v881, %v885
  %s887 = scalar_lea.vmem %s2, 24
  %888 = vst [vmem:[%s887] sm:$0xff] %v886
  %s889 = scalar_lea.vmem %s0, 128
  %v890 = vld [vmem:[%s889] sm:$0xff]
  %v891 = vld [vmem:[%s889 + $0x8] sm:$0xff]
  %v892 = vld [vmem:[%s889 + $0x10] sm:$0xff]
  %v893 = vld [vmem:[%s889 + $0x18] sm:$0xff]
  %v894 = vld [vmem:[%s1] sm:$0xff]
  %v895 = vld [vmem:[%s1 + $0x20] sm:$0xff]
  %v896 = vld [vmem:[%s1 + $0x40] sm:$0xff]
  %v897 = vld [vmem:[%s1 + $0x60] sm:$0xff]
  %v898 = vld [vmem:[%s1 + $0x80] sm:$0xff]
  %v899 = vld [vmem:[%s1 + $0xa0] sm:$0xff]
  %v900 = vld [vmem:[%s1 + $0xc0] sm:$0xff]
  %v901 = vld [vmem:[%s1 + $0xe0] sm:$0xff]
  %v902 = vld [vmem:[%s1 + $0x100] sm:$0xff]
  %v903 = vld [vmem:[%s1 + $0x120] sm:$0xff]
  %v904 = vld [vmem:[%s1 + $0x140] sm:$0xff]
  %v905 = vld [vmem:[%s1 + $0x160] sm:$0xff]
  %v906 = vld [vmem:[%s1 + $0x180] sm:$0xff]
  %v907 = vld [vmem:[%s1 + $0x1a0] sm:$0xff]
  %v908 = vld [vmem:[%s1 + $0x1c0] sm:$0xff]
  %v909 = vld [vmem:[%s1 + $0x1e0] sm:$0xff]
  %910 = vmatpush.msra.mxu0 %v909
  %911 = vmatpush.msra.mxu0 %v908
  %912 = vmatpush.msra.mxu0 %v907
  %913 = vmatpush.msra.mxu0 %v906
  %914 = vmatpush.msra.mxu0 %v905
  %915 = vmatpush.msra.mxu0 %v904
  %916 = vmatpush.msra.mxu0 %v903
  %917 = vmatpush.msra.mxu0 %v902
  %918 = vmatpush.msra.mxu0 %v901
  %919 = vmatpush.msra.mxu0 %v900
  %920 = vmatpush.msra.mxu0 %v899
  %921 = vmatpush.msra.mxu0 %v898
  %922 = vmatpush.msra.mxu0 %v897
  %923 = vmatpush.msra.mxu0 %v896
  %924 = vmatpush.msra.mxu0 %v895
  %925 = vmatpush.msra.mxu0 %v894
  %926 = vmatmul.f32.gmra.mxu0 %v886
  %v927 = vpop.f32.mrf.mxu0
  %v928 = vadd.f32 0.0, %v927
  %929 = vdwg.mxu0
  %v930 = vadd.f32 %v890, %v928
  %v931 = vxor.u32 %v930, 2147483648
  %v932 = vmul.f32 %v931, 1.442695
  %v933 = vpow.pop %v932
  %v934 = vadd.f32 %v933, 1.0
  %v935 = vrcp.pop %v934
  %v936 = vmul.f32 %v934, %v935
  %v937 = vsub.f32 1.0, %v936
  %v938 = vmul.f32 %v935, %v937
  %v939 = vadd.f32 %v935, %v938
  %vm940 = vweird.f32 %v934
  %vm941 = vweird.f32 %v935
  %vm942 = vmor %vm940, %vm941
  %v943 = vsel %vm942, %v935, %v939
  %v944 = vand.u32 2147483647, %v934
  %vm945 = vcmp.eq.f32.partialorder %v944, 8.507059e+37
  %v946 = vand.u32 %v934, 2147483648
  %v947 = vor.u32 1.1754944e-38, %v946
  %v948 = vsel %vm945, %v947, %v943
  %v949 = vmul.f32 1.0, %v948
  %v950 = vld [vmem:[%s1 + $0x8] sm:$0xff]
  %v951 = vld [vmem:[%s1 + $0x28] sm:$0xff]
  %v952 = vld [vmem:[%s1 + $0x48] sm:$0xff]
  %v953 = vld [vmem:[%s1 + $0x68] sm:$0xff]
  %v954 = vld [vmem:[%s1 + $0x88] sm:$0xff]
  %v955 = vld [vmem:[%s1 + $0xa8] sm:$0xff]
  %v956 = vld [vmem:[%s1 + $0xc8] sm:$0xff]
  %v957 = vld [vmem:[%s1 + $0xe8] sm:$0xff]
  %v958 = vld [vmem:[%s1 + $0x108] sm:$0xff]
  %v959 = vld [vmem:[%s1 + $0x128] sm:$0xff]
  %v960 = vld [vmem:[%s1 + $0x148] sm:$0xff]
  %v961 = vld [vmem:[%s1 + $0x168] sm:$0xff]
  %v962 = vld [vmem:[%s1 + $0x188] sm:$0xff]
  %v963 = vld [vmem:[%s1 + $0x1a8] sm:$0xff]
  %v964 = vld [vmem:[%s1 + $0x1c8] sm:$0xff]
  %v965 = vld [vmem:[%s1 + $0x1e8] sm:$0xff]
  %966 = vmatpush.msra.mxu0 %v965
  %967 = vmatpush.msra.mxu0 %v964
  %968 = vmatpush.msra.mxu0 %v963
  %969 = vmatpush.msra.mxu0 %v962
  %970 = vmatpush.msra.mxu0 %v961
  %971 = vmatpush.msra.mxu0 %v960
  %972 = vmatpush.msra.mxu0 %v959
  %973 = vmatpush.msra.mxu0 %v958
  %974 = vmatpush.msra.mxu0 %v957
  %975 = vmatpush.msra.mxu0 %v956
  %976 = vmatpush.msra.mxu0 %v955
  %977 = vmatpush.msra.mxu0 %v954
  %978 = vmatpush.msra.mxu0 %v953
  %979 = vmatpush.msra.mxu0 %v952
  %980 = vmatpush.msra.mxu0 %v951
  %981 = vmatpush.msra.mxu0 %v950
  %982 = vmatmul.f32.gmra.mxu0 %v886
  %v983 = vpop.f32.mrf.mxu0
  %v984 = vadd.f32 0.0, %v983
  %985 = vdwg.mxu0
  %v986 = vadd.f32 %v891, %v984
  %v987 = vxor.u32 %v986, 2147483648
  %v988 = vmul.f32 %v987, 1.442695
  %v989 = vpow.pop %v988
  %v990 = vadd.f32 %v989, 1.0
  %v991 = vrcp.pop %v990
  %v992 = vmul.f32 %v990, %v991
  %v993 = vsub.f32 1.0, %v992
  %v994 = vmul.f32 %v991, %v993
  %v995 = vadd.f32 %v991, %v994
  %vm996 = vweird.f32 %v990
  %vm997 = vweird.f32 %v991
  %vm998 = vmor %vm996, %vm997
  %v999 = vsel %vm998, %v991, %v995
  %v1000 = vand.u32 2147483647, %v990
  %vm1001 = vcmp.eq.f32.partialorder %v1000, 8.507059e+37
  %v1002 = vand.u32 %v990, 2147483648
  %v1003 = vor.u32 1.1754944e-38, %v1002
  %v1004 = vsel %vm1001, %v1003, %v999
  %v1005 = vmul.f32 1.0, %v1004
  %v1006 = vld [vmem:[%s1 + $0x10] sm:$0xff]
  %v1007 = vld [vmem:[%s1 + $0x30] sm:$0xff]
  %v1008 = vld [vmem:[%s1 + $0x50] sm:$0xff]
  %v1009 = vld [vmem:[%s1 + $0x70] sm:$0xff]
  %v1010 = vld [vmem:[%s1 + $0x90] sm:$0xff]
  %v1011 = vld [vmem:[%s1 + $0xb0] sm:$0xff]
  %v1012 = vld [vmem:[%s1 + $0xd0] sm:$0xff]
  %v1013 = vld [vmem:[%s1 + $0xf0] sm:$0xff]
  %v1014 = vld [vmem:[%s1 + $0x110] sm:$0xff]
  %v1015 = vld [vmem:[%s1 + $0x130] sm:$0xff]
  %v1016 = vld [vmem:[%s1 + $0x150] sm:$0xff]
  %v1017 = vld [vmem:[%s1 + $0x170] sm:$0xff]
  %v1018 = vld [vmem:[%s1 + $0x190] sm:$0xff]
  %v1019 = vld [vmem:[%s1 + $0x1b0] sm:$0xff]
  %v1020 = vld [vmem:[%s1 + $0x1d0] sm:$0xff]
  %v1021 = vld [vmem:[%s1 + $0x1f0] sm:$0xff]
  %1022 = vmatpush.msra.mxu0 %v1021
  %1023 = vmatpush.msra.mxu0 %v1020
  %1024 = vmatpush.msra.mxu0 %v1019
  %1025 = vmatpush.msra.mxu0 %v1018
  %1026 = vmatpush.msra.mxu0 %v1017
  %1027 = vmatpush.msra.mxu0 %v1016
  %1028 = vmatpush.msra.mxu0 %v1015
  %1029 = vmatpush.msra.mxu0 %v1014
  %1030 = vmatpush.msra.mxu0 %v1013
  %1031 = vmatpush.msra.mxu0 %v1012
  %1032 = vmatpush.msra.mxu0 %v1011
  %1033 = vmatpush.msra.mxu0 %v1010
  %1034 = vmatpush.msra.mxu0 %v1009
  %1035 = vmatpush.msra.mxu0 %v1008
  %1036 = vmatpush.msra.mxu0 %v1007
  %1037 = vmatpush.msra.mxu0 %v1006
  %1038 = vmatmul.f32.gmra.mxu0 %v886
  %v1039 = vpop.f32.mrf.mxu0
  %v1040 = vadd.f32 0.0, %v1039
  %1041 = vdwg.mxu0
  %v1042 = vadd.f32 %v892, %v1040
  %v1043 = vtanh.pop %v1042
  %v1044 = vld [vmem:[%s1 + $0x18] sm:$0xff]
  %v1045 = vld [vmem:[%s1 + $0x38] sm:$0xff]
  %v1046 = vld [vmem:[%s1 + $0x58] sm:$0xff]
  %v1047 = vld [vmem:[%s1 + $0x78] sm:$0xff]
  %v1048 = vld [vmem:[%s1 + $0x98] sm:$0xff]
  %v1049 = vld [vmem:[%s1 + $0xb8] sm:$0xff]
  %v1050 = vld [vmem:[%s1 + $0xd8] sm:$0xff]
  %v1051 = vld [vmem:[%s1 + $0xf8] sm:$0xff]
  %v1052 = vld [vmem:[%s1 + $0x118] sm:$0xff]
  %v1053 = vld [vmem:[%s1 + $0x138] sm:$0xff]
  %v1054 = vld [vmem:[%s1 + $0x158] sm:$0xff]
  %v1055 = vld [vmem:[%s1 + $0x178] sm:$0xff]
  %v1056 = vld [vmem:[%s1 + $0x198] sm:$0xff]
  %v1057 = vld [vmem:[%s1 + $0x1b8] sm:$0xff]
  %v1058 = vld [vmem:[%s1 + $0x1d8] sm:$0xff]
  %v1059 = vld [vmem:[%s1 + $0x1f8] sm:$0xff]
  %1060 = vmatpush.msra.mxu0 %v1059
  %1061 = vmatpush.msra.mxu0 %v1058
  %1062 = vmatpush.msra.mxu0 %v1057
  %1063 = vmatpush.msra.mxu0 %v1056
  %1064 = vmatpush.msra.mxu0 %v1055
  %1065 = vmatpush.msra.mxu0 %v1054
  %1066 = vmatpush.msra.mxu0 %v1053
  %1067 = vmatpush.msra.mxu0 %v1052
  %1068 = vmatpush.msra.mxu0 %v1051
  %1069 = vmatpush.msra.mxu0 %v1050
  %1070 = vmatpush.msra.mxu0 %v1049
  %1071 = vmatpush.msra.mxu0 %v1048
  %1072 = vmatpush.msra.mxu0 %v1047
  %1073 = vmatpush.msra.mxu0 %v1046
  %1074 = vmatpush.msra.mxu0 %v1045
  %1075 = vmatpush.msra.mxu0 %v1044
  %1076 = vmatmul.f32.gmra.mxu0 %v886
  %v1077 = vpop.f32.mrf.mxu0
  %v1078 = vadd.f32 0.0, %v1077
  %1079 = vdwg.mxu0
  %v1080 = vadd.f32 %v893, %v1078
  %v1081 = vxor.u32 %v1080, 2147483648
  %v1082 = vmul.f32 %v1081, 1.442695
  %v1083 = vpow.pop %v1082
  %v1084 = vadd.f32 %v1083, 1.0
  %v1085 = vrcp.pop %v1084
  %v1086 = vmul.f32 %v1084, %v1085
  %v1087 = vsub.f32 1.0, %v1086
  %v1088 = vmul.f32 %v1085, %v1087
  %v1089 = vadd.f32 %v1085, %v1088
  %vm1090 = vweird.f32 %v1084
  %vm1091 = vweird.f32 %v1085
  %vm1092 = vmor %vm1090, %vm1091
  %v1093 = vsel %vm1092, %v1085, %v1089
  %v1094 = vand.u32 2147483647, %v1084
  %vm1095 = vcmp.eq.f32.partialorder %v1094, 8.507059e+37
  %v1096 = vand.u32 %v1084, 2147483648
  %v1097 = vor.u32 1.1754944e-38, %v1096
  %v1098 = vsel %vm1095, %v1097, %v1093
  %v1099 = vmul.f32 1.0, %v1098
  %v1100 = vmul.f32 %v1005, %v884
  %v1101 = vmul.f32 %v949, %v1043
  %v1102 = vadd.f32 %v1100, %v1101
  %v1103 = vtanh.pop %v1102
  %v1104 = vmul.f32 %v1099, %v1103
  %s1105 = scalar_lea.vmem %s2, 32
  %1106 = vst [vmem:[%s1105] sm:$0xff] %v1104
  %s1107 = scalar_lea.vmem %s0, 160
  %v1108 = vld [vmem:[%s1107] sm:$0xff]
  %v1109 = vld [vmem:[%s1107 + $0x8] sm:$0xff]
  %v1110 = vld [vmem:[%s1107 + $0x10] sm:$0xff]
  %v1111 = vld [vmem:[%s1107 + $0x18] sm:$0xff]
  %v1112 = vld [vmem:[%s1] sm:$0xff]
  %v1113 = vld [vmem:[%s1 + $0x20] sm:$0xff]
  %v1114 = vld [vmem:[%s1 + $0x40] sm:$0xff]
  %v1115 = vld [vmem:[%s1 + $0x60] sm:$0xff]
  %v1116 = vld [vmem:[%s1 + $0x80] sm:$0xff]
  %v1117 = vld [vmem:[%s1 + $0xa0] sm:$0xff]
  %v1118 = vld [vmem:[%s1 + $0xc0] sm:$0xff]
  %v1119 = vld [vmem:[%s1 + $0xe0] sm:$0xff]
  %v1120 = vld [vmem:[%s1 + $0x100] sm:$0xff]
  %v1121 = vld [vmem:[%s1 + $0x120] sm:$0xff]
  %v1122 = vld [vmem:[%s1 + $0x140] sm:$0xff]
  %v1123 = vld [vmem:[%s1 + $0x160] sm:$0xff]
  %v1124 = vld [vmem:[%s1 + $0x180] sm:$0xff]
  %v1125 = vld [vmem:[%s1 + $0x1a0] sm:$0xff]
  %v1126 = vld [vmem:[%s1 + $0x1c0] sm:$0xff]
  %v1127 = vld [vmem:[%s1 + $0x1e0] sm:$0xff]
  %1128 = vmatpush.msra.mxu0 %v1127
  %1129 = vmatpush.msra.mxu0 %v1126
  %1130 = vmatpush.msra.mxu0 %v1125
  %1131 = vmatpush.msra.mxu0 %v1124
  %1132 = vmatpush.msra.mxu0 %v1123
  %1133 = vmatpush.msra.mxu0 %v1122
  %1134 = vmatpush.msra.mxu0 %v1121
  %1135 = vmatpush.msra.mxu0 %v1120
  %1136 = vmatpush.msra.mxu0 %v1119
  %1137 = vmatpush.msra.mxu0 %v1118
  %1138 = vmatpush.msra.mxu0 %v1117
  %1139 = vmatpush.msra.mxu0 %v1116
  %1140 = vmatpush.msra.mxu0 %v1115
  %1141 = vmatpush.msra.mxu0 %v1114
  %1142 = vmatpush.msra.mxu0 %v1113
  %1143 = vmatpush.msra.mxu0 %v1112
  %1144 = vmatmul.f32.gmra.mxu0 %v1104
  %v1145 = vpop.f32.mrf.mxu0
  %v1146 = vadd.f32 0.0, %v1145
  %1147 = vdwg.mxu0
  %v1148 = vadd.f32 %v1108, %v1146
  %v1149 = vxor.u32 %v1148, 2147483648
  %v1150 = vmul.f32 %v1149, 1.442695
  %v1151 = vpow.pop %v1150
  %v1152 = vadd.f32 %v1151, 1.0
  %v1153 = vrcp.pop %v1152
  %v1154 = vmul.f32 %v1152, %v1153
  %v1155 = vsub.f32 1.0, %v1154
  %v1156 = vmul.f32 %v1153, %v1155
  %v1157 = vadd.f32 %v1153, %v1156
  %vm1158 = vweird.f32 %v1152
  %vm1159 = vweird.f32 %v1153
  %vm1160 = vmor %vm1158, %vm1159
  %v1161 = vsel %vm1160, %v1153, %v1157
  %v1162 = vand.u32 2147483647, %v1152
  %vm1163 = vcmp.eq.f32.partialorder %v1162, 8.507059e+37
  %v1164 = vand.u32 %v1152, 2147483648
  %v1165 = vor.u32 1.1754944e-38, %v1164
  %v1166 = vsel %vm1163, %v1165, %v1161
  %v1167 = vmul.f32 1.0, %v1166
  %v1168 = vld [vmem:[%s1 + $0x8] sm:$0xff]
  %v1169 = vld [vmem:[%s1 + $0x28] sm:$0xff]
  %v1170 = vld [vmem:[%s1 + $0x48] sm:$0xff]
  %v1171 = vld [vmem:[%s1 + $0x68] sm:$0xff]
  %v1172 = vld [vmem:[%s1 + $0x88] sm:$0xff]
  %v1173 = vld [vmem:[%s1 + $0xa8] sm:$0xff]
  %v1174 = vld [vmem:[%s1 + $0xc8] sm:$0xff]
  %v1175 = vld [vmem:[%s1 + $0xe8] sm:$0xff]
  %v1176 = vld [vmem:[%s1 + $0x108] sm:$0xff]
  %v1177 = vld [vmem:[%s1 + $0x128] sm:$0xff]
  %v1178 = vld [vmem:[%s1 + $0x148] sm:$0xff]
  %v1179 = vld [vmem:[%s1 + $0x168] sm:$0xff]
  %v1180 = vld [vmem:[%s1 + $0x188] sm:$0xff]
  %v1181 = vld [vmem:[%s1 + $0x1a8] sm:$0xff]
  %v1182 = vld [vmem:[%s1 + $0x1c8] sm:$0xff]
  %v1183 = vld [vmem:[%s1 + $0x1e8] sm:$0xff]
  %1184 = vmatpush.msra.mxu0 %v1183
  %1185 = vmatpush.msra.mxu0 %v1182
  %1186 = vmatpush.msra.mxu0 %v1181
  %1187 = vmatpush.msra.mxu0 %v1180
  %1188 = vmatpush.msra.mxu0 %v1179
  %1189 = vmatpush.msra.mxu0 %v1178
  %1190 = vmatpush.msra.mxu0 %v1177
  %1191 = vmatpush.msra.mxu0 %v1176
  %1192 = vmatpush.msra.mxu0 %v1175
  %1193 = vmatpush.msra.mxu0 %v1174
  %1194 = vmatpush.msra.mxu0 %v1173
  %1195 = vmatpush.msra.mxu0 %v1172
  %1196 = vmatpush.msra.mxu0 %v1171
  %1197 = vmatpush.msra.mxu0 %v1170
  %1198 = vmatpush.msra.mxu0 %v1169
  %1199 = vmatpush.msra.mxu0 %v1168
  %1200 = vmatmul.f32.gmra.mxu0 %v1104
  %v1201 = vpop.f32.mrf.mxu0
  %v1202 = vadd.f32 0.0, %v1201
  %1203 = vdwg.mxu0
  %v1204 = vadd.f32 %v1109, %v1202
  %v1205 = vxor.u32 %v1204, 2147483648
  %v1206 = vmul.f32 %v1205, 1.442695
  %v1207 = vpow.pop %v1206
  %v1208 = vadd.f32 %v1207, 1.0
  %v1209 = vrcp.pop %v1208
  %v1210 = vmul.f32 %v1208, %v1209
  %v1211 = vsub.f32 1.0, %v1210
  %v1212 = vmul.f32 %v1209, %v1211
  %v1213 = vadd.f32 %v1209, %v1212
  %vm1214 = vweird.f32 %v1208
  %vm1215 = vweird.f32 %v1209
  %vm1216 = vmor %vm1214, %vm1215
  %v1217 = vsel %vm1216, %v1209, %v1213
  %v1218 = vand.u32 2147483647, %v1208
  %vm1219 = vcmp.eq.f32.partialorder %v1218, 8.507059e+37
  %v1220 = vand.u32 %v1208, 2147483648
  %v1221 = vor.u32 1.1754944e-38, %v1220
  %v1222 = vsel %vm1219, %v1221, %v1217
  %v1223 = vmul.f32 1.0, %v1222
  %v1224 = vld [vmem:[%s1 + $0x10] sm:$0xff]
  %v1225 = vld [vmem:[%s1 + $0x30] sm:$0xff]
  %v1226 = vld [vmem:[%s1 + $0x50] sm:$0xff]
  %v1227 = vld [vmem:[%s1 + $0x70] sm:$0xff]
  %v1228 = vld [vmem:[%s1 + $0x90] sm:$0xff]
  %v1229 = vld [vmem:[%s1 + $0xb0] sm:$0xff]
  %v1230 = vld [vmem:[%s1 + $0xd0] sm:$0xff]
  %v1231 = vld [vmem:[%s1 + $0xf0] sm:$0xff]
  %v1232 = vld [vmem:[%s1 + $0x110] sm:$0xff]
  %v1233 = vld [vmem:[%s1 + $0x130] sm:$0xff]
  %v1234 = vld [vmem:[%s1 + $0x150] sm:$0xff]
  %v1235 = vld [vmem:[%s1 + $0x170] sm:$0xff]
  %v1236 = vld [vmem:[%s1 + $0x190] sm:$0xff]
  %v1237 = vld [vmem:[%s1 + $0x1b0] sm:$0xff]
  %v1238 = vld [vmem:[%s1 + $0x1d0] sm:$0xff]
  %v1239 = vld [vmem:[%s1 + $0x1f0] sm:$0xff]
  %1240 = vmatpush.msra.mxu0 %v1239
  %1241 = vmatpush.msra.mxu0 %v1238
  %1242 = vmatpush.msra.mxu0 %v1237
  %1243 = vmatpush.msra.mxu0 %v1236
  %1244 = vmatpush.msra.mxu0 %v1235
  %1245 = vmatpush.msra.mxu0 %v1234
  %1246 = vmatpush.msra.mxu0 %v1233
  %1247 = vmatpush.msra.mxu0 %v1232
  %1248 = vmatpush.msra.mxu0 %v1231
  %1249 = vmatpush.msra.mxu0 %v1230
  %1250 = vmatpush.msra.mxu0 %v1229
  %1251 = vmatpush.msra.mxu0 %v1228
  %1252 = vmatpush.msra.mxu0 %v1227
  %1253 = vmatpush.msra.mxu0 %v1226
  %1254 = vmatpush.msra.mxu0 %v1225
  %1255 = vmatpush.msra.mxu0 %v1224
  %1256 = vmatmul.f32.gmra.mxu0 %v1104
  %v1257 = vpop.f32.mrf.mxu0
  %v1258 = vadd.f32 0.0, %v1257
  %1259 = vdwg.mxu0
  %v1260 = vadd.f32 %v1110, %v1258
  %v1261 = vtanh.pop %v1260
  %v1262 = vld [vmem:[%s1 + $0x18] sm:$0xff]
  %v1263 = vld [vmem:[%s1 + $0x38] sm:$0xff]
  %v1264 = vld [vmem:[%s1 + $0x58] sm:$0xff]
  %v1265 = vld [vmem:[%s1 + $0x78] sm:$0xff]
  %v1266 = vld [vmem:[%s1 + $0x98] sm:$0xff]
  %v1267 = vld [vmem:[%s1 + $0xb8] sm:$0xff]
  %v1268 = vld [vmem:[%s1 + $0xd8] sm:$0xff]
  %v1269 = vld [vmem:[%s1 + $0xf8] sm:$0xff]
  %v1270 = vld [vmem:[%s1 + $0x118] sm:$0xff]
  %v1271 = vld [vmem:[%s1 + $0x138] sm:$0xff]
  %v1272 = vld [vmem:[%s1 + $0x158] sm:$0xff]
  %v1273 = vld [vmem:[%s1 + $0x178] sm:$0xff]
  %v1274 = vld [vmem:[%s1 + $0x198] sm:$0xff]
  %v1275 = vld [vmem:[%s1 + $0x1b8] sm:$0xff]
  %v1276 = vld [vmem:[%s1 + $0x1d8] sm:$0xff]
  %v1277 = vld [vmem:[%s1 + $0x1f8] sm:$0xff]
  %1278 = vmatpush.msra.mxu0 %v1277
  %1279 = vmatpush.msra.mxu0 %v1276
  %1280 = vmatpush.msra.mxu0 %v1275
  %1281 = vmatpush.msra.mxu0 %v1274
  %1282 = vmatpush.msra.mxu0 %v1273
  %1283 = vmatpush.msra.mxu0 %v1272
  %1284 = vmatpush.msra.mxu0 %v1271
  %1285 = vmatpush.msra.mxu0 %v1270
  %1286 = vmatpush.msra.mxu0 %v1269
  %1287 = vmatpush.msra.mxu0 %v1268
  %1288 = vmatpush.msra.mxu0 %v1267
  %1289 = vmatpush.msra.mxu0 %v1266
  %1290 = vmatpush.msra.mxu0 %v1265
  %1291 = vmatpush.msra.mxu0 %v1264
  %1292 = vmatpush.msra.mxu0 %v1263
  %1293 = vmatpush.msra.mxu0 %v1262
  %1294 = vmatmul.f32.gmra.mxu0 %v1104
  %v1295 = vpop.f32.mrf.mxu0
  %v1296 = vadd.f32 0.0, %v1295
  %1297 = vdwg.mxu0
  %v1298 = vadd.f32 %v1111, %v1296
  %v1299 = vxor.u32 %v1298, 2147483648
  %v1300 = vmul.f32 %v1299, 1.442695
  %v1301 = vpow.pop %v1300
  %v1302 = vadd.f32 %v1301, 1.0
  %v1303 = vrcp.pop %v1302
  %v1304 = vmul.f32 %v1302, %v1303
  %v1305 = vsub.f32 1.0, %v1304
  %v1306 = vmul.f32 %v1303, %v1305
  %v1307 = vadd.f32 %v1303, %v1306
  %vm1308 = vweird.f32 %v1302
  %vm1309 = vweird.f32 %v1303
  %vm1310 = vmor %vm1308, %vm1309
  %v1311 = vsel %vm1310, %v1303, %v1307
  %v1312 = vand.u32 2147483647, %v1302
  %vm1313 = vcmp.eq.f32.partialorder %v1312, 8.507059e+37
  %v1314 = vand.u32 %v1302, 2147483648
  %v1315 = vor.u32 1.1754944e-38, %v1314
  %v1316 = vsel %vm1313, %v1315, %v1311
  %v1317 = vmul.f32 1.0, %v1316
  %v1318 = vmul.f32 %v1223, %v1102
  %v1319 = vmul.f32 %v1167, %v1261
  %v1320 = vadd.f32 %v1318, %v1319
  %v1321 = vtanh.pop %v1320
  %v1322 = vmul.f32 %v1317, %v1321
  %s1323 = scalar_lea.vmem %s2, 40
  %1324 = vst [vmem:[%s1323] sm:$0xff] %v1322
  %s1325 = scalar_lea.vmem %s0, 192
  %v1326 = vld [vmem:[%s1325] sm:$0xff]
  %v1327 = vld [vmem:[%s1325 + $0x8] sm:$0xff]
  %v1328 = vld [vmem:[%s1325 + $0x10] sm:$0xff]
  %v1329 = vld [vmem:[%s1325 + $0x18] sm:$0xff]
  %v1330 = vld [vmem:[%s1] sm:$0xff]
  %v1331 = vld [vmem:[%s1 + $0x20] sm:$0xff]
  %v1332 = vld [vmem:[%s1 + $0x40] sm:$0xff]
  %v1333 = vld [vmem:[%s1 + $0x60] sm:$0xff]
  %v1334 = vld [vmem:[%s1 + $0x80] sm:$0xff]
  %v1335 = vld [vmem:[%s1 + $0xa0] sm:$0xff]
  %v1336 = vld [vmem:[%s1 + $0xc0] sm:$0xff]
  %v1337 = vld [vmem:[%s1 + $0xe0] sm:$0xff]
  %v1338 = vld [vmem:[%s1 + $0x100] sm:$0xff]
  %v1339 = vld [vmem:[%s1 + $0x120] sm:$0xff]
  %v1340 = vld [vmem:[%s1 + $0x140] sm:$0xff]
  %v1341 = vld [vmem:[%s1 + $0x160] sm:$0xff]
  %v1342 = vld [vmem:[%s1 + $0x180] sm:$0xff]
  %v1343 = vld [vmem:[%s1 + $0x1a0] sm:$0xff]
  %v1344 = vld [vmem:[%s1 + $0x1c0] sm:$0xff]
  %v1345 = vld [vmem:[%s1 + $0x1e0] sm:$0xff]
  %1346 = vmatpush.msra.mxu0 %v1345
  %1347 = vmatpush.msra.mxu0 %v1344
  %1348 = vmatpush.msra.mxu0 %v1343
  %1349 = vmatpush.msra.mxu0 %v1342
  %1350 = vmatpush.msra.mxu0 %v1341
  %1351 = vmatpush.msra.mxu0 %v1340
  %1352 = vmatpush.msra.mxu0 %v1339
  %1353 = vmatpush.msra.mxu0 %v1338
  %1354 = vmatpush.msra.mxu0 %v1337
  %1355 = vmatpush.msra.mxu0 %v1336
  %1356 = vmatpush.msra.mxu0 %v1335
  %1357 = vmatpush.msra.mxu0 %v1334
  %1358 = vmatpush.msra.mxu0 %v1333
  %1359 = vmatpush.msra.mxu0 %v1332
  %1360 = vmatpush.msra.mxu0 %v1331
  %1361 = vmatpush.msra.mxu0 %v1330
  %1362 = vmatmul.f32.gmra.mxu0 %v1322
  %v1363 = vpop.f32.mrf.mxu0
  %v1364 = vadd.f32 0.0, %v1363
  %1365 = vdwg.mxu0
  %v1366 = vadd.f32 %v1326, %v1364
  %v1367 = vxor.u32 %v1366, 2147483648
  %v1368 = vmul.f32 %v1367, 1.442695
  %v1369 = vpow.pop %v1368
  %v1370 = vadd.f32 %v1369, 1.0
  %v1371 = vrcp.pop %v1370
  %v1372 = vmul.f32 %v1370, %v1371
  %v1373 = vsub.f32 1.0, %v1372
  %v1374 = vmul.f32 %v1371, %v1373
  %v1375 = vadd.f32 %v1371, %v1374
  %vm1376 = vweird.f32 %v1370
  %vm1377 = vweird.f32 %v1371
  %vm1378 = vmor %vm1376, %vm1377
  %v1379 = vsel %vm1378, %v1371, %v1375
  %v1380 = vand.u32 2147483647, %v1370
  %vm1381 = vcmp.eq.f32.partialorder %v1380, 8.507059e+37
  %v1382 = vand.u32 %v1370, 2147483648
  %v1383 = vor.u32 1.1754944e-38, %v1382
  %v1384 = vsel %vm1381, %v1383, %v1379
  %v1385 = vmul.f32 1.0, %v1384
  %v1386 = vld [vmem:[%s1 + $0x8] sm:$0xff]
  %v1387 = vld [vmem:[%s1 + $0x28] sm:$0xff]
  %v1388 = vld [vmem:[%s1 + $0x48] sm:$0xff]
  %v1389 = vld [vmem:[%s1 + $0x68] sm:$0xff]
  %v1390 = vld [vmem:[%s1 + $0x88] sm:$0xff]
  %v1391 = vld [vmem:[%s1 + $0xa8] sm:$0xff]
  %v1392 = vld [vmem:[%s1 + $0xc8] sm:$0xff]
  %v1393 = vld [vmem:[%s1 + $0xe8] sm:$0xff]
  %v1394 = vld [vmem:[%s1 + $0x108] sm:$0xff]
  %v1395 = vld [vmem:[%s1 + $0x128] sm:$0xff]
  %v1396 = vld [vmem:[%s1 + $0x148] sm:$0xff]
  %v1397 = vld [vmem:[%s1 + $0x168] sm:$0xff]
  %v1398 = vld [vmem:[%s1 + $0x188] sm:$0xff]
  %v1399 = vld [vmem:[%s1 + $0x1a8] sm:$0xff]
  %v1400 = vld [vmem:[%s1 + $0x1c8] sm:$0xff]
  %v1401 = vld [vmem:[%s1 + $0x1e8] sm:$0xff]
  %1402 = vmatpush.msra.mxu0 %v1401
  %1403 = vmatpush.msra.mxu0 %v1400
  %1404 = vmatpush.msra.mxu0 %v1399
  %1405 = vmatpush.msra.mxu0 %v1398
  %1406 = vmatpush.msra.mxu0 %v1397
  %1407 = vmatpush.msra.mxu0 %v1396
  %1408 = vmatpush.msra.mxu0 %v1395
  %1409 = vmatpush.msra.mxu0 %v1394
  %1410 = vmatpush.msra.mxu0 %v1393
  %1411 = vmatpush.msra.mxu0 %v1392
  %1412 = vmatpush.msra.mxu0 %v1391
  %1413 = vmatpush.msra.mxu0 %v1390
  %1414 = vmatpush.msra.mxu0 %v1389
  %1415 = vmatpush.msra.mxu0 %v1388
  %1416 = vmatpush.msra.mxu0 %v1387
  %1417 = vmatpush.msra.mxu0 %v1386
  %1418 = vmatmul.f32.gmra.mxu0 %v1322
  %v1419 = vpop.f32.mrf.mxu0
  %v1420 = vadd.f32 0.0, %v1419
  %1421 = vdwg.mxu0
  %v1422 = vadd.f32 %v1327, %v1420
  %v1423 = vxor.u32 %v1422, 2147483648
  %v1424 = vmul.f32 %v1423, 1.442695
  %v1425 = vpow.pop %v1424
  %v1426 = vadd.f32 %v1425, 1.0
  %v1427 = vrcp.pop %v1426
  %v1428 = vmul.f32 %v1426, %v1427
  %v1429 = vsub.f32 1.0, %v1428
  %v1430 = vmul.f32 %v1427, %v1429
  %v1431 = vadd.f32 %v1427, %v1430
  %vm1432 = vweird.f32 %v1426
  %vm1433 = vweird.f32 %v1427
  %vm1434 = vmor %vm1432, %vm1433
  %v1435 = vsel %vm1434, %v1427, %v1431
  %v1436 = vand.u32 2147483647, %v1426
  %vm1437 = vcmp.eq.f32.partialorder %v1436, 8.507059e+37
  %v1438 = vand.u32 %v1426, 2147483648
  %v1439 = vor.u32 1.1754944e-38, %v1438
  %v1440 = vsel %vm1437, %v1439, %v1435
  %v1441 = vmul.f32 1.0, %v1440
  %v1442 = vld [vmem:[%s1 + $0x10] sm:$0xff]
  %v1443 = vld [vmem:[%s1 + $0x30] sm:$0xff]
  %v1444 = vld [vmem:[%s1 + $0x50] sm:$0xff]
  %v1445 = vld [vmem:[%s1 + $0x70] sm:$0xff]
  %v1446 = vld [vmem:[%s1 + $0x90] sm:$0xff]
  %v1447 = vld [vmem:[%s1 + $0xb0] sm:$0xff]
  %v1448 = vld [vmem:[%s1 + $0xd0] sm:$0xff]
  %v1449 = vld [vmem:[%s1 + $0xf0] sm:$0xff]
  %v1450 = vld [vmem:[%s1 + $0x110] sm:$0xff]
  %v1451 = vld [vmem:[%s1 + $0x130] sm:$0xff]
  %v1452 = vld [vmem:[%s1 + $0x150] sm:$0xff]
  %v1453 = vld [vmem:[%s1 + $0x170] sm:$0xff]
  %v1454 = vld [vmem:[%s1 + $0x190] sm:$0xff]
  %v1455 = vld [vmem:[%s1 + $0x1b0] sm:$0xff]
  %v1456 = vld [vmem:[%s1 + $0x1d0] sm:$0xff]
  %v1457 = vld [vmem:[%s1 + $0x1f0] sm:$0xff]
  %1458 = vmatpush.msra.mxu0 %v1457
  %1459 = vmatpush.msra.mxu0 %v1456
  %1460 = vmatpush.msra.mxu0 %v1455
  %1461 = vmatpush.msra.mxu0 %v1454
  %1462 = vmatpush.msra.mxu0 %v1453
  %1463 = vmatpush.msra.mxu0 %v1452
  %1464 = vmatpush.msra.mxu0 %v1451
  %1465 = vmatpush.msra.mxu0 %v1450
  %1466 = vmatpush.msra.mxu0 %v1449
  %1467 = vmatpush.msra.mxu0 %v1448
  %1468 = vmatpush.msra.mxu0 %v1447
  %1469 = vmatpush.msra.mxu0 %v1446
  %1470 = vmatpush.msra.mxu0 %v1445
  %1471 = vmatpush.msra.mxu0 %v1444
  %1472 = vmatpush.msra.mxu0 %v1443
  %1473 = vmatpush.msra.mxu0 %v1442
  %1474 = vmatmul.f32.gmra.mxu0 %v1322
  %v1475 = vpop.f32.mrf.mxu0
  %v1476 = vadd.f32 0.0, %v1475
  %1477 = vdwg.mxu0
  %v1478 = vadd.f32 %v1328, %v1476
  %v1479 = vtanh.pop %v1478
  %v1480 = vld [vmem:[%s1 + $0x18] sm:$0xff]
  %v1481 = vld [vmem:[%s1 + $0x38] sm:$0xff]
  %v1482 = vld [vmem:[%s1 + $0x58] sm:$0xff]
  %v1483 = vld [vmem:[%s1 + $0x78] sm:$0xff]
  %v1484 = vld [vmem:[%s1 + $0x98] sm:$0xff]
  %v1485 = vld [vmem:[%s1 + $0xb8] sm:$0xff]
  %v1486 = vld [vmem:[%s1 + $0xd8] sm:$0xff]
  %v1487 = vld [vmem:[%s1 + $0xf8] sm:$0xff]
  %v1488 = vld [vmem:[%s1 + $0x118] sm:$0xff]
  %v1489 = vld [vmem:[%s1 + $0x138] sm:$0xff]
  %v1490 = vld [vmem:[%s1 + $0x158] sm:$0xff]
  %v1491 = vld [vmem:[%s1 + $0x178] sm:$0xff]
  %v1492 = vld [vmem:[%s1 + $0x198] sm:$0xff]
  %v1493 = vld [vmem:[%s1 + $0x1b8] sm:$0xff]
  %v1494 = vld [vmem:[%s1 + $0x1d8] sm:$0xff]
  %v1495 = vld [vmem:[%s1 + $0x1f8] sm:$0xff]
  %1496 = vmatpush.msra.mxu0 %v1495
  %1497 = vmatpush.msra.mxu0 %v1494
  %1498 = vmatpush.msra.mxu0 %v1493
  %1499 = vmatpush.msra.mxu0 %v1492
  %1500 = vmatpush.msra.mxu0 %v1491
  %1501 = vmatpush.msra.mxu0 %v1490
  %1502 = vmatpush.msra.mxu0 %v1489
  %1503 = vmatpush.msra.mxu0 %v1488
  %1504 = vmatpush.msra.mxu0 %v1487
  %1505 = vmatpush.msra.mxu0 %v1486
  %1506 = vmatpush.msra.mxu0 %v1485
  %1507 = vmatpush.msra.mxu0 %v1484
  %1508 = vmatpush.msra.mxu0 %v1483
  %1509 = vmatpush.msra.mxu0 %v1482
  %1510 = vmatpush.msra.mxu0 %v1481
  %1511 = vmatpush.msra.mxu0 %v1480
  %1512 = vmatmul.f32.gmra.mxu0 %v1322
  %v1513 = vpop.f32.mrf.mxu0
  %v1514 = vadd.f32 0.0, %v1513
  %1515 = vdwg.mxu0
  %v1516 = vadd.f32 %v1329, %v1514
  %v1517 = vxor.u32 %v1516, 2147483648
  %v1518 = vmul.f32 %v1517, 1.442695
  %v1519 = vpow.pop %v1518
  %v1520 = vadd.f32 %v1519, 1.0
  %v1521 = vrcp.pop %v1520
  %v1522 = vmul.f32 %v1520, %v1521
  %v1523 = vsub.f32 1.0, %v1522
  %v1524 = vmul.f32 %v1521, %v1523
  %v1525 = vadd.f32 %v1521, %v1524
  %vm1526 = vweird.f32 %v1520
  %vm1527 = vweird.f32 %v1521
  %vm1528 = vmor %vm1526, %vm1527
  %v1529 = vsel %vm1528, %v1521, %v1525
  %v1530 = vand.u32 2147483647, %v1520
  %vm1531 = vcmp.eq.f32.partialorder %v1530, 8.507059e+37
  %v1532 = vand.u32 %v1520, 2147483648
  %v1533 = vor.u32 1.1754944e-38, %v1532
  %v1534 = vsel %vm1531, %v1533, %v1529
  %v1535 = vmul.f32 1.0, %v1534
  %v1536 = vmul.f32 %v1441, %v1320
  %v1537 = vmul.f32 %v1385, %v1479
  %v1538 = vadd.f32 %v1536, %v1537
  %v1539 = vtanh.pop %v1538
  %v1540 = vmul.f32 %v1535, %v1539
  %s1541 = scalar_lea.vmem %s2, 48
  %1542 = vst [vmem:[%s1541] sm:$0xff] %v1540
  %s1543 = scalar_lea.vmem %s0, 224
  %v1544 = vld [vmem:[%s1543] sm:$0xff]
  %v1545 = vld [vmem:[%s1543 + $0x8] sm:$0xff]
  %v1546 = vld [vmem:[%s1543 + $0x10] sm:$0xff]
  %v1547 = vld [vmem:[%s1543 + $0x18] sm:$0xff]
  %v1548 = vld [vmem:[%s1] sm:$0xff]
  %v1549 = vld [vmem:[%s1 + $0x20] sm:$0xff]
  %v1550 = vld [vmem:[%s1 + $0x40] sm:$0xff]
  %v1551 = vld [vmem:[%s1 + $0x60] sm:$0xff]
  %v1552 = vld [vmem:[%s1 + $0x80] sm:$0xff]
  %v1553 = vld [vmem:[%s1 + $0xa0] sm:$0xff]
  %v1554 = vld [vmem:[%s1 + $0xc0] sm:$0xff]
  %v1555 = vld [vmem:[%s1 + $0xe0] sm:$0xff]
  %v1556 = vld [vmem:[%s1 + $0x100] sm:$0xff]
  %v1557 = vld [vmem:[%s1 + $0x120] sm:$0xff]
  %v1558 = vld [vmem:[%s1 + $0x140] sm:$0xff]
  %v1559 = vld [vmem:[%s1 + $0x160] sm:$0xff]
  %v1560 = vld [vmem:[%s1 + $0x180] sm:$0xff]
  %v1561 = vld [vmem:[%s1 + $0x1a0] sm:$0xff]
  %v1562 = vld [vmem:[%s1 + $0x1c0] sm:$0xff]
  %v1563 = vld [vmem:[%s1 + $0x1e0] sm:$0xff]
  %1564 = vmatpush.msra.mxu0 %v1563
  %1565 = vmatpush.msra.mxu0 %v1562
  %1566 = vmatpush.msra.mxu0 %v1561
  %1567 = vmatpush.msra.mxu0 %v1560
  %1568 = vmatpush.msra.mxu0 %v1559
  %1569 = vmatpush.msra.mxu0 %v1558
  %1570 = vmatpush.msra.mxu0 %v1557
  %1571 = vmatpush.msra.mxu0 %v1556
  %1572 = vmatpush.msra.mxu0 %v1555
  %1573 = vmatpush.msra.mxu0 %v1554
  %1574 = vmatpush.msra.mxu0 %v1553
  %1575 = vmatpush.msra.mxu0 %v1552
  %1576 = vmatpush.msra.mxu0 %v1551
  %1577 = vmatpush.msra.mxu0 %v1550
  %1578 = vmatpush.msra.mxu0 %v1549
  %1579 = vmatpush.msra.mxu0 %v1548
  %1580 = vmatmul.f32.gmra.mxu0 %v1540
  %v1581 = vpop.f32.mrf.mxu0
  %v1582 = vadd.f32 0.0, %v1581
  %1583 = vdwg.mxu0
  %v1584 = vadd.f32 %v1544, %v1582
  %v1585 = vxor.u32 %v1584, 2147483648
  %v1586 = vmul.f32 %v1585, 1.442695
  %v1587 = vpow.pop %v1586
  %v1588 = vadd.f32 %v1587, 1.0
  %v1589 = vrcp.pop %v1588
  %v1590 = vmul.f32 %v1588, %v1589
  %v1591 = vsub.f32 1.0, %v1590
  %v1592 = vmul.f32 %v1589, %v1591
  %v1593 = vadd.f32 %v1589, %v1592
  %vm1594 = vweird.f32 %v1588
  %vm1595 = vweird.f32 %v1589
  %vm1596 = vmor %vm1594, %vm1595
  %v1597 = vsel %vm1596, %v1589, %v1593
  %v1598 = vand.u32 2147483647, %v1588
  %vm1599 = vcmp.eq.f32.partialorder %v1598, 8.507059e+37
  %v1600 = vand.u32 %v1588, 2147483648
  %v1601 = vor.u32 1.1754944e-38, %v1600
  %v1602 = vsel %vm1599, %v1601, %v1597
  %v1603 = vmul.f32 1.0, %v1602
  %v1604 = vld [vmem:[%s1 + $0x8] sm:$0xff]
  %v1605 = vld [vmem:[%s1 + $0x28] sm:$0xff]
  %v1606 = vld [vmem:[%s1 + $0x48] sm:$0xff]
  %v1607 = vld [vmem:[%s1 + $0x68] sm:$0xff]
  %v1608 = vld [vmem:[%s1 + $0x88] sm:$0xff]
  %v1609 = vld [vmem:[%s1 + $0xa8] sm:$0xff]
  %v1610 = vld [vmem:[%s1 + $0xc8] sm:$0xff]
  %v1611 = vld [vmem:[%s1 + $0xe8] sm:$0xff]
  %v1612 = vld [vmem:[%s1 + $0x108] sm:$0xff]
  %v1613 = vld [vmem:[%s1 + $0x128] sm:$0xff]
  %v1614 = vld [vmem:[%s1 + $0x148] sm:$0xff]
  %v1615 = vld [vmem:[%s1 + $0x168] sm:$0xff]
  %v1616 = vld [vmem:[%s1 + $0x188] sm:$0xff]
  %v1617 = vld [vmem:[%s1 + $0x1a8] sm:$0xff]
  %v1618 = vld [vmem:[%s1 + $0x1c8] sm:$0xff]
  %v1619 = vld [vmem:[%s1 + $0x1e8] sm:$0xff]
  %1620 = vmatpush.msra.mxu0 %v1619
  %1621 = vmatpush.msra.mxu0 %v1618
  %1622 = vmatpush.msra.mxu0 %v1617
  %1623 = vmatpush.msra.mxu0 %v1616
  %1624 = vmatpush.msra.mxu0 %v1615
  %1625 = vmatpush.msra.mxu0 %v1614
  %1626 = vmatpush.msra.mxu0 %v1613
  %1627 = vmatpush.msra.mxu0 %v1612
  %1628 = vmatpush.msra.mxu0 %v1611
  %1629 = vmatpush.msra.mxu0 %v1610
  %1630 = vmatpush.msra.mxu0 %v1609
  %1631 = vmatpush.msra.mxu0 %v1608
  %1632 = vmatpush.msra.mxu0 %v1607
  %1633 = vmatpush.msra.mxu0 %v1606
  %1634 = vmatpush.msra.mxu0 %v1605
  %1635 = vmatpush.msra.mxu0 %v1604
  %1636 = vmatmul.f32.gmra.mxu0 %v1540
  %v1637 = vpop.f32.mrf.mxu0
  %v1638 = vadd.f32 0.0, %v1637
  %1639 = vdwg.mxu0
  %v1640 = vadd.f32 %v1545, %v1638
  %v1641 = vxor.u32 %v1640, 2147483648
  %v1642 = vmul.f32 %v1641, 1.442695
  %v1643 = vpow.pop %v1642
  %v1644 = vadd.f32 %v1643, 1.0
  %v1645 = vrcp.pop %v1644
  %v1646 = vmul.f32 %v1644, %v1645
  %v1647 = vsub.f32 1.0, %v1646
  %v1648 = vmul.f32 %v1645, %v1647
  %v1649 = vadd.f32 %v1645, %v1648
  %vm1650 = vweird.f32 %v1644
  %vm1651 = vweird.f32 %v1645
  %vm1652 = vmor %vm1650, %vm1651
  %v1653 = vsel %vm1652, %v1645, %v1649
  %v1654 = vand.u32 2147483647, %v1644
  %vm1655 = vcmp.eq.f32.partialorder %v1654, 8.507059e+37
  %v1656 = vand.u32 %v1644, 2147483648
  %v1657 = vor.u32 1.1754944e-38, %v1656
  %v1658 = vsel %vm1655, %v1657, %v1653
  %v1659 = vmul.f32 1.0, %v1658
  %v1660 = vld [vmem:[%s1 + $0x10] sm:$0xff]
  %v1661 = vld [vmem:[%s1 + $0x30] sm:$0xff]
  %v1662 = vld [vmem:[%s1 + $0x50] sm:$0xff]
  %v1663 = vld [vmem:[%s1 + $0x70] sm:$0xff]
  %v1664 = vld [vmem:[%s1 + $0x90] sm:$0xff]
  %v1665 = vld [vmem:[%s1 + $0xb0] sm:$0xff]
  %v1666 = vld [vmem:[%s1 + $0xd0] sm:$0xff]
  %v1667 = vld [vmem:[%s1 + $0xf0] sm:$0xff]
  %v1668 = vld [vmem:[%s1 + $0x110] sm:$0xff]
  %v1669 = vld [vmem:[%s1 + $0x130] sm:$0xff]
  %v1670 = vld [vmem:[%s1 + $0x150] sm:$0xff]
  %v1671 = vld [vmem:[%s1 + $0x170] sm:$0xff]
  %v1672 = vld [vmem:[%s1 + $0x190] sm:$0xff]
  %v1673 = vld [vmem:[%s1 + $0x1b0] sm:$0xff]
  %v1674 = vld [vmem:[%s1 + $0x1d0] sm:$0xff]
  %v1675 = vld [vmem:[%s1 + $0x1f0] sm:$0xff]
  %1676 = vmatpush.msra.mxu0 %v1675
  %1677 = vmatpush.msra.mxu0 %v1674
  %1678 = vmatpush.msra.mxu0 %v1673
  %1679 = vmatpush.msra.mxu0 %v1672
  %1680 = vmatpush.msra.mxu0 %v1671
  %1681 = vmatpush.msra.mxu0 %v1670
  %1682 = vmatpush.msra.mxu0 %v1669
  %1683 = vmatpush.msra.mxu0 %v1668
  %1684 = vmatpush.msra.mxu0 %v1667
  %1685 = vmatpush.msra.mxu0 %v1666
  %1686 = vmatpush.msra.mxu0 %v1665
  %1687 = vmatpush.msra.mxu0 %v1664
  %1688 = vmatpush.msra.mxu0 %v1663
  %1689 = vmatpush.msra.mxu0 %v1662
  %1690 = vmatpush.msra.mxu0 %v1661
  %1691 = vmatpush.msra.mxu0 %v1660
  %1692 = vmatmul.f32.gmra.mxu0 %v1540
  %v1693 = vpop.f32.mrf.mxu0
  %v1694 = vadd.f32 0.0, %v1693
  %1695 = vdwg.mxu0
  %v1696 = vadd.f32 %v1546, %v1694
  %v1697 = vtanh.pop %v1696
  %v1698 = vld [vmem:[%s1 + $0x18] sm:$0xff]
  %v1699 = vld [vmem:[%s1 + $0x38] sm:$0xff]
  %v1700 = vld [vmem:[%s1 + $0x58] sm:$0xff]
  %v1701 = vld [vmem:[%s1 + $0x78] sm:$0xff]
  %v1702 = vld [vmem:[%s1 + $0x98] sm:$0xff]
  %v1703 = vld [vmem:[%s1 + $0xb8] sm:$0xff]
  %v1704 = vld [vmem:[%s1 + $0xd8] sm:$0xff]
  %v1705 = vld [vmem:[%s1 + $0xf8] sm:$0xff]
  %v1706 = vld [vmem:[%s1 + $0x118] sm:$0xff]
  %v1707 = vld [vmem:[%s1 + $0x138] sm:$0xff]
  %v1708 = vld [vmem:[%s1 + $0x158] sm:$0xff]
  %v1709 = vld [vmem:[%s1 + $0x178] sm:$0xff]
  %v1710 = vld [vmem:[%s1 + $0x198] sm:$0xff]
  %v1711 = vld [vmem:[%s1 + $0x1b8] sm:$0xff]
  %v1712 = vld [vmem:[%s1 + $0x1d8] sm:$0xff]
  %v1713 = vld [vmem:[%s1 + $0x1f8] sm:$0xff]
  %1714 = vmatpush.msra.mxu0 %v1713
  %1715 = vmatpush.msra.mxu0 %v1712
  %1716 = vmatpush.msra.mxu0 %v1711
  %1717 = vmatpush.msra.mxu0 %v1710
  %1718 = vmatpush.msra.mxu0 %v1709
  %1719 = vmatpush.msra.mxu0 %v1708
  %1720 = vmatpush.msra.mxu0 %v1707
  %1721 = vmatpush.msra.mxu0 %v1706
  %1722 = vmatpush.msra.mxu0 %v1705
  %1723 = vmatpush.msra.mxu0 %v1704
  %1724 = vmatpush.msra.mxu0 %v1703
  %1725 = vmatpush.msra.mxu0 %v1702
  %1726 = vmatpush.msra.mxu0 %v1701
  %1727 = vmatpush.msra.mxu0 %v1700
  %1728 = vmatpush.msra.mxu0 %v1699
  %1729 = vmatpush.msra.mxu0 %v1698
  %1730 = vmatmul.f32.gmra.mxu0 %v1540
  %v1731 = vpop.f32.mrf.mxu0
  %v1732 = vadd.f32 0.0, %v1731
  %1733 = vdwg.mxu0
  %v1734 = vadd.f32 %v1547, %v1732
  %v1735 = vxor.u32 %v1734, 2147483648
  %v1736 = vmul.f32 %v1735, 1.442695
  %v1737 = vpow.pop %v1736
  %v1738 = vadd.f32 %v1737, 1.0
  %v1739 = vrcp.pop %v1738
  %v1740 = vmul.f32 %v1738, %v1739
  %v1741 = vsub.f32 1.0, %v1740
  %v1742 = vmul.f32 %v1739, %v1741
  %v1743 = vadd.f32 %v1739, %v1742
  %vm1744 = vweird.f32 %v1738
  %vm1745 = vweird.f32 %v1739
  %vm1746 = vmor %vm1744, %vm1745
  %v1747 = vsel %vm1746, %v1739, %v1743
  %v1748 = vand.u32 2147483647, %v1738
  %vm1749 = vcmp.eq.f32.partialorder %v1748, 8.507059e+37
  %v1750 = vand.u32 %v1738, 2147483648
  %v1751 = vor.u32 1.1754944e-38, %v1750
  %v1752 = vsel %vm1749, %v1751, %v1747
  %v1753 = vmul.f32 1.0, %v1752
  %v1754 = vmul.f32 %v1659, %v1538
  %v1755 = vmul.f32 %v1603, %v1697
  %v1756 = vadd.f32 %v1754, %v1755
  %v1757 = vtanh.pop %v1756
  %v1758 = vmul.f32 %v1753, %v1757
  %s1759 = scalar_lea.vmem %s2, 56
  %1760 = vst [vmem:[%s1759] sm:$0xff] %v1758
  %1761 = vst [vmem:[#allocation2] sm:$0xff] %v1758
  %1762 = vst [vmem:[#allocation3] sm:$0xff] %v1756
  // Predicated region
  $region14: #{decoder_forward_pallas.4} parent=0 // pred_check
    _
  $region15: #{decoder_forward_pallas.4} parent=0 // pred_check_branch
    %1764 = sbr.rel (0) target = $region17
  $region16: #{decoder_forward_pallas.4} parent=0 // pred_region
    _
  $region17: #{decoder_forward_pallas.4} parent=0 // pred_fallthru
    _
  // Predicated region
  $region18: #{decoder_forward_pallas.4} parent=0 // pred_check
    _
  $region19: #{decoder_forward_pallas.4} parent=0 // pred_check_branch
    %1766 = sbr.rel (0) target = $region21
  $region20: #{decoder_forward_pallas.4} parent=0 // pred_region
    _
  $region21: #{decoder_forward_pallas.4} parent=0 // pred_fallthru
    _

</llo_original>
